<compile_context>
chip_gen: v7x
topology: tpu7x:2x2x1
jax: 0.10.0
libtpu: 0.0.40
codegen_flags: <defaults>
</compile_context>

<pallas_src>
import jax
import jax.numpy as jnp
from jax.experimental import pallas as pl
from jax.experimental.pallas import tpu as pltpu

_LANE = 128


# ---------------------------------------------------------------------------
# fused Down kernel (one image per grid step)
# ---------------------------------------------------------------------------
def _make_down_kernel(H, W, Cin, Cmid, Coutp):
    Ho, Wo = H // 2, W // 2
    Hp, Wp = H + 2, W + 2

    def _im2col_3x3(vp, C):
        """(H+2, W+2, C) padded tile -> (H*W, 9*C) im2col matrix (bias NOT folded)."""
        taps = [vp[kh:kh + H, kw:kw + W, :] for kh in range(3) for kw in range(3)]
        return jnp.concatenate(taps, axis=-1).reshape(H * W, 9 * C)

    def _reflect_pad_into(pad_ref, v):
        """Reflect-pad (pad=1) v:(H, W, C) into the (H+2, W+2, C) scratch."""
        pad_ref[1:H + 1, 1:W + 1, :] = v
        pad_ref[0:1, 1:W + 1, :] = v[1:2]
        pad_ref[H + 1:H + 2, 1:W + 1, :] = v[H - 2:H - 1]
        # column mirror (after rows, so corners come out right)
        pad_ref[:, 0:1, :] = pad_ref[:, 2:3, :]
        pad_ref[:, W + 1:W + 2, :] = pad_ref[:, W - 1:W, :]

    def _zero_pad_into(pad_ref, v):
        C = v.shape[-1]
        pad_ref[0:1, :, :] = jnp.zeros((1, Wp, C), pad_ref.dtype)
        pad_ref[H + 1:H + 2, :, :] = jnp.zeros((1, Wp, C), pad_ref.dtype)
        pad_ref[:, 0:1, :] = jnp.zeros((Hp, 1, C), pad_ref.dtype)
        pad_ref[:, W + 1:W + 2, :] = jnp.zeros((Hp, 1, C), pad_ref.dtype)
        pad_ref[1:H + 1, 1:W + 1, :] = v

    def kernel(x_ref, w1_ref, b1_ref, w2_ref, b2_ref, w3_ref, b3_ref,
               o_ref, xpad_ref, ppad_ref):
        bf16 = jnp.bfloat16

        # ---- DoubleConv, conv 1: 3x3 reflect-pad + ReLU --------------------
        # TODO(synk): build interior taps from the in-register value and only
        # fetch mirrored edges from the scratch (verify with slot_util first).
        _reflect_pad_into(xpad_ref, x_ref[0])
        p1 = _im2col_3x3(xpad_ref[...], Cin)                     # (H*W, 9*Cin)
        y1 = jnp.dot(p1.astype(bf16), w1_ref[...],
                     preferred_element_type=jnp.float32) + b1_ref[...]
        y1 = jnp.maximum(y1, 0.0).reshape(H, W, Cmid)

        # ---- DoubleConv, conv 2: 3x3 reflect-pad + ReLU --------------------
        _reflect_pad_into(ppad_ref, y1)
        p2 = _im2col_3x3(ppad_ref[...], Cmid)                    # (H*W, 9*Cmid)
        y2 = jnp.dot(p2.astype(bf16), w2_ref[...],
                     preferred_element_type=jnp.float32) + b2_ref[...]
        y2 = jnp.maximum(y2, 0.0).reshape(H, W, Cmid)

        # ---- down: 3x3 stride-2 zero-pad conv + SiLU -----------------------
        _zero_pad_into(ppad_ref, y2)                             # reuse scratch

        # Column phases via 3 strided VMEM loads (one per kw); row phases via
        # a free leading-dim reshape.  cols[kw][a, r, b, :] == ppad[2a+r, kw+2b, :]
        cols = [ppad_ref[:, pl.ds(kw, Wo, stride=2), :].reshape(Hp // 2, 2, Wo, Cmid)
                for kw in range(3)]
        taps = [cols[kw][kh // 2:kh // 2 + Ho, kh % 2, :, :]      # == ppad[2a+kh, 2b+kw]
                for kh in range(3) for kw in range(3)]
        p3 = jnp.concatenate(taps, axis=-1).reshape(Ho * Wo, 9 * Cmid)

        z = jnp.dot(p3.astype(bf16), w3_ref[...],
                    preferred_element_type=jnp.float32) + b3_ref[...]
        silu = z * jax.nn.sigmoid(z)
        o_ref[0] = silu.reshape(Ho, Wo, Coutp).astype(o_ref.dtype)

    return kernel


# ---------------------------------------------------------------------------
# wrapper
# ---------------------------------------------------------------------------
@jax.jit
def down_forward(x_nchw, params):
    """Down.forward; NCHW in -> NCHW out (N, Cout, H//2, W//2)."""
    N, Cin, H, W = x_nchw.shape
    assert H % 2 == 0 and W % 2 == 0, "spatial dims must be even"
    Cmid = params["w1"].shape[-1]
    Cout = params["w3"].shape[-1]
    Ho, Wo = H // 2, W // 2
    Hp, Wp = H + 2, W + 2
    # Lane-dense output: pad Cout up to a multiple of 128 (unmasked vst + full
    # output lanes); extra channels have zero weights/bias and are sliced off.
    Coutp = -(-Cout // _LANE) * _LANE
    # TODO(synk): pad Cmid the same way if masked scratch stores show up in
    # slot_util at small channel counts.

    x = jnp.transpose(x_nchw, (0, 2, 3, 1)).astype(jnp.float32)   # NCHW -> NHWC

    # (3,3,Ci,Co) HWIO -> (9*Ci, Co) bf16 matmul slabs; biases stay f32 and are
    # added after the matmul (keeps K = 9*Ci lane-aligned).
    bf16 = jnp.bfloat16
    w1m = params["w1"].reshape(9 * Cin, Cmid).astype(bf16)
    w2m = params["w2"].reshape(9 * Cmid, Cmid).astype(bf16)
    w3m = jnp.pad(params["w3"].reshape(9 * Cmid, Cout),
                  ((0, 0), (0, Coutp - Cout))).astype(bf16)
    b1 = params["b1"].reshape(1, Cmid).astype(jnp.float32)
    b2 = params["b2"].reshape(1, Cmid).astype(jnp.float32)
    b3 = jnp.pad(params["b3"], [(0, Coutp - Cout)]).reshape(1, Coutp).astype(jnp.float32)

    kernel = _make_down_kernel(H, W, Cin, Cmid, Coutp)

    # VMEM budget derived from the actual per-step buffers (+ headroom for
    # compiler temporaries), instead of a hard-coded limit.
    est = (
        2 * H * W * Cin * 4                                   # x block (dbl-buffered)
        + 2 * Ho * Wo * Coutp * 4                             # out block (dbl-buffered)
        + 2 * 2 * (w1m.size + w2m.size + w3m.size)            # bf16 weight slabs
        + 2 * 4 * (b1.size + b2.size + b3.size)
        + 4 * Hp * Wp * (Cin + Cmid)                          # pad scratches
        + 6 * 9 * (H * W * Cin + H * W * Cmid + Ho * Wo * Cmid)  # im2col f32+bf16 temps
        + 4 * (2 * H * W * Cmid + 2 * Ho * Wo * Coutp)        # f32 activation temps
    )
    vmem_limit = int(min(max(2 * est, 16 * 1024 * 1024), 100 * 1024 * 1024))

    # TODO(synk): for production image sizes add a row-tiled spatial grid axis
    # (with halo) so the per-step working set stays under v7x's 64 MiB VMEM and
    # both v7x TensorCores get work at batch 1; also tile/accumulate the im2col
    # slab per row block at production channel counts.
    # TODO(synk): weights never change block index; mark their BlockSpecs
    # pipeline_mode=pl.Buffered(1) (or keep resident) once channel counts grow.
    out = pl.pallas_call(
        kernel,
        out_shape=jax.ShapeDtypeStruct((N, Ho, Wo, Coutp), jnp.float32),
        grid_spec=pltpu.PrefetchScalarGridSpec(
            num_scalar_prefetch=0,
            grid=(N,),
            in_specs=[
                pl.BlockSpec((1, H, W, Cin), lambda n: (n, 0, 0, 0)),
                pl.BlockSpec(w1m.shape, lambda n: (0, 0)),
                pl.BlockSpec(b1.shape, lambda n: (0, 0)),
                pl.BlockSpec(w2m.shape, lambda n: (0, 0)),
                pl.BlockSpec(b2.shape, lambda n: (0, 0)),
                pl.BlockSpec(w3m.shape, lambda n: (0, 0)),
                pl.BlockSpec(b3.shape, lambda n: (0, 0)),
            ],
            out_specs=pl.BlockSpec((1, Ho, Wo, Coutp), lambda n: (n, 0, 0, 0)),
            scratch_shapes=[
                pltpu.VMEM((Hp, Wp, Cin), jnp.float32),   # reflect-padded x
                pltpu.VMEM((Hp, Wp, Cmid), jnp.float32),  # padded y1 / y2 (reused)
            ],
        ),
        compiler_params=pltpu.CompilerParams(
            dimension_semantics=("parallel",),
            vmem_limit_bytes=vmem_limit,
        ),
    )(x, w1m, b1, w2m, b2, w3m, b3)

    out = out[..., :Cout]
    return jnp.transpose(out, (0, 3, 1, 2))                       # NHWC -> NCHW


# ---------------------------------------------------------------------------
# Deterministic parameter init (PyTorch-Conv2d-style uniform bounds)
# ---------------------------------------------------------------------------
def init_params(key, c_in, c_out):
    ks = jax.random.split(key, 6)

    def conv_init(kw_, kb_, cin, cout):
        fan_in = cin * 3 * 3
        bound = 1.0 / (fan_in ** 0.5)
        w = jax.random.uniform(kw_, (3, 3, cin, cout), jnp.float32, -bound, bound)
        b = jax.random.uniform(kb_, (cout,), jnp.float32, -bound, bound)
        return w, b

    w1, b1 = conv_init(ks[0], ks[1], c_in, c_in)
    w2, b2 = conv_init(ks[2], ks[3], c_in, c_in)
    w3, b3 = conv_init(ks[4], ks[5], c_in, c_out)
    return dict(w1=w1, b1=b1, w2=w2, b2=b2, w3=w3, b3=b3)


# ---------------------------------------------------------------------------
# Pure-JAX references (lax.conv) for correctness checking
# ---------------------------------------------------------------------------
def _conv(xp, w, b, stride, cast_bf16):
    if cast_bf16:
        xp = xp.astype(jnp.bfloat16)
        w = w.astype(jnp.bfloat16)
    y = jax.lax.conv_general_dilated(
        xp, w, (stride, stride), "VALID",
        dimension_numbers=("NHWC", "HWIO", "NHWC"),
        preferred_element_type=jnp.float32)
    return y + b


def _down_ref(x_nchw, params, cast_bf16):
    x = jnp.transpose(x_nchw, (0, 2, 3, 1)).astype(jnp.float32)
    xp = jnp.pad(x, ((0, 0), (1, 1), (1, 1), (0, 0)), mode="reflect")
    y = jnp.maximum(_conv(xp, params["w1"], params["b1"], 1, cast_bf16), 0.0)
    yp = jnp.pad(y, ((0, 0), (1, 1), (1, 1), (0, 0)), mode="reflect")
    y = jnp.maximum(_conv(yp, params["w2"], params["b2"], 1, cast_bf16), 0.0)
    yp = jnp.pad(y, ((0, 0), (1, 1), (1, 1), (0, 0)), mode="constant")
    z = _conv(yp, params["w3"], params["b3"], 2, cast_bf16)
    return jnp.transpose(z * jax.nn.sigmoid(z), (0, 3, 1, 2))


def down_ref_f32(x_nchw, params):
    return _down_ref(x_nchw, params, cast_bf16=False)


def down_ref_bf16(x_nchw, params):
    # Mimics the kernel's numerics: bf16 MXU operands, f32 accumulate/elementwise.
    return _down_ref(x_nchw, params, cast_bf16=True)


if __name__ == "__main__":
    key = jax.random.PRNGKey(0)
    k_x, k_p = jax.random.split(key)

    N, C_IN, H, W = 2, 4, 16, 16
    C_OUT = 8

    x = jax.random.normal(k_x, (N, C_IN, H, W), jnp.float32)      # NCHW like PyTorch
    params = init_params(k_p, C_IN, C_OUT)

    out = jax.block_until_ready(down_forward(x, params))
    assert out.shape == (N, C_OUT, H // 2, W // 2), out.shape

    # Exact check against a reference with the same bf16-operand rounding.
    ref_bf = jax.block_until_ready(down_ref_bf16(x, params))
    assert jnp.allclose(out, ref_bf, atol=1e-3, rtol=1e-3), float(
        jnp.max(jnp.abs(out - ref_bf)))

    # Loose check against the full-f32 module semantics (bf16 MXU tolerance).
    ref32 = jax.block_until_ready(down_ref_f32(x, params))
    assert jnp.allclose(out, ref32, atol=8e-2, rtol=8e-2), float(
        jnp.max(jnp.abs(out - ref32)))

    print("KERNEL_OK")
</pallas_src>

<mosaic_0001>
module attributes {stable_mosaic.version = 11 : i64} {
  func.func @kernel(%arg0: i32, %arg1: memref<1x16x16x4xf32, #tpu.memory_space<vmem>>, %arg2: memref<36x4xbf16, #tpu.memory_space<vmem>>, %arg3: memref<1x4xf32, #tpu.memory_space<vmem>>, %arg4: memref<36x4xbf16, #tpu.memory_space<vmem>>, %arg5: memref<1x4xf32, #tpu.memory_space<vmem>>, %arg6: memref<36x128xbf16, #tpu.memory_space<vmem>>, %arg7: memref<1x128xf32, #tpu.memory_space<vmem>>, %arg8: memref<1x8x8x128xf32, #tpu.memory_space<vmem>>, %arg9: memref<18x18x4xf32, #tpu.memory_space<vmem>>, %arg10: memref<18x18x4xf32, #tpu.memory_space<vmem>>) attributes {dimension_semantics = [#tpu.dimension_semantics<parallel>], iteration_bounds = array<i64: 2>, scalar_prefetch = 0 : i64, scratch_operands = 2 : i64, tpu.core_type = #tpu.core_type<tc>, window_params = [{transform_indices = @transform_0, window_bounds = array<i64: 1, 16, 16, 4>}, {pipeline_mode = #tpu.pipeline_mode<synchronous>, transform_indices = @transform_1, window_bounds = array<i64: 36, 4>}, {pipeline_mode = #tpu.pipeline_mode<synchronous>, transform_indices = @transform_2, window_bounds = array<i64: 1, 4>}, {pipeline_mode = #tpu.pipeline_mode<synchronous>, transform_indices = @transform_3, window_bounds = array<i64: 36, 4>}, {pipeline_mode = #tpu.pipeline_mode<synchronous>, transform_indices = @transform_4, window_bounds = array<i64: 1, 4>}, {pipeline_mode = #tpu.pipeline_mode<synchronous>, transform_indices = @transform_5, window_bounds = array<i64: 36, 128>}, {pipeline_mode = #tpu.pipeline_mode<synchronous>, transform_indices = @transform_6, window_bounds = array<i64: 1, 128>}, {transform_indices = @transform_7, window_bounds = array<i64: 1, 8, 8, 128>}]} {
    %c0 = arith.constant 0 : index
    %c0_0 = arith.constant 0 : index
    %c0_1 = arith.constant 0 : index
    %c0_2 = arith.constant 0 : index
    %0 = vector.load %arg1[%c0, %c0_0, %c0_1, %c0_2] : memref<1x16x16x4xf32, #tpu.memory_space<vmem>>, vector<1x16x16x4xf32>
    %1 = vector.shape_cast %0 : vector<1x16x16x4xf32> to vector<16x16x4xf32>
    %c1 = arith.constant 1 : index
    %c1_3 = arith.constant 1 : index
    %c0_4 = arith.constant 0 : index
    %2 = vector.load %arg9[%c1, %c1_3, %c0_4] : memref<18x18x4xf32, #tpu.memory_space<vmem>>, vector<16x16x4xf32>
    tpu.vector_store %arg9[%c1, %c1_3, %c0_4], %1 {strides = array<i32>} : memref<18x18x4xf32, #tpu.memory_space<vmem>>, vector<16x16x4xf32>,
    %3 = vector.extract_strided_slice %1 {offsets = [1, 0, 0], sizes = [1, 16, 4], strides = [1, 1, 1]} : vector<16x16x4xf32> to vector<1x16x4xf32>
    %c0_5 = arith.constant 0 : index
    %c1_6 = arith.constant 1 : index
    %c0_7 = arith.constant 0 : index
    %4 = vector.load %arg9[%c0_5, %c1_6, %c0_7] : memref<18x18x4xf32, #tpu.memory_space<vmem>>, vector<1x16x4xf32>
    tpu.vector_store %arg9[%c0_5, %c1_6, %c0_7], %3 {strides = array<i32>} : memref<18x18x4xf32, #tpu.memory_space<vmem>>, vector<1x16x4xf32>,
    %5 = vector.extract_strided_slice %1 {offsets = [14, 0, 0], sizes = [1, 16, 4], strides = [1, 1, 1]} : vector<16x16x4xf32> to vector<1x16x4xf32>
    %c17 = arith.constant 17 : index
    %c1_8 = arith.constant 1 : index
    %c0_9 = arith.constant 0 : index
    %6 = vector.load %arg9[%c17, %c1_8, %c0_9] : memref<18x18x4xf32, #tpu.memory_space<vmem>>, vector<1x16x4xf32>
    tpu.vector_store %arg9[%c17, %c1_8, %c0_9], %5 {strides = array<i32>} : memref<18x18x4xf32, #tpu.memory_space<vmem>>, vector<1x16x4xf32>,
    %c0_10 = arith.constant 0 : index
    %c2 = arith.constant 2 : index
    %c0_11 = arith.constant 0 : index
    %7 = vector.load %arg9[%c0_10, %c2, %c0_11] : memref<18x18x4xf32, #tpu.memory_space<vmem>>, vector<18x1x4xf32>
    %c0_12 = arith.constant 0 : index
    %c0_13 = arith.constant 0 : index
    %c0_14 = arith.constant 0 : index
    %8 = vector.load %arg9[%c0_12, %c0_13, %c0_14] : memref<18x18x4xf32, #tpu.memory_space<vmem>>, vector<18x1x4xf32>
    tpu.vector_store %arg9[%c0_12, %c0_13, %c0_14], %7 {strides = array<i32>} : memref<18x18x4xf32, #tpu.memory_space<vmem>>, vector<18x1x4xf32>,
    %c0_15 = arith.constant 0 : index
    %c15 = arith.constant 15 : index
    %c0_16 = arith.constant 0 : index
    %9 = vector.load %arg9[%c0_15, %c15, %c0_16] : memref<18x18x4xf32, #tpu.memory_space<vmem>>, vector<18x1x4xf32>
    %c0_17 = arith.constant 0 : index
    %c17_18 = arith.constant 17 : index
    %c0_19 = arith.constant 0 : index
    %10 = vector.load %arg9[%c0_17, %c17_18, %c0_19] : memref<18x18x4xf32, #tpu.memory_space<vmem>>, vector<18x1x4xf32>
    tpu.vector_store %arg9[%c0_17, %c17_18, %c0_19], %9 {strides = array<i32>} : memref<18x18x4xf32, #tpu.memory_space<vmem>>, vector<18x1x4xf32>,
    %c0_20 = arith.constant 0 : index
    %c0_21 = arith.constant 0 : index
    %c0_22 = arith.constant 0 : index
    %11 = vector.load %arg9[%c0_20, %c0_21, %c0_22] : memref<18x18x4xf32, #tpu.memory_space<vmem>>, vector<18x18x4xf32>
    %12 = vector.extract_strided_slice %11 {offsets = [0, 0, 0], sizes = [16, 16, 4], strides = [1, 1, 1]} : vector<18x18x4xf32> to vector<16x16x4xf32>
    %13 = vector.extract_strided_slice %11 {offsets = [0, 1, 0], sizes = [16, 16, 4], strides = [1, 1, 1]} : vector<18x18x4xf32> to vector<16x16x4xf32>
    %14 = vector.extract_strided_slice %11 {offsets = [0, 2, 0], sizes = [16, 16, 4], strides = [1, 1, 1]} : vector<18x18x4xf32> to vector<16x16x4xf32>
    %15 = vector.extract_strided_slice %11 {offsets = [1, 0, 0], sizes = [16, 16, 4], strides = [1, 1, 1]} : vector<18x18x4xf32> to vector<16x16x4xf32>
    %16 = vector.extract_strided_slice %11 {offsets = [1, 1, 0], sizes = [16, 16, 4], strides = [1, 1, 1]} : vector<18x18x4xf32> to vector<16x16x4xf32>
    %17 = vector.extract_strided_slice %11 {offsets = [1, 2, 0], sizes = [16, 16, 4], strides = [1, 1, 1]} : vector<18x18x4xf32> to vector<16x16x4xf32>
    %18 = vector.extract_strided_slice %11 {offsets = [2, 0, 0], sizes = [16, 16, 4], strides = [1, 1, 1]} : vector<18x18x4xf32> to vector<16x16x4xf32>
    %19 = vector.extract_strided_slice %11 {offsets = [2, 1, 0], sizes = [16, 16, 4], strides = [1, 1, 1]} : vector<18x18x4xf32> to vector<16x16x4xf32>
    %20 = vector.extract_strided_slice %11 {offsets = [2, 2, 0], sizes = [16, 16, 4], strides = [1, 1, 1]} : vector<18x18x4xf32> to vector<16x16x4xf32>
    %21 = tpu.concatenate %12, %13, %14, %15, %16, %17, %18, %19, %20 in 2 : vector<16x16x4xf32>, vector<16x16x4xf32>, vector<16x16x4xf32>, vector<16x16x4xf32>, vector<16x16x4xf32>, vector<16x16x4xf32>, vector<16x16x4xf32>, vector<16x16x4xf32>, vector<16x16x4xf32> -> vector<16x16x36xf32>
    %22 = vector.shape_cast %21 : vector<16x16x36xf32> to vector<256x36xf32>
    %23 = arith.truncf %22 : vector<256x36xf32> to vector<256x36xbf16>
    %c0_23 = arith.constant 0 : index
    %c0_24 = arith.constant 0 : index
    %24 = vector.load %arg2[%c0_23, %c0_24] : memref<36x4xbf16, #tpu.memory_space<vmem>>, vector<36x4xbf16>
    %cst = arith.constant dense<0.000000e+00> : vector<256x4xf32>
    %25 = tpu.matmul %23, %24, %cst {dimension_numbers = #tpu.dot_dimension_numbers<[1], [0], [0], [1], [0, 0, 1, 1], [], []>} : vector<256x36xbf16>, vector<36x4xbf16>, vector<256x4xf32> -> vector<256x4xf32>
    %c0_25 = arith.constant 0 : index
    %c0_26 = arith.constant 0 : index
    %26 = vector.load %arg3[%c0_25, %c0_26] : memref<1x4xf32, #tpu.memory_space<vmem>>, vector<1x4xf32>
    %27 = vector.broadcast %26 : vector<1x4xf32> to vector<256x4xf32>
    %28 = arith.addf %25, %27 : vector<256x4xf32>
    %cst_27 = arith.constant 0.000000e+00 : f32
    %29 = vector.broadcast %cst_27 : f32 to vector<256x4xf32>
    %30 = arith.maximumf %28, %29 : vector<256x4xf32>
    %31 = vector.shape_cast %30 : vector<256x4xf32> to vector<16x16x4xf32>
    %c1_28 = arith.constant 1 : index
    %c1_29 = arith.constant 1 : index
    %c0_30 = arith.constant 0 : index
    %32 = vector.load %arg10[%c1_28, %c1_29, %c0_30] : memref<18x18x4xf32, #tpu.memory_space<vmem>>, vector<16x16x4xf32>
    tpu.vector_store %arg10[%c1_28, %c1_29, %c0_30], %31 {strides = array<i32>} : memref<18x18x4xf32, #tpu.memory_space<vmem>>, vector<16x16x4xf32>,
    %33 = vector.extract_strided_slice %31 {offsets = [1, 0, 0], sizes = [1, 16, 4], strides = [1, 1, 1]} : vector<16x16x4xf32> to vector<1x16x4xf32>
    %c0_31 = arith.constant 0 : index
    %c1_32 = arith.constant 1 : index
    %c0_33 = arith.constant 0 : index
    %34 = vector.load %arg10[%c0_31, %c1_32, %c0_33] : memref<18x18x4xf32, #tpu.memory_space<vmem>>, vector<1x16x4xf32>
    tpu.vector_store %arg10[%c0_31, %c1_32, %c0_33], %33 {strides = array<i32>} : memref<18x18x4xf32, #tpu.memory_space<vmem>>, vector<1x16x4xf32>,
    %35 = vector.extract_strided_slice %31 {offsets = [14, 0, 0], sizes = [1, 16, 4], strides = [1, 1, 1]} : vector<16x16x4xf32> to vector<1x16x4xf32>
    %c17_34 = arith.constant 17 : index
    %c1_35 = arith.constant 1 : index
    %c0_36 = arith.constant 0 : index
    %36 = vector.load %arg10[%c17_34, %c1_35, %c0_36] : memref<18x18x4xf32, #tpu.memory_space<vmem>>, vector<1x16x4xf32>
    tpu.vector_store %arg10[%c17_34, %c1_35, %c0_36], %35 {strides = array<i32>} : memref<18x18x4xf32, #tpu.memory_space<vmem>>, vector<1x16x4xf32>,
    %c0_37 = arith.constant 0 : index
    %c2_38 = arith.constant 2 : index
    %c0_39 = arith.constant 0 : index
    %37 = vector.load %arg10[%c0_37, %c2_38, %c0_39] : memref<18x18x4xf32, #tpu.memory_space<vmem>>, vector<18x1x4xf32>
    %c0_40 = arith.constant 0 : index
    %c0_41 = arith.constant 0 : index
    %c0_42 = arith.constant 0 : index
    %38 = vector.load %arg10[%c0_40, %c0_41, %c0_42] : memref<18x18x4xf32, #tpu.memory_space<vmem>>, vector<18x1x4xf32>
    tpu.vector_store %arg10[%c0_40, %c0_41, %c0_42], %37 {strides = array<i32>} : memref<18x18x4xf32, #tpu.memory_space<vmem>>, vector<18x1x4xf32>,
    %c0_43 = arith.constant 0 : index
    %c15_44 = arith.constant 15 : index
    %c0_45 = arith.constant 0 : index
    %39 = vector.load %arg10[%c0_43, %c15_44, %c0_45] : memref<18x18x4xf32, #tpu.memory_space<vmem>>, vector<18x1x4xf32>
    %c0_46 = arith.constant 0 : index
    %c17_47 = arith.constant 17 : index
    %c0_48 = arith.constant 0 : index
    %40 = vector.load %arg10[%c0_46, %c17_47, %c0_48] : memref<18x18x4xf32, #tpu.memory_space<vmem>>, vector<18x1x4xf32>
    tpu.vector_store %arg10[%c0_46, %c17_47, %c0_48], %39 {strides = array<i32>} : memref<18x18x4xf32, #tpu.memory_space<vmem>>, vector<18x1x4xf32>,
    %c0_49 = arith.constant 0 : index
    %c0_50 = arith.constant 0 : index
    %c0_51 = arith.constant 0 : index
    %41 = vector.load %arg10[%c0_49, %c0_50, %c0_51] : memref<18x18x4xf32, #tpu.memory_space<vmem>>, vector<18x18x4xf32>
    %42 = vector.extract_strided_slice %41 {offsets = [0, 0, 0], sizes = [16, 16, 4], strides = [1, 1, 1]} : vector<18x18x4xf32> to vector<16x16x4xf32>
    %43 = vector.extract_strided_slice %41 {offsets = [0, 1, 0], sizes = [16, 16, 4], strides = [1, 1, 1]} : vector<18x18x4xf32> to vector<16x16x4xf32>
    %44 = vector.extract_strided_slice %41 {offsets = [0, 2, 0], sizes = [16, 16, 4], strides = [1, 1, 1]} : vector<18x18x4xf32> to vector<16x16x4xf32>
    %45 = vector.extract_strided_slice %41 {offsets = [1, 0, 0], sizes = [16, 16, 4], strides = [1, 1, 1]} : vector<18x18x4xf32> to vector<16x16x4xf32>
    %46 = vector.extract_strided_slice %41 {offsets = [1, 1, 0], sizes = [16, 16, 4], strides = [1, 1, 1]} : vector<18x18x4xf32> to vector<16x16x4xf32>
    %47 = vector.extract_strided_slice %41 {offsets = [1, 2, 0], sizes = [16, 16, 4], strides = [1, 1, 1]} : vector<18x18x4xf32> to vector<16x16x4xf32>
    %48 = vector.extract_strided_slice %41 {offsets = [2, 0, 0], sizes = [16, 16, 4], strides = [1, 1, 1]} : vector<18x18x4xf32> to vector<16x16x4xf32>
    %49 = vector.extract_strided_slice %41 {offsets = [2, 1, 0], sizes = [16, 16, 4], strides = [1, 1, 1]} : vector<18x18x4xf32> to vector<16x16x4xf32>
    %50 = vector.extract_strided_slice %41 {offsets = [2, 2, 0], sizes = [16, 16, 4], strides = [1, 1, 1]} : vector<18x18x4xf32> to vector<16x16x4xf32>
    %51 = tpu.concatenate %42, %43, %44, %45, %46, %47, %48, %49, %50 in 2 : vector<16x16x4xf32>, vector<16x16x4xf32>, vector<16x16x4xf32>, vector<16x16x4xf32>, vector<16x16x4xf32>, vector<16x16x4xf32>, vector<16x16x4xf32>, vector<16x16x4xf32>, vector<16x16x4xf32> -> vector<16x16x36xf32>
    %52 = vector.shape_cast %51 : vector<16x16x36xf32> to vector<256x36xf32>
    %53 = arith.truncf %52 : vector<256x36xf32> to vector<256x36xbf16>
    %c0_52 = arith.constant 0 : index
    %c0_53 = arith.constant 0 : index
    %54 = vector.load %arg4[%c0_52, %c0_53] : memref<36x4xbf16, #tpu.memory_space<vmem>>, vector<36x4xbf16>
    %cst_54 = arith.constant dense<0.000000e+00> : vector<256x4xf32>
    %55 = tpu.matmul %53, %54, %cst_54 {dimension_numbers = #tpu.dot_dimension_numbers<[1], [0], [0], [1], [0, 0, 1, 1], [], []>} : vector<256x36xbf16>, vector<36x4xbf16>, vector<256x4xf32> -> vector<256x4xf32>
    %c0_55 = arith.constant 0 : index
    %c0_56 = arith.constant 0 : index
    %56 = vector.load %arg5[%c0_55, %c0_56] : memref<1x4xf32, #tpu.memory_space<vmem>>, vector<1x4xf32>
    %57 = vector.broadcast %56 : vector<1x4xf32> to vector<256x4xf32>
    %58 = arith.addf %55, %57 : vector<256x4xf32>
    %cst_57 = arith.constant 0.000000e+00 : f32
    %59 = vector.broadcast %cst_57 : f32 to vector<256x4xf32>
    %60 = arith.maximumf %58, %59 : vector<256x4xf32>
    %61 = vector.shape_cast %60 : vector<256x4xf32> to vector<16x16x4xf32>
    %cst_58 = arith.constant 0.000000e+00 : f32
    %62 = vector.broadcast %cst_58 : f32 to vector<1x18x4xf32>
    %c0_59 = arith.constant 0 : index
    %c0_60 = arith.constant 0 : index
    %c0_61 = arith.constant 0 : index
    %63 = vector.load %arg10[%c0_59, %c0_60, %c0_61] : memref<18x18x4xf32, #tpu.memory_space<vmem>>, vector<1x18x4xf32>
    tpu.vector_store %arg10[%c0_59, %c0_60, %c0_61], %62 {strides = array<i32>} : memref<18x18x4xf32, #tpu.memory_space<vmem>>, vector<1x18x4xf32>,
    %cst_62 = arith.constant 0.000000e+00 : f32
    %64 = vector.broadcast %cst_62 : f32 to vector<1x18x4xf32>
    %c17_63 = arith.constant 17 : index
    %c0_64 = arith.constant 0 : index
    %c0_65 = arith.constant 0 : index
    %65 = vector.load %arg10[%c17_63, %c0_64, %c0_65] : memref<18x18x4xf32, #tpu.memory_space<vmem>>, vector<1x18x4xf32>
    tpu.vector_store %arg10[%c17_63, %c0_64, %c0_65], %64 {strides = array<i32>} : memref<18x18x4xf32, #tpu.memory_space<vmem>>, vector<1x18x4xf32>,
    %cst_66 = arith.constant 0.000000e+00 : f32
    %66 = vector.broadcast %cst_66 : f32 to vector<18x1x4xf32>
    %c0_67 = arith.constant 0 : index
    %c0_68 = arith.constant 0 : index
    %c0_69 = arith.constant 0 : index
    %67 = vector.load %arg10[%c0_67, %c0_68, %c0_69] : memref<18x18x4xf32, #tpu.memory_space<vmem>>, vector<18x1x4xf32>
    tpu.vector_store %arg10[%c0_67, %c0_68, %c0_69], %66 {strides = array<i32>} : memref<18x18x4xf32, #tpu.memory_space<vmem>>, vector<18x1x4xf32>,
    %cst_70 = arith.constant 0.000000e+00 : f32
    %68 = vector.broadcast %cst_70 : f32 to vector<18x1x4xf32>
    %c0_71 = arith.constant 0 : index
    %c17_72 = arith.constant 17 : index
    %c0_73 = arith.constant 0 : index
    %69 = vector.load %arg10[%c0_71, %c17_72, %c0_73] : memref<18x18x4xf32, #tpu.memory_space<vmem>>, vector<18x1x4xf32>
    tpu.vector_store %arg10[%c0_71, %c17_72, %c0_73], %68 {strides = array<i32>} : memref<18x18x4xf32, #tpu.memory_space<vmem>>, vector<18x1x4xf32>,
    %c1_74 = arith.constant 1 : index
    %c1_75 = arith.constant 1 : index
    %c0_76 = arith.constant 0 : index
    %70 = vector.load %arg10[%c1_74, %c1_75, %c0_76] : memref<18x18x4xf32, #tpu.memory_space<vmem>>, vector<16x16x4xf32>
    tpu.vector_store %arg10[%c1_74, %c1_75, %c0_76], %61 {strides = array<i32>} : memref<18x18x4xf32, #tpu.memory_space<vmem>>, vector<16x16x4xf32>,
    %c0_77 = arith.constant 0 : index
    %c0_78 = arith.constant 0 : index
    %c0_79 = arith.constant 0 : index
    %71 = tpu.strided_load %arg10[%c0_77, %c0_78, %c0_79] {strides = array<i32: 1, 2, 1>} : memref<18x18x4xf32, #tpu.memory_space<vmem>>, vector<18x8x4xf32>
    %72 = vector.shape_cast %71 : vector<18x8x4xf32> to vector<9x2x8x4xf32>
    %c0_80 = arith.constant 0 : index
    %c1_81 = arith.constant 1 : index
    %c0_82 = arith.constant 0 : index
    %73 = tpu.strided_load %arg10[%c0_80, %c1_81, %c0_82] {strides = array<i32: 1, 2, 1>} : memref<18x18x4xf32, #tpu.memory_space<vmem>>, vector<18x8x4xf32>
    %74 = vector.shape_cast %73 : vector<18x8x4xf32> to vector<9x2x8x4xf32>
    %c0_83 = arith.constant 0 : index
    %c2_84 = arith.constant 2 : index
    %c0_85 = arith.constant 0 : index
    %75 = tpu.strided_load %arg10[%c0_83, %c2_84, %c0_85] {strides = array<i32: 1, 2, 1>} : memref<18x18x4xf32, #tpu.memory_space<vmem>>, vector<18x8x4xf32>
    %76 = vector.shape_cast %75 : vector<18x8x4xf32> to vector<9x2x8x4xf32>
    %77 = vector.extract_strided_slice %72 {offsets = [0, 0, 0, 0], sizes = [8, 1, 8, 4], strides = [1, 1, 1, 1]} : vector<9x2x8x4xf32> to vector<8x1x8x4xf32>
    %78 = vector.shape_cast %77 : vector<8x1x8x4xf32> to vector<8x8x4xf32>
    %79 = vector.extract_strided_slice %74 {offsets = [0, 0, 0, 0], sizes = [8, 1, 8, 4], strides = [1, 1, 1, 1]} : vector<9x2x8x4xf32> to vector<8x1x8x4xf32>
    %80 = vector.shape_cast %79 : vector<8x1x8x4xf32> to vector<8x8x4xf32>
    %81 = vector.extract_strided_slice %76 {offsets = [0, 0, 0, 0], sizes = [8, 1, 8, 4], strides = [1, 1, 1, 1]} : vector<9x2x8x4xf32> to vector<8x1x8x4xf32>
    %82 = vector.shape_cast %81 : vector<8x1x8x4xf32> to vector<8x8x4xf32>
    %83 = vector.extract_strided_slice %72 {offsets = [0, 1, 0, 0], sizes = [8, 1, 8, 4], strides = [1, 1, 1, 1]} : vector<9x2x8x4xf32> to vector<8x1x8x4xf32>
    %84 = vector.shape_cast %83 : vector<8x1x8x4xf32> to vector<8x8x4xf32>
    %85 = vector.extract_strided_slice %74 {offsets = [0, 1, 0, 0], sizes = [8, 1, 8, 4], strides = [1, 1, 1, 1]} : vector<9x2x8x4xf32> to vector<8x1x8x4xf32>
    %86 = vector.shape_cast %85 : vector<8x1x8x4xf32> to vector<8x8x4xf32>
    %87 = vector.extract_strided_slice %76 {offsets = [0, 1, 0, 0], sizes = [8, 1, 8, 4], strides = [1, 1, 1, 1]} : vector<9x2x8x4xf32> to vector<8x1x8x4xf32>
    %88 = vector.shape_cast %87 : vector<8x1x8x4xf32> to vector<8x8x4xf32>
    %89 = vector.extract_strided_slice %72 {offsets = [1, 0, 0, 0], sizes = [8, 1, 8, 4], strides = [1, 1, 1, 1]} : vector<9x2x8x4xf32> to vector<8x1x8x4xf32>
    %90 = vector.shape_cast %89 : vector<8x1x8x4xf32> to vector<8x8x4xf32>
    %91 = vector.extract_strided_slice %74 {offsets = [1, 0, 0, 0], sizes = [8, 1, 8, 4], strides = [1, 1, 1, 1]} : vector<9x2x8x4xf32> to vector<8x1x8x4xf32>
    %92 = vector.shape_cast %91 : vector<8x1x8x4xf32> to vector<8x8x4xf32>
    %93 = vector.extract_strided_slice %76 {offsets = [1, 0, 0, 0], sizes = [8, 1, 8, 4], strides = [1, 1, 1, 1]} : vector<9x2x8x4xf32> to vector<8x1x8x4xf32>
    %94 = vector.shape_cast %93 : vector<8x1x8x4xf32> to vector<8x8x4xf32>
    %95 = tpu.concatenate %78, %80, %82, %84, %86, %88, %90, %92, %94 in 2 : vector<8x8x4xf32>, vector<8x8x4xf32>, vector<8x8x4xf32>, vector<8x8x4xf32>, vector<8x8x4xf32>, vector<8x8x4xf32>, vector<8x8x4xf32>, vector<8x8x4xf32>, vector<8x8x4xf32> -> vector<8x8x36xf32>
    %96 = vector.shape_cast %95 : vector<8x8x36xf32> to vector<64x36xf32>
    %97 = arith.truncf %96 : vector<64x36xf32> to vector<64x36xbf16>
    %c0_86 = arith.constant 0 : index
    %c0_87 = arith.constant 0 : index
    %98 = vector.load %arg6[%c0_86, %c0_87] : memref<36x128xbf16, #tpu.memory_space<vmem>>, vector<36x128xbf16>
    %cst_88 = arith.constant dense<0.000000e+00> : vector<64x128xf32>
    %99 = tpu.matmul %97, %98, %cst_88 {dimension_numbers = #tpu.dot_dimension_numbers<[1], [0], [0], [1], [0, 0, 1, 1], [], []>} : vector<64x36xbf16>, vector<36x128xbf16>, vector<64x128xf32> -> vector<64x128xf32>
    %c0_89 = arith.constant 0 : index
    %c0_90 = arith.constant 0 : index
    %100 = vector.load %arg7[%c0_89, %c0_90] : memref<1x128xf32, #tpu.memory_space<vmem>>, vector<1x128xf32>
    %101 = vector.broadcast %100 : vector<1x128xf32> to vector<64x128xf32>
    %102 = arith.addf %99, %101 : vector<64x128xf32>
    %103 = arith.negf %102 : vector<64x128xf32>
    %104 = math.exp %103 : vector<64x128xf32>
    %cst_91 = arith.constant 1.000000e+00 : f32
    %105 = vector.broadcast %cst_91 : f32 to vector<64x128xf32>
    %106 = arith.addf %105, %104 : vector<64x128xf32>
    %107 = arith.divf %105, %106 : vector<64x128xf32>
    %108 = arith.mulf %102, %107 : vector<64x128xf32>
    %109 = vector.shape_cast %108 : vector<64x128xf32> to vector<8x8x128xf32>
    %c0_92 = arith.constant 0 : index
    %c0_93 = arith.constant 0 : index
    %c0_94 = arith.constant 0 : index
    %c0_95 = arith.constant 0 : index
    %110 = vector.load %arg8[%c0_92, %c0_93, %c0_94, %c0_95] : memref<1x8x8x128xf32, #tpu.memory_space<vmem>>, vector<1x8x8x128xf32>
    %111 = vector.shape_cast %110 : vector<1x8x8x128xf32> to vector<8x8x128xf32>
    %112 = vector.shape_cast %109 : vector<8x8x128xf32> to vector<1x8x8x128xf32>
    tpu.vector_store %arg8[%c0_92, %c0_93, %c0_94, %c0_95], %112 {strides = array<i32>} : memref<1x8x8x128xf32, #tpu.memory_space<vmem>>, vector<1x8x8x128xf32>,
    return
  }
  func.func @transform_0(%arg0: i32) -> (i32, i32, i32, i32) {
    %c0_i32 = arith.constant 0 : i32
    %c0_i32_0 = arith.constant 0 : i32
    %c0_i32_1 = arith.constant 0 : i32
    %c0_i32_2 = arith.constant 0 : i32
    return %arg0, %c0_i32, %c0_i32_0, %c0_i32_1 : i32, i32, i32, i32
  }
  func.func @transform_1(%arg0: i32) -> (i32, i32) {
    %c0_i32 = arith.constant 0 : i32
    %c0_i32_0 = arith.constant 0 : i32
    %c0_i32_1 = arith.constant 0 : i32
    return %c0_i32, %c0_i32_0 : i32, i32
  }
  func.func @transform_2(%arg0: i32) -> (i32, i32) {
    %c0_i32 = arith.constant 0 : i32
    %c0_i32_0 = arith.constant 0 : i32
    %c0_i32_1 = arith.constant 0 : i32
    return %c0_i32, %c0_i32_0 : i32, i32
  }
  func.func @transform_3(%arg0: i32) -> (i32, i32) {
    %c0_i32 = arith.constant 0 : i32
    %c0_i32_0 = arith.constant 0 : i32
    %c0_i32_1 = arith.constant 0 : i32
    return %c0_i32, %c0_i32_0 : i32, i32
  }
  func.func @transform_4(%arg0: i32) -> (i32, i32) {
    %c0_i32 = arith.constant 0 : i32
    %c0_i32_0 = arith.constant 0 : i32
    %c0_i32_1 = arith.constant 0 : i32
    return %c0_i32, %c0_i32_0 : i32, i32
  }
  func.func @transform_5(%arg0: i32) -> (i32, i32) {
    %c0_i32 = arith.constant 0 : i32
    %c0_i32_0 = arith.constant 0 : i32
    %c0_i32_1 = arith.constant 0 : i32
    return %c0_i32, %c0_i32_0 : i32, i32
  }
  func.func @transform_6(%arg0: i32) -> (i32, i32) {
    %c0_i32 = arith.constant 0 : i32
    %c0_i32_0 = arith.constant 0 : i32
    %c0_i32_1 = arith.constant 0 : i32
    return %c0_i32, %c0_i32_0 : i32, i32
  }
  func.func @transform_7(%arg0: i32) -> (i32, i32, i32, i32) {
    %c0_i32 = arith.constant 0 : i32
    %c0_i32_0 = arith.constant 0 : i32
    %c0_i32_1 = arith.constant 0 : i32
    %c0_i32_2 = arith.constant 0 : i32
    return %arg0, %c0_i32, %c0_i32_0, %c0_i32_1 : i32, i32, i32, i32
  }
}

</mosaic_0001>

<llo_original>
// kernel: down_forward.1
$region0: #{down_forward.1}
  #allocation0 [shape = 'u32[]', space=smem, size = 0x4, offset = 0x4, fixed_abs, tag = 'smem constant byte address 0x4 - core index']
  #allocation1 [shape = 'u32[144,128]{1,0:T(1,128)}', space=vmem, size = 0x12000, scoped, tag = 'internal scratch']
  #allocation2 [shape = 'f32[18,18,4]{2,1,0:T(8,128)}', space=vmem, size = 0x36000, scoped, tag = 'scratch operand']
  #allocation3 [shape = 'f32[18,18,4]{2,1,0:T(8,128)}', space=vmem, size = 0x36000, scoped, tag = 'scratch operand']
  %s0 = inlined_call_operand.vmem [shape: f32[2,16,16,4], index: 0, kind: input, shape index: {}]
  %s1 = inlined_call_operand.vmem [shape: bf16[36,4], index: 1, kind: input, shape index: {}]
  %s2 = inlined_call_operand.vmem [shape: f32[1,4], index: 2, kind: input, shape index: {}]
  %s3 = inlined_call_operand.vmem [shape: bf16[36,4], index: 3, kind: input, shape index: {}]
  %s4 = inlined_call_operand.vmem [shape: f32[1,4], index: 4, kind: input, shape index: {}]
  %s5 = inlined_call_operand.vmem [shape: bf16[36,128], index: 5, kind: input, shape index: {}]
  %s6 = inlined_call_operand.vmem [shape: f32[1,128], index: 6, kind: input, shape index: {}]
  %s7 = inlined_call_operand.vmem [shape: f32[2,8,8,128], index: 7, kind: output, shape index: {}]
  %s8 = sld [smem:[#allocation0]]
  $region61: #{down_forward.1} parent=0
    _
  %s10 = ssub.s32 1, %s8
  %s11 = scalar_select 0, %s10, %s8
  loop: start=0, step=1, limit=4
  $region2: #{down_forward.1} parent=0 // loop_pre_header
    _
  $region3: #{down_forward.1} parent=0 // loop_header
    %s13 = sphi 0, %s17
    %p14 = scmp.ge.s32.totalorder %s13, 4
    %s23 = sphi 0, %s25
    %s26 = sphi 0, %s23
    %s27 = sphi 0, %s26
    %s43 = sphi 0, %s27
    %s47 = sphi 0, %s47
    %s49 = sphi 0, %s47
    %s50 = sphi 0, %s49
    %s64 = sphi 0, %s50
    %s68 = sphi 0, %s68
    %s70 = sphi 0, %s68
    %s71 = sphi 0, %s70
    %s85 = sphi 0, %s71
    %s89 = sphi 0, %s89
    %s91 = sphi 0, %s89
    %s92 = sphi 0, %s91
    %s106 = sphi 0, %s92
    %s110 = sphi 0, %s110
    %s112 = sphi 0, %s110
    %s113 = sphi 0, %s112
    %s127 = sphi 0, %s113
    %s131 = sphi 0, %s131
    %s133 = sphi 0, %s131
    %s134 = sphi 0, %s133
    %s148 = sphi 0, %s134
    %s152 = sphi 0, %s152
    %s154 = sphi 0, %s152
    %s155 = sphi 0, %s154
    %s169 = sphi 0, %s155
    %s175 = sphi 0, %s177
    %s178 = sphi 0, %s175
    %s179 = sphi 0, %s178
    %s195 = sphi 0, %s179
  $region4: #{down_forward.1} parent=0 // loop_header_branch
    %16 = sbr.rel (%p14) target = $region8
  $region5: #{down_forward.1} parent=0 // loop_body
    %s18 = ssub.s32 %s13, 1
    %s19 = ssub.s32 %s13, 2
    %s20 = sadd.s32 %s13, 1
    %s21 = ssub.s32 %s13, %s20
    %p22 = scmp.eq.s32.totalorder %s21, 0
    %s24 = sadd.s32 %s23, 1
    %s25 = scalar_select %p22, %s23, %s24
    %p28 = pneg %p22
    %p29 = scmp.eq.s32.totalorder %s13, 1
    %p30 = por %p28, %p29
    %p31 = scmp.ne.s32.totalorder %s23, %s26
    %p32 = scmp.eq.s32.totalorder %s13, 0
    %p33 = por %p31, %p32
    %p34 = scmp.ne.s32.totalorder %s23, %s26
    %p35 = scmp.eq.s32.totalorder %s18, 1
    %p36 = por %p34, %p35
    %p37 = scmp.ne.s32.totalorder %s26, %s27
    %p38 = scmp.eq.s32.totalorder %s18, 0
    %p39 = por %p37, %p38
    %p40 = scmp.ne.s32.totalorder %s26, %s27
    %p41 = scmp.eq.s32.totalorder %s19, 1
    %p42 = por %p40, %p41
    %p44 = scmp.ne.s32.totalorder %s27, %s43
    %p45 = scmp.eq.s32.totalorder %s19, 0
    %p46 = por %p44, %p45
    %s48 = sadd.s32 %s47, 1
    %p51 = scmp.eq.s32.totalorder %s13, 1
    %p52 = scmp.ne.s32.totalorder %s47, %s49
    %p53 = scmp.eq.s32.totalorder %s13, 0
    %p54 = por %p52, %p53
    %p55 = scmp.ne.s32.totalorder %s47, %s49
    %p56 = scmp.eq.s32.totalorder %s18, 1
    %p57 = por %p55, %p56
    %p58 = scmp.ne.s32.totalorder %s49, %s50
    %p59 = scmp.eq.s32.totalorder %s18, 0
    %p60 = por %p58, %p59
    %p61 = scmp.ne.s32.totalorder %s49, %s50
    %p62 = scmp.eq.s32.totalorder %s19, 1
    %p63 = por %p61, %p62
    %p65 = scmp.ne.s32.totalorder %s50, %s64
    %p66 = scmp.eq.s32.totalorder %s19, 0
    %p67 = por %p65, %p66
    %s69 = sadd.s32 %s68, 1
    %p72 = scmp.eq.s32.totalorder %s13, 1
    %p73 = scmp.ne.s32.totalorder %s68, %s70
    %p74 = scmp.eq.s32.totalorder %s13, 0
    %p75 = por %p73, %p74
    %p76 = scmp.ne.s32.totalorder %s68, %s70
    %p77 = scmp.eq.s32.totalorder %s18, 1
    %p78 = por %p76, %p77
    %p79 = scmp.ne.s32.totalorder %s70, %s71
    %p80 = scmp.eq.s32.totalorder %s18, 0
    %p81 = por %p79, %p80
    %p82 = scmp.ne.s32.totalorder %s70, %s71
    %p83 = scmp.eq.s32.totalorder %s19, 1
    %p84 = por %p82, %p83
    %p86 = scmp.ne.s32.totalorder %s71, %s85
    %p87 = scmp.eq.s32.totalorder %s19, 0
    %p88 = por %p86, %p87
    %s90 = sadd.s32 %s89, 1
    %p93 = scmp.eq.s32.totalorder %s13, 1
    %p94 = scmp.ne.s32.totalorder %s89, %s91
    %p95 = scmp.eq.s32.totalorder %s13, 0
    %p96 = por %p94, %p95
    %p97 = scmp.ne.s32.totalorder %s89, %s91
    %p98 = scmp.eq.s32.totalorder %s18, 1
    %p99 = por %p97, %p98
    %p100 = scmp.ne.s32.totalorder %s91, %s92
    %p101 = scmp.eq.s32.totalorder %s18, 0
    %p102 = por %p100, %p101
    %p103 = scmp.ne.s32.totalorder %s91, %s92
    %p104 = scmp.eq.s32.totalorder %s19, 1
    %p105 = por %p103, %p104
    %p107 = scmp.ne.s32.totalorder %s92, %s106
    %p108 = scmp.eq.s32.totalorder %s19, 0
    %p109 = por %p107, %p108
    %s111 = sadd.s32 %s110, 1
    %p114 = scmp.eq.s32.totalorder %s13, 1
    %p115 = scmp.ne.s32.totalorder %s110, %s112
    %p116 = scmp.eq.s32.totalorder %s13, 0
    %p117 = por %p115, %p116
    %p118 = scmp.ne.s32.totalorder %s110, %s112
    %p119 = scmp.eq.s32.totalorder %s18, 1
    %p120 = por %p118, %p119
    %p121 = scmp.ne.s32.totalorder %s112, %s113
    %p122 = scmp.eq.s32.totalorder %s18, 0
    %p123 = por %p121, %p122
    %p124 = scmp.ne.s32.totalorder %s112, %s113
    %p125 = scmp.eq.s32.totalorder %s19, 1
    %p126 = por %p124, %p125
    %p128 = scmp.ne.s32.totalorder %s113, %s127
    %p129 = scmp.eq.s32.totalorder %s19, 0
    %p130 = por %p128, %p129
    %s132 = sadd.s32 %s131, 1
    %p135 = scmp.eq.s32.totalorder %s13, 1
    %p136 = scmp.ne.s32.totalorder %s131, %s133
    %p137 = scmp.eq.s32.totalorder %s13, 0
    %p138 = por %p136, %p137
    %p139 = scmp.ne.s32.totalorder %s131, %s133
    %p140 = scmp.eq.s32.totalorder %s18, 1
    %p141 = por %p139, %p140
    %p142 = scmp.ne.s32.totalorder %s133, %s134
    %p143 = scmp.eq.s32.totalorder %s18, 0
    %p144 = por %p142, %p143
    %p145 = scmp.ne.s32.totalorder %s133, %s134
    %p146 = scmp.eq.s32.totalorder %s19, 1
    %p147 = por %p145, %p146
    %p149 = scmp.ne.s32.totalorder %s134, %s148
    %p150 = scmp.eq.s32.totalorder %s19, 0
    %p151 = por %p149, %p150
    %s153 = sadd.s32 %s152, 1
    %p156 = scmp.eq.s32.totalorder %s13, 1
    %p157 = scmp.ne.s32.totalorder %s152, %s154
    %p158 = scmp.eq.s32.totalorder %s13, 0
    %p159 = por %p157, %p158
    %p160 = scmp.ne.s32.totalorder %s152, %s154
    %p161 = scmp.eq.s32.totalorder %s18, 1
    %p162 = por %p160, %p161
    %p163 = scmp.ne.s32.totalorder %s154, %s155
    %p164 = scmp.eq.s32.totalorder %s18, 0
    %p165 = por %p163, %p164
    %p166 = scmp.ne.s32.totalorder %s154, %s155
    %p167 = scmp.eq.s32.totalorder %s19, 1
    %p168 = por %p166, %p167
    %p170 = scmp.ne.s32.totalorder %s155, %s169
    %p171 = scmp.eq.s32.totalorder %s19, 0
    %p172 = por %p170, %p171
    %s173 = ssub.s32 %s13, %s20
    %p174 = scmp.eq.s32.totalorder %s173, 0
    %s176 = sadd.s32 %s175, 1
    %s177 = scalar_select %p174, %s175, %s176
    %p180 = pneg %p174
    %p181 = scmp.eq.s32.totalorder %s13, 1
    %p182 = por %p180, %p181
    %p183 = scmp.ne.s32.totalorder %s175, %s178
    %p184 = scmp.eq.s32.totalorder %s13, 0
    %p185 = por %p183, %p184
    %p186 = scmp.ne.s32.totalorder %s175, %s178
    %p187 = scmp.eq.s32.totalorder %s18, 1
    %p188 = por %p186, %p187
    %p189 = scmp.ne.s32.totalorder %s178, %s179
    %p190 = scmp.eq.s32.totalorder %s18, 0
    %p191 = por %p189, %p190
    %p192 = scmp.ne.s32.totalorder %s178, %s179
    %p193 = scmp.eq.s32.totalorder %s19, 1
    %p194 = por %p192, %p193
    %p196 = scmp.ne.s32.totalorder %s179, %s195
    %p197 = scmp.eq.s32.totalorder %s19, 0
    %p198 = por %p196, %p197
    %p199 = scmp.le.s32.totalorder 1, %s13
    %p200 = scmp.lt.s32.totalorder %s13, 3
    %p201 = pnand %p199, %p200
    %p202 = pneg %p201
    // Predicated region
    $region9: #{down_forward.1} parent=5 // pred_check
      _
    $region10: #{down_forward.1} parent=5 // pred_check_branch
      %204 = sbr.rel (%p201) target = $region12
    $region11: #{down_forward.1} parent=5 // pred_region
      %s205 = ssub.s32 %s13, 1
      // Predicated region
      $region13: #{down_forward.1} parent=11 // pred_check
        %p206 = pneg %p60
      $region14: #{down_forward.1} parent=11 // pred_check_branch
        %208 = sbr.rel (%p206) target = $region16
      $region15: #{down_forward.1} parent=11 // pred_region
        _
      $region16: #{down_forward.1} parent=11 // pred_fallthru
        _
      // Predicated region
      $region17: #{down_forward.1} parent=11 // pred_check
        %p209 = pneg %p81
      $region18: #{down_forward.1} parent=11 // pred_check_branch
        %211 = sbr.rel (%p209) target = $region20
      $region19: #{down_forward.1} parent=11 // pred_region
        _
      $region20: #{down_forward.1} parent=11 // pred_fallthru
        _
      // Predicated region
      $region21: #{down_forward.1} parent=11 // pred_check
        %p212 = pneg %p102
      $region22: #{down_forward.1} parent=11 // pred_check_branch
        %214 = sbr.rel (%p212) target = $region24
      $region23: #{down_forward.1} parent=11 // pred_region
        _
      $region24: #{down_forward.1} parent=11 // pred_fallthru
        _
      // Predicated region
      $region25: #{down_forward.1} parent=11 // pred_check
        %p215 = pneg %p123
      $region26: #{down_forward.1} parent=11 // pred_check_branch
        %217 = sbr.rel (%p215) target = $region28
      $region27: #{down_forward.1} parent=11 // pred_region
        _
      $region28: #{down_forward.1} parent=11 // pred_fallthru
        _
      // Predicated region
      $region29: #{down_forward.1} parent=11 // pred_check
        %p218 = pneg %p144
      $region30: #{down_forward.1} parent=11 // pred_check_branch
        %220 = sbr.rel (%p218) target = $region32
      $region31: #{down_forward.1} parent=11 // pred_region
        _
      $region32: #{down_forward.1} parent=11 // pred_fallthru
        _
      // Predicated region
      $region33: #{down_forward.1} parent=11 // pred_check
        %p221 = pneg %p165
      $region34: #{down_forward.1} parent=11 // pred_check_branch
        %223 = sbr.rel (%p221) target = $region36
      $region35: #{down_forward.1} parent=11 // pred_region
        _
      $region36: #{down_forward.1} parent=11 // pred_fallthru
        _
    $region12: #{down_forward.1} parent=5 // pred_fallthru
      _
    %p224 = scmp.lt.s32.totalorder %s13, 2
    // Predicated region
    $region37: #{down_forward.1} parent=5 // pred_check
      %p225 = pneg %p224
    $region38: #{down_forward.1} parent=5 // pred_check_branch
      %227 = sbr.rel (%p225) target = $region40
    $region39: #{down_forward.1} parent=5 // pred_region
      // Predicated region
      $region41: #{down_forward.1} parent=39 // pred_check
        %p228 = pneg %p33
      $region42: #{down_forward.1} parent=39 // pred_check_branch
        %230 = sbr.rel (%p228) target = $region44
      $region43: #{down_forward.1} parent=39 // pred_region
        %p231 = scmp.lt.s32.totalorder %s13, 1
        %s232 = scalar_select %p231, %s13, 1
        %s233 = smul.addr %s232, 32
        %s234 = smul.addr %s233, 8
        %s235 = scalar_lea.vmem %s0, %s234
      $region44: #{down_forward.1} parent=39 // pred_fallthru
        _
    $region40: #{down_forward.1} parent=5 // pred_fallthru
      _
    %p236 = scmp.le.s32.totalorder 1, %s13
    %p237 = scmp.lt.s32.totalorder %s13, 3
    %p238 = pnand %p236, %p237
    %p239 = pneg %p238
    // Predicated region
    $region45: #{down_forward.1} parent=5 // pred_check
      _
    $region46: #{down_forward.1} parent=5 // pred_check_branch
      %241 = sbr.rel (%p238) target = $region48
    $region47: #{down_forward.1} parent=5 // pred_region
      %s242 = ssub.s32 %s13, 1
      %p243 = scmp.lt.s32.totalorder %s18, 1
      %s244 = scalar_select %p243, %s18, 1
      %s245 = smul.addr %s244, 32
      %s246 = smul.addr %s245, 8
      %s247 = scalar_lea.vmem %s0, %s246
      %p248 = pneg %p39
      %p249 = pneg %p36
      %p250 = pneg %p60
      %p251 = pneg %p57
      %p252 = pneg %p81
      %p253 = pneg %p78
      %p254 = pneg %p102
      %p255 = pneg %p99
      %p256 = pneg %p123
      %p257 = pneg %p120
      %p258 = pneg %p144
      %p259 = pneg %p141
      %p260 = pneg %p165
      %p261 = pneg %p162
      %p262 = pneg %p191
      %p263 = pneg %p188
      %p264 = scmp.lt.s32.totalorder %s18, 1
      %s265 = scalar_select %p264, %s18, 1
      %s266 = smul.addr %s265, 8
      %s267 = smul.addr %s266, 8
      %s268 = scalar_lea.vmem %s7, %s267
      %p269 = scmp.lt.s32.totalorder %s18, 1
      %s270 = scalar_select %p269, %s18, 1
      %s271 = smul.addr %s270, 32
      %s272 = smul.addr %s271, 8
      %s273 = scalar_lea.vmem %s0, %s272
      %p274 = scmp.lt.s32.totalorder %s18, 1
      %s275 = scalar_select %p274, %s18, 1
      %s276 = smul.addr %s275, 8
      %s277 = smul.addr %s276, 8
      %s278 = scalar_lea.vmem %s7, %s277
      %v280 = vld [vmem:[%s273] sm:$0xff]
      %v281 = vld [vmem:[%s273 + $0x8] sm:$0xff]
      %v282 = vld [vmem:[%s273 + $0x10] sm:$0xff]
      %v283 = vld [vmem:[%s273 + $0x18] sm:$0xff]
      %v284 = vld [vmem:[%s273 + $0x20] sm:$0xff]
      %v285 = vld [vmem:[%s273 + $0x28] sm:$0xff]
      %v286 = vld [vmem:[%s273 + $0x30] sm:$0xff]
      %v287 = vld [vmem:[%s273 + $0x38] sm:$0xff]
      %v288 = vld [vmem:[%s273 + $0x40] sm:$0xff]
      %v289 = vld [vmem:[%s273 + $0x48] sm:$0xff]
      %v290 = vld [vmem:[%s273 + $0x50] sm:$0xff]
      %v291 = vld [vmem:[%s273 + $0x58] sm:$0xff]
      %v292 = vld [vmem:[%s273 + $0x60] sm:$0xff]
      %v293 = vld [vmem:[%s273 + $0x68] sm:$0xff]
      %v294 = vld [vmem:[%s273 + $0x70] sm:$0xff]
      %v295 = vld [vmem:[%s273 + $0x78] sm:$0xff]
      %v296 = vld [vmem:[%s273 + $0x80] sm:$0xff]
      %v297 = vld [vmem:[%s273 + $0x88] sm:$0xff]
      %v298 = vld [vmem:[%s273 + $0x90] sm:$0xff]
      %v299 = vld [vmem:[%s273 + $0x98] sm:$0xff]
      %v300 = vld [vmem:[%s273 + $0xa0] sm:$0xff]
      %v301 = vld [vmem:[%s273 + $0xa8] sm:$0xff]
      %v302 = vld [vmem:[%s273 + $0xb0] sm:$0xff]
      %v303 = vld [vmem:[%s273 + $0xb8] sm:$0xff]
      %v304 = vld [vmem:[%s273 + $0xc0] sm:$0xff]
      %v305 = vld [vmem:[%s273 + $0xc8] sm:$0xff]
      %v306 = vld [vmem:[%s273 + $0xd0] sm:$0xff]
      %v307 = vld [vmem:[%s273 + $0xd8] sm:$0xff]
      %v308 = vld [vmem:[%s273 + $0xe0] sm:$0xff]
      %v309 = vld [vmem:[%s273 + $0xe8] sm:$0xff]
      %v310 = vld [vmem:[%s273 + $0xf0] sm:$0xff]
      %v311 = vld [vmem:[%s273 + $0xf8] sm:$0xff]
      %s312 = scalar_lea.vmem [#allocation2], 24
      %vm313 = vcmask 31744
      %314 = vst.msk [vmem:[%s312 + $0x1] sm:$0xff] %vm313, %v280
      %315 = vst.msk [vmem:[%s312 + $0x9] sm:$0xff] %vm313, %v281
      %316 = vst.msk [vmem:[%s312 + $0x19] sm:$0xff] %vm313, %v282
      %317 = vst.msk [vmem:[%s312 + $0x21] sm:$0xff] %vm313, %v283
      %318 = vst.msk [vmem:[%s312 + $0x31] sm:$0xff] %vm313, %v284
      %319 = vst.msk [vmem:[%s312 + $0x39] sm:$0xff] %vm313, %v285
      %320 = vst.msk [vmem:[%s312 + $0x49] sm:$0xff] %vm313, %v286
      %321 = vst.msk [vmem:[%s312 + $0x51] sm:$0xff] %vm313, %v287
      %322 = vst.msk [vmem:[%s312 + $0x61] sm:$0xff] %vm313, %v288
      %323 = vst.msk [vmem:[%s312 + $0x69] sm:$0xff] %vm313, %v289
      %324 = vst.msk [vmem:[%s312 + $0x79] sm:$0xff] %vm313, %v290
      %325 = vst.msk [vmem:[%s312 + $0x81] sm:$0xff] %vm313, %v291
      %326 = vst.msk [vmem:[%s312 + $0x91] sm:$0xff] %vm313, %v292
      %327 = vst.msk [vmem:[%s312 + $0x99] sm:$0xff] %vm313, %v293
      %328 = vst.msk [vmem:[%s312 + $0xa9] sm:$0xff] %vm313, %v294
      %329 = vst.msk [vmem:[%s312 + $0xb1] sm:$0xff] %vm313, %v295
      %330 = vst.msk [vmem:[%s312 + $0xc1] sm:$0xff] %vm313, %v296
      %331 = vst.msk [vmem:[%s312 + $0xc9] sm:$0xff] %vm313, %v297
      %332 = vst.msk [vmem:[%s312 + $0xd9] sm:$0xff] %vm313, %v298
      %333 = vst.msk [vmem:[%s312 + $0xe1] sm:$0xff] %vm313, %v299
      %334 = vst.msk [vmem:[%s312 + $0xf1] sm:$0xff] %vm313, %v300
      %335 = vst.msk [vmem:[%s312 + $0xf9] sm:$0xff] %vm313, %v301
      %336 = vst.msk [vmem:[%s312 + $0x109] sm:$0xff] %vm313, %v302
      %337 = vst.msk [vmem:[%s312 + $0x111] sm:$0xff] %vm313, %v303
      %338 = vst.msk [vmem:[%s312 + $0x121] sm:$0xff] %vm313, %v304
      %339 = vst.msk [vmem:[%s312 + $0x129] sm:$0xff] %vm313, %v305
      %340 = vst.msk [vmem:[%s312 + $0x139] sm:$0xff] %vm313, %v306
      %341 = vst.msk [vmem:[%s312 + $0x141] sm:$0xff] %vm313, %v307
      %342 = vst.msk [vmem:[%s312 + $0x151] sm:$0xff] %vm313, %v308
      %343 = vst.msk [vmem:[%s312 + $0x159] sm:$0xff] %vm313, %v309
      %344 = vst.msk [vmem:[%s312 + $0x169] sm:$0xff] %vm313, %v310
      %345 = vst.msk [vmem:[%s312 + $0x171] sm:$0xff] %vm313, %v311
      %346 = vst.msk [vmem:[#allocation2 + $0x1] sm:$0xff] %vm313, %v282
      %347 = vst.msk [vmem:[#allocation2 + $0x9] sm:$0xff] %vm313, %v283
      %s348 = scalar_lea.vmem [#allocation2], 408
      %349 = vst.msk [vmem:[%s348 + $0x1] sm:$0xff] %vm313, %v308
      %350 = vst.msk [vmem:[%s348 + $0x9] sm:$0xff] %vm313, %v309
      %v351 = vld [vmem:[#allocation2 + $0x2] sm:$0x1]
      %v352 = vld [vmem:[#allocation2 + $0x1a] sm:$0x1]
      %v353 = vld [vmem:[#allocation2 + $0x32] sm:$0x1]
      %v354 = vld [vmem:[#allocation2 + $0x4a] sm:$0x1]
      %v355 = vld [vmem:[#allocation2 + $0x62] sm:$0x1]
      %v356 = vld [vmem:[#allocation2 + $0x7a] sm:$0x1]
      %v357 = vld [vmem:[#allocation2 + $0x92] sm:$0x1]
      %v358 = vld [vmem:[#allocation2 + $0xaa] sm:$0x1]
      %v359 = vld [vmem:[#allocation2 + $0xc2] sm:$0x1]
      %v360 = vld [vmem:[#allocation2 + $0xda] sm:$0x1]
      %v361 = vld [vmem:[#allocation2 + $0xf2] sm:$0x1]
      %v362 = vld [vmem:[#allocation2 + $0x10a] sm:$0x1]
      %v363 = vld [vmem:[#allocation2 + $0x122] sm:$0x1]
      %v364 = vld [vmem:[#allocation2 + $0x13a] sm:$0x1]
      %v365 = vld [vmem:[#allocation2 + $0x152] sm:$0x1]
      %v366 = vld [vmem:[#allocation2 + $0x16a] sm:$0x1]
      %v367 = vld [vmem:[#allocation2 + $0x182] sm:$0x1]
      %v368 = vld [vmem:[#allocation2 + $0x19a] sm:$0x1]
      %vm369 = vcmask 24576
      %370 = vst.msk [vmem:[#allocation2] sm:$0x1] %vm369, %v351
      %371 = vst.msk [vmem:[#allocation2 + $0x18] sm:$0x1] %vm369, %v352
      %372 = vst.msk [vmem:[#allocation2 + $0x30] sm:$0x1] %vm369, %v353
      %373 = vst.msk [vmem:[#allocation2 + $0x48] sm:$0x1] %vm369, %v354
      %374 = vst.msk [vmem:[#allocation2 + $0x60] sm:$0x1] %vm369, %v355
      %375 = vst.msk [vmem:[#allocation2 + $0x78] sm:$0x1] %vm369, %v356
      %376 = vst.msk [vmem:[#allocation2 + $0x90] sm:$0x1] %vm369, %v357
      %377 = vst.msk [vmem:[#allocation2 + $0xa8] sm:$0x1] %vm369, %v358
      %378 = vst.msk [vmem:[#allocation2 + $0xc0] sm:$0x1] %vm369, %v359
      %379 = vst.msk [vmem:[#allocation2 + $0xd8] sm:$0x1] %vm369, %v360
      %380 = vst.msk [vmem:[#allocation2 + $0xf0] sm:$0x1] %vm369, %v361
      %381 = vst.msk [vmem:[#allocation2 + $0x108] sm:$0x1] %vm369, %v362
      %382 = vst.msk [vmem:[#allocation2 + $0x120] sm:$0x1] %vm369, %v363
      %383 = vst.msk [vmem:[#allocation2 + $0x138] sm:$0x1] %vm369, %v364
      %384 = vst.msk [vmem:[#allocation2 + $0x150] sm:$0x1] %vm369, %v365
      %385 = vst.msk [vmem:[#allocation2 + $0x168] sm:$0x1] %vm369, %v366
      %386 = vst.msk [vmem:[#allocation2 + $0x180] sm:$0x1] %vm369, %v367
      %387 = vst.msk [vmem:[#allocation2 + $0x198] sm:$0x1] %vm369, %v368
      %v388 = vld [vmem:[#allocation2 + $0xf] sm:$0x1]
      %v389 = vld [vmem:[#allocation2 + $0x27] sm:$0x1]
      %v390 = vld [vmem:[#allocation2 + $0x3f] sm:$0x1]
      %v391 = vld [vmem:[#allocation2 + $0x57] sm:$0x1]
      %v392 = vld [vmem:[#allocation2 + $0x6f] sm:$0x1]
      %v393 = vld [vmem:[#allocation2 + $0x87] sm:$0x1]
      %v394 = vld [vmem:[#allocation2 + $0x9f] sm:$0x1]
      %v395 = vld [vmem:[#allocation2 + $0xb7] sm:$0x1]
      %v396 = vld [vmem:[#allocation2 + $0xcf] sm:$0x1]
      %v397 = vld [vmem:[#allocation2 + $0xe7] sm:$0x1]
      %v398 = vld [vmem:[#allocation2 + $0xff] sm:$0x1]
      %v399 = vld [vmem:[#allocation2 + $0x117] sm:$0x1]
      %v400 = vld [vmem:[#allocation2 + $0x12f] sm:$0x1]
      %v401 = vld [vmem:[#allocation2 + $0x147] sm:$0x1]
      %v402 = vld [vmem:[#allocation2 + $0x15f] sm:$0x1]
      %v403 = vld [vmem:[#allocation2 + $0x177] sm:$0x1]
      %v404 = vld [vmem:[#allocation2 + $0x18f] sm:$0x1]
      %v405 = vld [vmem:[#allocation2 + $0x1a7] sm:$0x1]
      %406 = vst.msk [vmem:[#allocation2 + $0x11] sm:$0x1] %vm369, %v388
      %407 = vst.msk [vmem:[#allocation2 + $0x29] sm:$0x1] %vm369, %v389
      %408 = vst.msk [vmem:[#allocation2 + $0x41] sm:$0x1] %vm369, %v390
      %409 = vst.msk [vmem:[#allocation2 + $0x59] sm:$0x1] %vm369, %v391
      %410 = vst.msk [vmem:[#allocation2 + $0x71] sm:$0x1] %vm369, %v392
      %411 = vst.msk [vmem:[#allocation2 + $0x89] sm:$0x1] %vm369, %v393
      %412 = vst.msk [vmem:[#allocation2 + $0xa1] sm:$0x1] %vm369, %v394
      %413 = vst.msk [vmem:[#allocation2 + $0xb9] sm:$0x1] %vm369, %v395
      %414 = vst.msk [vmem:[#allocation2 + $0xd1] sm:$0x1] %vm369, %v396
      %415 = vst.msk [vmem:[#allocation2 + $0xe9] sm:$0x1] %vm369, %v397
      %416 = vst.msk [vmem:[#allocation2 + $0x101] sm:$0x1] %vm369, %v398
      %417 = vst.msk [vmem:[#allocation2 + $0x119] sm:$0x1] %vm369, %v399
      %418 = vst.msk [vmem:[#allocation2 + $0x131] sm:$0x1] %vm369, %v400
      %419 = vst.msk [vmem:[#allocation2 + $0x149] sm:$0x1] %vm369, %v401
      %420 = vst.msk [vmem:[#allocation2 + $0x161] sm:$0x1] %vm369, %v402
      %421 = vst.msk [vmem:[#allocation2 + $0x179] sm:$0x1] %vm369, %v403
      %422 = vst.msk [vmem:[#allocation2 + $0x191] sm:$0x1] %vm369, %v404
      %423 = vst.msk [vmem:[#allocation2 + $0x1a9] sm:$0x1] %vm369, %v405
      %v424 = vld [vmem:[#allocation2] sm:$0xff]
      %v425 = vld [vmem:[#allocation2 + $0x8] sm:$0xff]
      %v426 = vld [vmem:[#allocation2 + $0x10] sm:$0x3]
      %v427 = vld [vmem:[#allocation2 + $0x18] sm:$0xff]
      %v428 = vld [vmem:[#allocation2 + $0x20] sm:$0xff]
      %v429 = vld [vmem:[#allocation2 + $0x28] sm:$0x3]
      %v430 = vld [vmem:[#allocation2 + $0x30] sm:$0xff]
      %v431 = vld [vmem:[#allocation2 + $0x38] sm:$0xff]
      %v432 = vld [vmem:[#allocation2 + $0x40] sm:$0x3]
      %v433 = vld [vmem:[#allocation2 + $0x48] sm:$0xff]
      %v434 = vld [vmem:[#allocation2 + $0x50] sm:$0xff]
      %v435 = vld [vmem:[#allocation2 + $0x58] sm:$0x3]
      %v436 = vld [vmem:[#allocation2 + $0x60] sm:$0xff]
      %v437 = vld [vmem:[#allocation2 + $0x68] sm:$0xff]
      %v438 = vld [vmem:[#allocation2 + $0x70] sm:$0x3]
      %v439 = vld [vmem:[#allocation2 + $0x78] sm:$0xff]
      %v440 = vld [vmem:[#allocation2 + $0x80] sm:$0xff]
      %v441 = vld [vmem:[#allocation2 + $0x88] sm:$0x3]
      %v442 = vld [vmem:[#allocation2 + $0x90] sm:$0xff]
      %v443 = vld [vmem:[#allocation2 + $0x98] sm:$0xff]
      %v444 = vld [vmem:[#allocation2 + $0xa0] sm:$0x3]
      %v445 = vld [vmem:[#allocation2 + $0xa8] sm:$0xff]
      %v446 = vld [vmem:[#allocation2 + $0xb0] sm:$0xff]
      %v447 = vld [vmem:[#allocation2 + $0xb8] sm:$0x3]
      %v448 = vld [vmem:[#allocation2 + $0xc0] sm:$0xff]
      %v449 = vld [vmem:[#allocation2 + $0xc8] sm:$0xff]
      %v450 = vld [vmem:[#allocation2 + $0xd0] sm:$0x3]
      %v451 = vld [vmem:[#allocation2 + $0xd8] sm:$0xff]
      %v452 = vld [vmem:[#allocation2 + $0xe0] sm:$0xff]
      %v453 = vld [vmem:[#allocation2 + $0xe8] sm:$0x3]
      %v454 = vld [vmem:[#allocation2 + $0xf0] sm:$0xff]
      %v455 = vld [vmem:[#allocation2 + $0xf8] sm:$0xff]
      %v456 = vld [vmem:[#allocation2 + $0x100] sm:$0x3]
      %v457 = vld [vmem:[#allocation2 + $0x108] sm:$0xff]
      %v458 = vld [vmem:[#allocation2 + $0x110] sm:$0xff]
      %v459 = vld [vmem:[#allocation2 + $0x118] sm:$0x3]
      %v460 = vld [vmem:[#allocation2 + $0x120] sm:$0xff]
      %v461 = vld [vmem:[#allocation2 + $0x128] sm:$0xff]
      %v462 = vld [vmem:[#allocation2 + $0x130] sm:$0x3]
      %v463 = vld [vmem:[#allocation2 + $0x138] sm:$0xff]
      %v464 = vld [vmem:[#allocation2 + $0x140] sm:$0xff]
      %v465 = vld [vmem:[#allocation2 + $0x148] sm:$0x3]
      %v466 = vld [vmem:[#allocation2 + $0x150] sm:$0xff]
      %v467 = vld [vmem:[#allocation2 + $0x158] sm:$0xff]
      %v468 = vld [vmem:[#allocation2 + $0x160] sm:$0x3]
      %v469 = vld [vmem:[#allocation2 + $0x168] sm:$0xff]
      %v470 = vld [vmem:[#allocation2 + $0x170] sm:$0xff]
      %v471 = vld [vmem:[#allocation2 + $0x178] sm:$0x3]
      %v472 = vld [vmem:[#allocation2 + $0x180] sm:$0xff]
      %v473 = vld [vmem:[#allocation2 + $0x188] sm:$0xff]
      %v474 = vld [vmem:[#allocation2 + $0x190] sm:$0x3]
      %v475 = vld [vmem:[#allocation2 + $0x198] sm:$0xff]
      %v476 = vld [vmem:[#allocation2 + $0x1a0] sm:$0xff]
      %v477 = vld [vmem:[#allocation2 + $0x1a8] sm:$0x3]
      %vm526 = vcmask 1046528
      %v527 = vrot.slane %v424, 1
      %v528 = vrot.slane %v425, 1
      %v529 = vsel %vm526, %v527, %v528
      %v530 = vrot.slane %v426, 1
      %v531 = vsel %vm526, %v528, %v530
      %v532 = vrot.slane %v427, 1
      %v533 = vrot.slane %v428, 1
      %v534 = vsel %vm526, %v532, %v533
      %v535 = vrot.slane %v429, 1
      %v536 = vsel %vm526, %v533, %v535
      %v537 = vrot.slane %v430, 1
      %v538 = vrot.slane %v431, 1
      %v539 = vsel %vm526, %v537, %v538
      %v540 = vrot.slane %v432, 1
      %v541 = vsel %vm526, %v538, %v540
      %v542 = vrot.slane %v433, 1
      %v543 = vrot.slane %v434, 1
      %v544 = vsel %vm526, %v542, %v543
      %v545 = vrot.slane %v435, 1
      %v546 = vsel %vm526, %v543, %v545
      %v547 = vrot.slane %v436, 1
      %v548 = vrot.slane %v437, 1
      %v549 = vsel %vm526, %v547, %v548
      %v550 = vrot.slane %v438, 1
      %v551 = vsel %vm526, %v548, %v550
      %v552 = vrot.slane %v439, 1
      %v553 = vrot.slane %v440, 1
      %v554 = vsel %vm526, %v552, %v553
      %v555 = vrot.slane %v441, 1
      %v556 = vsel %vm526, %v553, %v555
      %v557 = vrot.slane %v442, 1
      %v558 = vrot.slane %v443, 1
      %v559 = vsel %vm526, %v557, %v558
      %v560 = vrot.slane %v444, 1
      %v561 = vsel %vm526, %v558, %v560
      %v562 = vrot.slane %v445, 1
      %v563 = vrot.slane %v446, 1
      %v564 = vsel %vm526, %v562, %v563
      %v565 = vrot.slane %v447, 1
      %v566 = vsel %vm526, %v563, %v565
      %v567 = vrot.slane %v448, 1
      %v568 = vrot.slane %v449, 1
      %v569 = vsel %vm526, %v567, %v568
      %v570 = vrot.slane %v450, 1
      %v571 = vsel %vm526, %v568, %v570
      %v572 = vrot.slane %v451, 1
      %v573 = vrot.slane %v452, 1
      %v574 = vsel %vm526, %v572, %v573
      %v575 = vrot.slane %v453, 1
      %v576 = vsel %vm526, %v573, %v575
      %v577 = vrot.slane %v454, 1
      %v578 = vrot.slane %v455, 1
      %v579 = vsel %vm526, %v577, %v578
      %v580 = vrot.slane %v456, 1
      %v581 = vsel %vm526, %v578, %v580
      %v582 = vrot.slane %v457, 1
      %v583 = vrot.slane %v458, 1
      %v584 = vsel %vm526, %v582, %v583
      %v585 = vrot.slane %v459, 1
      %v586 = vsel %vm526, %v583, %v585
      %v587 = vrot.slane %v460, 1
      %v588 = vrot.slane %v461, 1
      %v589 = vsel %vm526, %v587, %v588
      %v590 = vrot.slane %v462, 1
      %v591 = vsel %vm526, %v588, %v590
      %v592 = vrot.slane %v463, 1
      %v593 = vrot.slane %v464, 1
      %v594 = vsel %vm526, %v592, %v593
      %v595 = vrot.slane %v465, 1
      %v596 = vsel %vm526, %v593, %v595
      %v597 = vrot.slane %v466, 1
      %v598 = vrot.slane %v467, 1
      %v599 = vsel %vm526, %v597, %v598
      %v600 = vrot.slane %v468, 1
      %v601 = vsel %vm526, %v598, %v600
      %v602 = vrot.slane %v469, 1
      %v603 = vrot.slane %v470, 1
      %v604 = vsel %vm526, %v602, %v603
      %v605 = vrot.slane %v471, 1
      %v606 = vsel %vm526, %v603, %v605
      %607 = vrot.lane.b32.xlu0 %v529, 4
      %v608 = vpop.permute.xlu0 %607
      %609 = vrot.lane.b32.xlu0 %v531, 4
      %v610 = vpop.permute.xlu0 %609
      %611 = vrot.lane.b32.xlu0 %v534, 4
      %v612 = vpop.permute.xlu0 %611
      %613 = vrot.lane.b32.xlu0 %v536, 4
      %v614 = vpop.permute.xlu0 %613
      %615 = vrot.lane.b32.xlu0 %v539, 4
      %v616 = vpop.permute.xlu0 %615
      %617 = vrot.lane.b32.xlu0 %v541, 4
      %v618 = vpop.permute.xlu0 %617
      %619 = vrot.lane.b32.xlu0 %v544, 4
      %v620 = vpop.permute.xlu0 %619
      %621 = vrot.lane.b32.xlu0 %v546, 4
      %v622 = vpop.permute.xlu0 %621
      %623 = vrot.lane.b32.xlu0 %v549, 4
      %v624 = vpop.permute.xlu0 %623
      %625 = vrot.lane.b32.xlu0 %v551, 4
      %v626 = vpop.permute.xlu0 %625
      %627 = vrot.lane.b32.xlu0 %v554, 4
      %v628 = vpop.permute.xlu0 %627
      %629 = vrot.lane.b32.xlu0 %v556, 4
      %v630 = vpop.permute.xlu0 %629
      %631 = vrot.lane.b32.xlu0 %v559, 4
      %v632 = vpop.permute.xlu0 %631
      %633 = vrot.lane.b32.xlu0 %v561, 4
      %v634 = vpop.permute.xlu0 %633
      %635 = vrot.lane.b32.xlu0 %v564, 4
      %v636 = vpop.permute.xlu0 %635
      %637 = vrot.lane.b32.xlu0 %v566, 4
      %v638 = vpop.permute.xlu0 %637
      %639 = vrot.lane.b32.xlu0 %v569, 4
      %v640 = vpop.permute.xlu0 %639
      %641 = vrot.lane.b32.xlu0 %v571, 4
      %v642 = vpop.permute.xlu0 %641
      %643 = vrot.lane.b32.xlu0 %v574, 4
      %v644 = vpop.permute.xlu0 %643
      %645 = vrot.lane.b32.xlu0 %v576, 4
      %v646 = vpop.permute.xlu0 %645
      %647 = vrot.lane.b32.xlu0 %v579, 4
      %v648 = vpop.permute.xlu0 %647
      %649 = vrot.lane.b32.xlu0 %v581, 4
      %v650 = vpop.permute.xlu0 %649
      %651 = vrot.lane.b32.xlu0 %v584, 4
      %v652 = vpop.permute.xlu0 %651
      %653 = vrot.lane.b32.xlu0 %v586, 4
      %v654 = vpop.permute.xlu0 %653
      %655 = vrot.lane.b32.xlu0 %v589, 4
      %v656 = vpop.permute.xlu0 %655
      %657 = vrot.lane.b32.xlu0 %v591, 4
      %v658 = vpop.permute.xlu0 %657
      %659 = vrot.lane.b32.xlu0 %v594, 4
      %v660 = vpop.permute.xlu0 %659
      %661 = vrot.lane.b32.xlu0 %v596, 4
      %v662 = vpop.permute.xlu0 %661
      %663 = vrot.lane.b32.xlu0 %v599, 4
      %v664 = vpop.permute.xlu0 %663
      %665 = vrot.lane.b32.xlu0 %v601, 4
      %v666 = vpop.permute.xlu0 %665
      %667 = vrot.lane.b32.xlu0 %v604, 4
      %v668 = vpop.permute.xlu0 %667
      %669 = vrot.lane.b32.xlu0 %v606, 4
      %v670 = vpop.permute.xlu0 %669
      %vm703 = vcmask 1045504
      %v704 = vrot.slane %v424, 2
      %v705 = vrot.slane %v425, 2
      %v706 = vsel %vm703, %v704, %v705
      %v707 = vrot.slane %v426, 2
      %v708 = vsel %vm703, %v705, %v707
      %v709 = vrot.slane %v427, 2
      %v710 = vrot.slane %v428, 2
      %v711 = vsel %vm703, %v709, %v710
      %v712 = vrot.slane %v429, 2
      %v713 = vsel %vm703, %v710, %v712
      %v714 = vrot.slane %v430, 2
      %v715 = vrot.slane %v431, 2
      %v716 = vsel %vm703, %v714, %v715
      %v717 = vrot.slane %v432, 2
      %v718 = vsel %vm703, %v715, %v717
      %v719 = vrot.slane %v433, 2
      %v720 = vrot.slane %v434, 2
      %v721 = vsel %vm703, %v719, %v720
      %v722 = vrot.slane %v435, 2
      %v723 = vsel %vm703, %v720, %v722
      %v724 = vrot.slane %v436, 2
      %v725 = vrot.slane %v437, 2
      %v726 = vsel %vm703, %v724, %v725
      %v727 = vrot.slane %v438, 2
      %v728 = vsel %vm703, %v725, %v727
      %v729 = vrot.slane %v439, 2
      %v730 = vrot.slane %v440, 2
      %v731 = vsel %vm703, %v729, %v730
      %v732 = vrot.slane %v441, 2
      %v733 = vsel %vm703, %v730, %v732
      %v734 = vrot.slane %v442, 2
      %v735 = vrot.slane %v443, 2
      %v736 = vsel %vm703, %v734, %v735
      %v737 = vrot.slane %v444, 2
      %v738 = vsel %vm703, %v735, %v737
      %v739 = vrot.slane %v445, 2
      %v740 = vrot.slane %v446, 2
      %v741 = vsel %vm703, %v739, %v740
      %v742 = vrot.slane %v447, 2
      %v743 = vsel %vm703, %v740, %v742
      %v744 = vrot.slane %v448, 2
      %v745 = vrot.slane %v449, 2
      %v746 = vsel %vm703, %v744, %v745
      %v747 = vrot.slane %v450, 2
      %v748 = vsel %vm703, %v745, %v747
      %v749 = vrot.slane %v451, 2
      %v750 = vrot.slane %v452, 2
      %v751 = vsel %vm703, %v749, %v750
      %v752 = vrot.slane %v453, 2
      %v753 = vsel %vm703, %v750, %v752
      %v754 = vrot.slane %v454, 2
      %v755 = vrot.slane %v455, 2
      %v756 = vsel %vm703, %v754, %v755
      %v757 = vrot.slane %v456, 2
      %v758 = vsel %vm703, %v755, %v757
      %v759 = vrot.slane %v457, 2
      %v760 = vrot.slane %v458, 2
      %v761 = vsel %vm703, %v759, %v760
      %v762 = vrot.slane %v459, 2
      %v763 = vsel %vm703, %v760, %v762
      %v764 = vrot.slane %v460, 2
      %v765 = vrot.slane %v461, 2
      %v766 = vsel %vm703, %v764, %v765
      %v767 = vrot.slane %v462, 2
      %v768 = vsel %vm703, %v765, %v767
      %v769 = vrot.slane %v463, 2
      %v770 = vrot.slane %v464, 2
      %v771 = vsel %vm703, %v769, %v770
      %v772 = vrot.slane %v465, 2
      %v773 = vsel %vm703, %v770, %v772
      %v774 = vrot.slane %v466, 2
      %v775 = vrot.slane %v467, 2
      %v776 = vsel %vm703, %v774, %v775
      %v777 = vrot.slane %v468, 2
      %v778 = vsel %vm703, %v775, %v777
      %v779 = vrot.slane %v469, 2
      %v780 = vrot.slane %v470, 2
      %v781 = vsel %vm703, %v779, %v780
      %v782 = vrot.slane %v471, 2
      %v783 = vsel %vm703, %v780, %v782
      %784 = vrot.lane.b32.xlu0 %v706, 8
      %v785 = vpop.permute.xlu0 %784
      %786 = vrot.lane.b32.xlu0 %v708, 8
      %v787 = vpop.permute.xlu0 %786
      %788 = vrot.lane.b32.xlu0 %v711, 8
      %v789 = vpop.permute.xlu0 %788
      %790 = vrot.lane.b32.xlu0 %v713, 8
      %v791 = vpop.permute.xlu0 %790
      %792 = vrot.lane.b32.xlu0 %v716, 8
      %v793 = vpop.permute.xlu0 %792
      %794 = vrot.lane.b32.xlu0 %v718, 8
      %v795 = vpop.permute.xlu0 %794
      %796 = vrot.lane.b32.xlu0 %v721, 8
      %v797 = vpop.permute.xlu0 %796
      %798 = vrot.lane.b32.xlu0 %v723, 8
      %v799 = vpop.permute.xlu0 %798
      %800 = vrot.lane.b32.xlu0 %v726, 8
      %v801 = vpop.permute.xlu0 %800
      %802 = vrot.lane.b32.xlu0 %v728, 8
      %v803 = vpop.permute.xlu0 %802
      %804 = vrot.lane.b32.xlu0 %v731, 8
      %v805 = vpop.permute.xlu0 %804
      %806 = vrot.lane.b32.xlu0 %v733, 8
      %v807 = vpop.permute.xlu0 %806
      %808 = vrot.lane.b32.xlu0 %v736, 8
      %v809 = vpop.permute.xlu0 %808
      %810 = vrot.lane.b32.xlu0 %v738, 8
      %v811 = vpop.permute.xlu0 %810
      %812 = vrot.lane.b32.xlu0 %v741, 8
      %v813 = vpop.permute.xlu0 %812
      %814 = vrot.lane.b32.xlu0 %v743, 8
      %v815 = vpop.permute.xlu0 %814
      %816 = vrot.lane.b32.xlu0 %v746, 8
      %v817 = vpop.permute.xlu0 %816
      %818 = vrot.lane.b32.xlu0 %v748, 8
      %v819 = vpop.permute.xlu0 %818
      %820 = vrot.lane.b32.xlu0 %v751, 8
      %v821 = vpop.permute.xlu0 %820
      %822 = vrot.lane.b32.xlu0 %v753, 8
      %v823 = vpop.permute.xlu0 %822
      %824 = vrot.lane.b32.xlu0 %v756, 8
      %v825 = vpop.permute.xlu0 %824
      %826 = vrot.lane.b32.xlu0 %v758, 8
      %v827 = vpop.permute.xlu0 %826
      %828 = vrot.lane.b32.xlu0 %v761, 8
      %v829 = vpop.permute.xlu0 %828
      %830 = vrot.lane.b32.xlu0 %v763, 8
      %v831 = vpop.permute.xlu0 %830
      %832 = vrot.lane.b32.xlu0 %v766, 8
      %v833 = vpop.permute.xlu0 %832
      %834 = vrot.lane.b32.xlu0 %v768, 8
      %v835 = vpop.permute.xlu0 %834
      %836 = vrot.lane.b32.xlu0 %v771, 8
      %v837 = vpop.permute.xlu0 %836
      %838 = vrot.lane.b32.xlu0 %v773, 8
      %v839 = vpop.permute.xlu0 %838
      %840 = vrot.lane.b32.xlu0 %v776, 8
      %v841 = vpop.permute.xlu0 %840
      %842 = vrot.lane.b32.xlu0 %v778, 8
      %v843 = vpop.permute.xlu0 %842
      %844 = vrot.lane.b32.xlu0 %v781, 8
      %v845 = vpop.permute.xlu0 %844
      %846 = vrot.lane.b32.xlu0 %v783, 8
      %v847 = vpop.permute.xlu0 %846
      %882 = vrot.lane.b32.xlu0 %v427, 12
      %v883 = vpop.permute.xlu0 %882
      %884 = vrot.lane.b32.xlu0 %v428, 12
      %v885 = vpop.permute.xlu0 %884
      %886 = vrot.lane.b32.xlu0 %v430, 12
      %v887 = vpop.permute.xlu0 %886
      %888 = vrot.lane.b32.xlu0 %v431, 12
      %v889 = vpop.permute.xlu0 %888
      %890 = vrot.lane.b32.xlu0 %v433, 12
      %v891 = vpop.permute.xlu0 %890
      %892 = vrot.lane.b32.xlu0 %v434, 12
      %v893 = vpop.permute.xlu0 %892
      %894 = vrot.lane.b32.xlu0 %v436, 12
      %v895 = vpop.permute.xlu0 %894
      %896 = vrot.lane.b32.xlu0 %v437, 12
      %v897 = vpop.permute.xlu0 %896
      %898 = vrot.lane.b32.xlu0 %v439, 12
      %v899 = vpop.permute.xlu0 %898
      %900 = vrot.lane.b32.xlu0 %v440, 12
      %v901 = vpop.permute.xlu0 %900
      %902 = vrot.lane.b32.xlu0 %v442, 12
      %v903 = vpop.permute.xlu0 %902
      %904 = vrot.lane.b32.xlu0 %v443, 12
      %v905 = vpop.permute.xlu0 %904
      %906 = vrot.lane.b32.xlu0 %v445, 12
      %v907 = vpop.permute.xlu0 %906
      %908 = vrot.lane.b32.xlu0 %v446, 12
      %v909 = vpop.permute.xlu0 %908
      %910 = vrot.lane.b32.xlu0 %v448, 12
      %v911 = vpop.permute.xlu0 %910
      %912 = vrot.lane.b32.xlu0 %v449, 12
      %v913 = vpop.permute.xlu0 %912
      %914 = vrot.lane.b32.xlu0 %v451, 12
      %v915 = vpop.permute.xlu0 %914
      %916 = vrot.lane.b32.xlu0 %v452, 12
      %v917 = vpop.permute.xlu0 %916
      %918 = vrot.lane.b32.xlu0 %v454, 12
      %v919 = vpop.permute.xlu0 %918
      %920 = vrot.lane.b32.xlu0 %v455, 12
      %v921 = vpop.permute.xlu0 %920
      %922 = vrot.lane.b32.xlu0 %v457, 12
      %v923 = vpop.permute.xlu0 %922
      %924 = vrot.lane.b32.xlu0 %v458, 12
      %v925 = vpop.permute.xlu0 %924
      %926 = vrot.lane.b32.xlu0 %v460, 12
      %v927 = vpop.permute.xlu0 %926
      %928 = vrot.lane.b32.xlu0 %v461, 12
      %v929 = vpop.permute.xlu0 %928
      %930 = vrot.lane.b32.xlu0 %v463, 12
      %v931 = vpop.permute.xlu0 %930
      %932 = vrot.lane.b32.xlu0 %v464, 12
      %v933 = vpop.permute.xlu0 %932
      %934 = vrot.lane.b32.xlu0 %v466, 12
      %v935 = vpop.permute.xlu0 %934
      %936 = vrot.lane.b32.xlu0 %v467, 12
      %v937 = vpop.permute.xlu0 %936
      %938 = vrot.lane.b32.xlu0 %v469, 12
      %v939 = vpop.permute.xlu0 %938
      %940 = vrot.lane.b32.xlu0 %v470, 12
      %v941 = vpop.permute.xlu0 %940
      %942 = vrot.lane.b32.xlu0 %v472, 12
      %v943 = vpop.permute.xlu0 %942
      %944 = vrot.lane.b32.xlu0 %v473, 12
      %v945 = vpop.permute.xlu0 %944
      %v979 = vrot.slane %v472, 1
      %v980 = vrot.slane %v473, 1
      %v981 = vsel %vm526, %v979, %v980
      %v982 = vrot.slane %v474, 1
      %v983 = vsel %vm526, %v980, %v982
      %984 = vrot.lane.b32.xlu0 %v534, 16
      %v985 = vpop.permute.xlu0 %984
      %986 = vrot.lane.b32.xlu0 %v536, 16
      %v987 = vpop.permute.xlu0 %986
      %988 = vrot.lane.b32.xlu0 %v539, 16
      %v989 = vpop.permute.xlu0 %988
      %990 = vrot.lane.b32.xlu0 %v541, 16
      %v991 = vpop.permute.xlu0 %990
      %992 = vrot.lane.b32.xlu0 %v544, 16
      %v993 = vpop.permute.xlu0 %992
      %994 = vrot.lane.b32.xlu0 %v546, 16
      %v995 = vpop.permute.xlu0 %994
      %996 = vrot.lane.b32.xlu0 %v549, 16
      %v997 = vpop.permute.xlu0 %996
      %998 = vrot.lane.b32.xlu0 %v551, 16
      %v999 = vpop.permute.xlu0 %998
      %1000 = vrot.lane.b32.xlu0 %v554, 16
      %v1001 = vpop.permute.xlu0 %1000
      %1002 = vrot.lane.b32.xlu0 %v556, 16
      %v1003 = vpop.permute.xlu0 %1002
      %1004 = vrot.lane.b32.xlu0 %v559, 16
      %v1005 = vpop.permute.xlu0 %1004
      %1006 = vrot.lane.b32.xlu0 %v561, 16
      %v1007 = vpop.permute.xlu0 %1006
      %1008 = vrot.lane.b32.xlu0 %v564, 16
      %v1009 = vpop.permute.xlu0 %1008
      %1010 = vrot.lane.b32.xlu0 %v566, 16
      %v1011 = vpop.permute.xlu0 %1010
      %1012 = vrot.lane.b32.xlu0 %v569, 16
      %v1013 = vpop.permute.xlu0 %1012
      %1014 = vrot.lane.b32.xlu0 %v571, 16
      %v1015 = vpop.permute.xlu0 %1014
      %1016 = vrot.lane.b32.xlu0 %v574, 16
      %v1017 = vpop.permute.xlu0 %1016
      %1018 = vrot.lane.b32.xlu0 %v576, 16
      %v1019 = vpop.permute.xlu0 %1018
      %1020 = vrot.lane.b32.xlu0 %v579, 16
      %v1021 = vpop.permute.xlu0 %1020
      %1022 = vrot.lane.b32.xlu0 %v581, 16
      %v1023 = vpop.permute.xlu0 %1022
      %1024 = vrot.lane.b32.xlu0 %v584, 16
      %v1025 = vpop.permute.xlu0 %1024
      %1026 = vrot.lane.b32.xlu0 %v586, 16
      %v1027 = vpop.permute.xlu0 %1026
      %1028 = vrot.lane.b32.xlu0 %v589, 16
      %v1029 = vpop.permute.xlu0 %1028
      %1030 = vrot.lane.b32.xlu0 %v591, 16
      %v1031 = vpop.permute.xlu0 %1030
      %1032 = vrot.lane.b32.xlu0 %v594, 16
      %v1033 = vpop.permute.xlu0 %1032
      %1034 = vrot.lane.b32.xlu0 %v596, 16
      %v1035 = vpop.permute.xlu0 %1034
      %1036 = vrot.lane.b32.xlu0 %v599, 16
      %v1037 = vpop.permute.xlu0 %1036
      %1038 = vrot.lane.b32.xlu0 %v601, 16
      %v1039 = vpop.permute.xlu0 %1038
      %1040 = vrot.lane.b32.xlu0 %v604, 16
      %v1041 = vpop.permute.xlu0 %1040
      %1042 = vrot.lane.b32.xlu0 %v606, 16
      %v1043 = vpop.permute.xlu0 %1042
      %1044 = vrot.lane.b32.xlu0 %v981, 16
      %v1045 = vpop.permute.xlu0 %1044
      %1046 = vrot.lane.b32.xlu0 %v983, 16
      %v1047 = vpop.permute.xlu0 %1046
      %v1080 = vrot.slane %v472, 2
      %v1081 = vrot.slane %v473, 2
      %v1082 = vsel %vm703, %v1080, %v1081
      %v1083 = vrot.slane %v474, 2
      %v1084 = vsel %vm703, %v1081, %v1083
      %1085 = vrot.lane.b32.xlu0 %v711, 20
      %v1086 = vpop.permute.xlu0 %1085
      %1087 = vrot.lane.b32.xlu0 %v713, 20
      %v1088 = vpop.permute.xlu0 %1087
      %1089 = vrot.lane.b32.xlu0 %v716, 20
      %v1090 = vpop.permute.xlu0 %1089
      %1091 = vrot.lane.b32.xlu0 %v718, 20
      %v1092 = vpop.permute.xlu0 %1091
      %1093 = vrot.lane.b32.xlu0 %v721, 20
      %v1094 = vpop.permute.xlu0 %1093
      %1095 = vrot.lane.b32.xlu0 %v723, 20
      %v1096 = vpop.permute.xlu0 %1095
      %1097 = vrot.lane.b32.xlu0 %v726, 20
      %v1098 = vpop.permute.xlu0 %1097
      %1099 = vrot.lane.b32.xlu0 %v728, 20
      %v1100 = vpop.permute.xlu0 %1099
      %1101 = vrot.lane.b32.xlu0 %v731, 20
      %v1102 = vpop.permute.xlu0 %1101
      %1103 = vrot.lane.b32.xlu0 %v733, 20
      %v1104 = vpop.permute.xlu0 %1103
      %1105 = vrot.lane.b32.xlu0 %v736, 20
      %v1106 = vpop.permute.xlu0 %1105
      %1107 = vrot.lane.b32.xlu0 %v738, 20
      %v1108 = vpop.permute.xlu0 %1107
      %1109 = vrot.lane.b32.xlu0 %v741, 20
      %v1110 = vpop.permute.xlu0 %1109
      %1111 = vrot.lane.b32.xlu0 %v743, 20
      %v1112 = vpop.permute.xlu0 %1111
      %1113 = vrot.lane.b32.xlu0 %v746, 20
      %v1114 = vpop.permute.xlu0 %1113
      %1115 = vrot.lane.b32.xlu0 %v748, 20
      %v1116 = vpop.permute.xlu0 %1115
      %1117 = vrot.lane.b32.xlu0 %v751, 20
      %v1118 = vpop.permute.xlu0 %1117
      %1119 = vrot.lane.b32.xlu0 %v753, 20
      %v1120 = vpop.permute.xlu0 %1119
      %1121 = vrot.lane.b32.xlu0 %v756, 20
      %v1122 = vpop.permute.xlu0 %1121
      %1123 = vrot.lane.b32.xlu0 %v758, 20
      %v1124 = vpop.permute.xlu0 %1123
      %1125 = vrot.lane.b32.xlu0 %v761, 20
      %v1126 = vpop.permute.xlu0 %1125
      %1127 = vrot.lane.b32.xlu0 %v763, 20
      %v1128 = vpop.permute.xlu0 %1127
      %1129 = vrot.lane.b32.xlu0 %v766, 20
      %v1130 = vpop.permute.xlu0 %1129
      %1131 = vrot.lane.b32.xlu0 %v768, 20
      %v1132 = vpop.permute.xlu0 %1131
      %1133 = vrot.lane.b32.xlu0 %v771, 20
      %v1134 = vpop.permute.xlu0 %1133
      %1135 = vrot.lane.b32.xlu0 %v773, 20
      %v1136 = vpop.permute.xlu0 %1135
      %1137 = vrot.lane.b32.xlu0 %v776, 20
      %v1138 = vpop.permute.xlu0 %1137
      %1139 = vrot.lane.b32.xlu0 %v778, 20
      %v1140 = vpop.permute.xlu0 %1139
      %1141 = vrot.lane.b32.xlu0 %v781, 20
      %v1142 = vpop.permute.xlu0 %1141
      %1143 = vrot.lane.b32.xlu0 %v783, 20
      %v1144 = vpop.permute.xlu0 %1143
      %1145 = vrot.lane.b32.xlu0 %v1082, 20
      %v1146 = vpop.permute.xlu0 %1145
      %1147 = vrot.lane.b32.xlu0 %v1084, 20
      %v1148 = vpop.permute.xlu0 %1147
      %1183 = vrot.lane.b32.xlu0 %v430, 24
      %v1184 = vpop.permute.xlu0 %1183
      %1185 = vrot.lane.b32.xlu0 %v431, 24
      %v1186 = vpop.permute.xlu0 %1185
      %1187 = vrot.lane.b32.xlu0 %v433, 24
      %v1188 = vpop.permute.xlu0 %1187
      %1189 = vrot.lane.b32.xlu0 %v434, 24
      %v1190 = vpop.permute.xlu0 %1189
      %1191 = vrot.lane.b32.xlu0 %v436, 24
      %v1192 = vpop.permute.xlu0 %1191
      %1193 = vrot.lane.b32.xlu0 %v437, 24
      %v1194 = vpop.permute.xlu0 %1193
      %1195 = vrot.lane.b32.xlu0 %v439, 24
      %v1196 = vpop.permute.xlu0 %1195
      %1197 = vrot.lane.b32.xlu0 %v440, 24
      %v1198 = vpop.permute.xlu0 %1197
      %1199 = vrot.lane.b32.xlu0 %v442, 24
      %v1200 = vpop.permute.xlu0 %1199
      %1201 = vrot.lane.b32.xlu0 %v443, 24
      %v1202 = vpop.permute.xlu0 %1201
      %1203 = vrot.lane.b32.xlu0 %v445, 24
      %v1204 = vpop.permute.xlu0 %1203
      %1205 = vrot.lane.b32.xlu0 %v446, 24
      %v1206 = vpop.permute.xlu0 %1205
      %1207 = vrot.lane.b32.xlu0 %v448, 24
      %v1208 = vpop.permute.xlu0 %1207
      %1209 = vrot.lane.b32.xlu0 %v449, 24
      %v1210 = vpop.permute.xlu0 %1209
      %1211 = vrot.lane.b32.xlu0 %v451, 24
      %v1212 = vpop.permute.xlu0 %1211
      %1213 = vrot.lane.b32.xlu0 %v452, 24
      %v1214 = vpop.permute.xlu0 %1213
      %1215 = vrot.lane.b32.xlu0 %v454, 24
      %v1216 = vpop.permute.xlu0 %1215
      %1217 = vrot.lane.b32.xlu0 %v455, 24
      %v1218 = vpop.permute.xlu0 %1217
      %1219 = vrot.lane.b32.xlu0 %v457, 24
      %v1220 = vpop.permute.xlu0 %1219
      %1221 = vrot.lane.b32.xlu0 %v458, 24
      %v1222 = vpop.permute.xlu0 %1221
      %1223 = vrot.lane.b32.xlu0 %v460, 24
      %v1224 = vpop.permute.xlu0 %1223
      %1225 = vrot.lane.b32.xlu0 %v461, 24
      %v1226 = vpop.permute.xlu0 %1225
      %1227 = vrot.lane.b32.xlu0 %v463, 24
      %v1228 = vpop.permute.xlu0 %1227
      %1229 = vrot.lane.b32.xlu0 %v464, 24
      %v1230 = vpop.permute.xlu0 %1229
      %1231 = vrot.lane.b32.xlu0 %v466, 24
      %v1232 = vpop.permute.xlu0 %1231
      %1233 = vrot.lane.b32.xlu0 %v467, 24
      %v1234 = vpop.permute.xlu0 %1233
      %1235 = vrot.lane.b32.xlu0 %v469, 24
      %v1236 = vpop.permute.xlu0 %1235
      %1237 = vrot.lane.b32.xlu0 %v470, 24
      %v1238 = vpop.permute.xlu0 %1237
      %1239 = vrot.lane.b32.xlu0 %v472, 24
      %v1240 = vpop.permute.xlu0 %1239
      %1241 = vrot.lane.b32.xlu0 %v473, 24
      %v1242 = vpop.permute.xlu0 %1241
      %1243 = vrot.lane.b32.xlu0 %v475, 24
      %v1244 = vpop.permute.xlu0 %1243
      %1245 = vrot.lane.b32.xlu0 %v476, 24
      %v1246 = vpop.permute.xlu0 %1245
      %v1280 = vrot.slane %v475, 1
      %v1281 = vrot.slane %v476, 1
      %v1282 = vsel %vm526, %v1280, %v1281
      %v1283 = vrot.slane %v477, 1
      %v1284 = vsel %vm526, %v1281, %v1283
      %1285 = vrot.lane.b32.xlu0 %v539, 28
      %v1286 = vpop.permute.xlu0 %1285
      %1287 = vrot.lane.b32.xlu0 %v541, 28
      %v1288 = vpop.permute.xlu0 %1287
      %1289 = vrot.lane.b32.xlu0 %v544, 28
      %v1290 = vpop.permute.xlu0 %1289
      %1291 = vrot.lane.b32.xlu0 %v546, 28
      %v1292 = vpop.permute.xlu0 %1291
      %1293 = vrot.lane.b32.xlu0 %v549, 28
      %v1294 = vpop.permute.xlu0 %1293
      %1295 = vrot.lane.b32.xlu0 %v551, 28
      %v1296 = vpop.permute.xlu0 %1295
      %1297 = vrot.lane.b32.xlu0 %v554, 28
      %v1298 = vpop.permute.xlu0 %1297
      %1299 = vrot.lane.b32.xlu0 %v556, 28
      %v1300 = vpop.permute.xlu0 %1299
      %1301 = vrot.lane.b32.xlu0 %v559, 28
      %v1302 = vpop.permute.xlu0 %1301
      %1303 = vrot.lane.b32.xlu0 %v561, 28
      %v1304 = vpop.permute.xlu0 %1303
      %1305 = vrot.lane.b32.xlu0 %v564, 28
      %v1306 = vpop.permute.xlu0 %1305
      %1307 = vrot.lane.b32.xlu0 %v566, 28
      %v1308 = vpop.permute.xlu0 %1307
      %1309 = vrot.lane.b32.xlu0 %v569, 28
      %v1310 = vpop.permute.xlu0 %1309
      %1311 = vrot.lane.b32.xlu0 %v571, 28
      %v1312 = vpop.permute.xlu0 %1311
      %1313 = vrot.lane.b32.xlu0 %v574, 28
      %v1314 = vpop.permute.xlu0 %1313
      %1315 = vrot.lane.b32.xlu0 %v576, 28
      %v1316 = vpop.permute.xlu0 %1315
      %1317 = vrot.lane.b32.xlu0 %v579, 28
      %v1318 = vpop.permute.xlu0 %1317
      %1319 = vrot.lane.b32.xlu0 %v581, 28
      %v1320 = vpop.permute.xlu0 %1319
      %1321 = vrot.lane.b32.xlu0 %v584, 28
      %v1322 = vpop.permute.xlu0 %1321
      %1323 = vrot.lane.b32.xlu0 %v586, 28
      %v1324 = vpop.permute.xlu0 %1323
      %1325 = vrot.lane.b32.xlu0 %v589, 28
      %v1326 = vpop.permute.xlu0 %1325
      %1327 = vrot.lane.b32.xlu0 %v591, 28
      %v1328 = vpop.permute.xlu0 %1327
      %1329 = vrot.lane.b32.xlu0 %v594, 28
      %v1330 = vpop.permute.xlu0 %1329
      %1331 = vrot.lane.b32.xlu0 %v596, 28
      %v1332 = vpop.permute.xlu0 %1331
      %1333 = vrot.lane.b32.xlu0 %v599, 28
      %v1334 = vpop.permute.xlu0 %1333
      %1335 = vrot.lane.b32.xlu0 %v601, 28
      %v1336 = vpop.permute.xlu0 %1335
      %1337 = vrot.lane.b32.xlu0 %v604, 28
      %v1338 = vpop.permute.xlu0 %1337
      %1339 = vrot.lane.b32.xlu0 %v606, 28
      %v1340 = vpop.permute.xlu0 %1339
      %1341 = vrot.lane.b32.xlu0 %v981, 28
      %v1342 = vpop.permute.xlu0 %1341
      %1343 = vrot.lane.b32.xlu0 %v983, 28
      %v1344 = vpop.permute.xlu0 %1343
      %1345 = vrot.lane.b32.xlu0 %v1282, 28
      %v1346 = vpop.permute.xlu0 %1345
      %1347 = vrot.lane.b32.xlu0 %v1284, 28
      %v1348 = vpop.permute.xlu0 %1347
      %v1381 = vrot.slane %v475, 2
      %v1382 = vrot.slane %v476, 2
      %v1383 = vsel %vm703, %v1381, %v1382
      %v1384 = vrot.slane %v477, 2
      %v1385 = vsel %vm703, %v1382, %v1384
      %1386 = vrot.lane.b32.xlu0 %v716, 32
      %v1387 = vpop.permute.xlu0 %1386
      %1388 = vrot.lane.b32.xlu0 %v718, 32
      %v1389 = vpop.permute.xlu0 %1388
      %1390 = vrot.lane.b32.xlu0 %v721, 32
      %v1391 = vpop.permute.xlu0 %1390
      %1392 = vrot.lane.b32.xlu0 %v723, 32
      %v1393 = vpop.permute.xlu0 %1392
      %1394 = vrot.lane.b32.xlu0 %v726, 32
      %v1395 = vpop.permute.xlu0 %1394
      %1396 = vrot.lane.b32.xlu0 %v728, 32
      %v1397 = vpop.permute.xlu0 %1396
      %1398 = vrot.lane.b32.xlu0 %v731, 32
      %v1399 = vpop.permute.xlu0 %1398
      %1400 = vrot.lane.b32.xlu0 %v733, 32
      %v1401 = vpop.permute.xlu0 %1400
      %1402 = vrot.lane.b32.xlu0 %v736, 32
      %v1403 = vpop.permute.xlu0 %1402
      %1404 = vrot.lane.b32.xlu0 %v738, 32
      %v1405 = vpop.permute.xlu0 %1404
      %1406 = vrot.lane.b32.xlu0 %v741, 32
      %v1407 = vpop.permute.xlu0 %1406
      %1408 = vrot.lane.b32.xlu0 %v743, 32
      %v1409 = vpop.permute.xlu0 %1408
      %1410 = vrot.lane.b32.xlu0 %v746, 32
      %v1411 = vpop.permute.xlu0 %1410
      %1412 = vrot.lane.b32.xlu0 %v748, 32
      %v1413 = vpop.permute.xlu0 %1412
      %1414 = vrot.lane.b32.xlu0 %v751, 32
      %v1415 = vpop.permute.xlu0 %1414
      %1416 = vrot.lane.b32.xlu0 %v753, 32
      %v1417 = vpop.permute.xlu0 %1416
      %1418 = vrot.lane.b32.xlu0 %v756, 32
      %v1419 = vpop.permute.xlu0 %1418
      %1420 = vrot.lane.b32.xlu0 %v758, 32
      %v1421 = vpop.permute.xlu0 %1420
      %1422 = vrot.lane.b32.xlu0 %v761, 32
      %v1423 = vpop.permute.xlu0 %1422
      %1424 = vrot.lane.b32.xlu0 %v763, 32
      %v1425 = vpop.permute.xlu0 %1424
      %1426 = vrot.lane.b32.xlu0 %v766, 32
      %v1427 = vpop.permute.xlu0 %1426
      %1428 = vrot.lane.b32.xlu0 %v768, 32
      %v1429 = vpop.permute.xlu0 %1428
      %1430 = vrot.lane.b32.xlu0 %v771, 32
      %v1431 = vpop.permute.xlu0 %1430
      %1432 = vrot.lane.b32.xlu0 %v773, 32
      %v1433 = vpop.permute.xlu0 %1432
      %1434 = vrot.lane.b32.xlu0 %v776, 32
      %v1435 = vpop.permute.xlu0 %1434
      %1436 = vrot.lane.b32.xlu0 %v778, 32
      %v1437 = vpop.permute.xlu0 %1436
      %1438 = vrot.lane.b32.xlu0 %v781, 32
      %v1439 = vpop.permute.xlu0 %1438
      %1440 = vrot.lane.b32.xlu0 %v783, 32
      %v1441 = vpop.permute.xlu0 %1440
      %1442 = vrot.lane.b32.xlu0 %v1082, 32
      %v1443 = vpop.permute.xlu0 %1442
      %1444 = vrot.lane.b32.xlu0 %v1084, 32
      %v1445 = vpop.permute.xlu0 %1444
      %1446 = vrot.lane.b32.xlu0 %v1383, 32
      %v1447 = vpop.permute.xlu0 %1446
      %1448 = vrot.lane.b32.xlu0 %v1385, 32
      %v1449 = vpop.permute.xlu0 %1448
      %v1482 = vsel %vm313, %v424, %v608
      %v1483 = vsel %vm313, %v425, %v610
      %v1484 = vsel %vm313, %v427, %v612
      %v1485 = vsel %vm313, %v428, %v614
      %v1486 = vsel %vm313, %v430, %v616
      %v1487 = vsel %vm313, %v431, %v618
      %v1488 = vsel %vm313, %v433, %v620
      %v1489 = vsel %vm313, %v434, %v622
      %v1490 = vsel %vm313, %v436, %v624
      %v1491 = vsel %vm313, %v437, %v626
      %v1492 = vsel %vm313, %v439, %v628
      %v1493 = vsel %vm313, %v440, %v630
      %v1494 = vsel %vm313, %v442, %v632
      %v1495 = vsel %vm313, %v443, %v634
      %v1496 = vsel %vm313, %v445, %v636
      %v1497 = vsel %vm313, %v446, %v638
      %v1498 = vsel %vm313, %v448, %v640
      %v1499 = vsel %vm313, %v449, %v642
      %v1500 = vsel %vm313, %v451, %v644
      %v1501 = vsel %vm313, %v452, %v646
      %v1502 = vsel %vm313, %v454, %v648
      %v1503 = vsel %vm313, %v455, %v650
      %v1504 = vsel %vm313, %v457, %v652
      %v1505 = vsel %vm313, %v458, %v654
      %v1506 = vsel %vm313, %v460, %v656
      %v1507 = vsel %vm313, %v461, %v658
      %v1508 = vsel %vm313, %v463, %v660
      %v1509 = vsel %vm313, %v464, %v662
      %v1510 = vsel %vm313, %v466, %v664
      %v1511 = vsel %vm313, %v467, %v666
      %v1512 = vsel %vm313, %v469, %v668
      %v1513 = vsel %vm313, %v470, %v670
      %vm1514 = vcmask 64512
      %v1515 = vsel %vm1514, %v1482, %v785
      %v1516 = vsel %vm1514, %v1483, %v787
      %v1517 = vsel %vm1514, %v1484, %v789
      %v1518 = vsel %vm1514, %v1485, %v791
      %v1519 = vsel %vm1514, %v1486, %v793
      %v1520 = vsel %vm1514, %v1487, %v795
      %v1521 = vsel %vm1514, %v1488, %v797
      %v1522 = vsel %vm1514, %v1489, %v799
      %v1523 = vsel %vm1514, %v1490, %v801
      %v1524 = vsel %vm1514, %v1491, %v803
      %v1525 = vsel %vm1514, %v1492, %v805
      %v1526 = vsel %vm1514, %v1493, %v807
      %v1527 = vsel %vm1514, %v1494, %v809
      %v1528 = vsel %vm1514, %v1495, %v811
      %v1529 = vsel %vm1514, %v1496, %v813
      %v1530 = vsel %vm1514, %v1497, %v815
      %v1531 = vsel %vm1514, %v1498, %v817
      %v1532 = vsel %vm1514, %v1499, %v819
      %v1533 = vsel %vm1514, %v1500, %v821
      %v1534 = vsel %vm1514, %v1501, %v823
      %v1535 = vsel %vm1514, %v1502, %v825
      %v1536 = vsel %vm1514, %v1503, %v827
      %v1537 = vsel %vm1514, %v1504, %v829
      %v1538 = vsel %vm1514, %v1505, %v831
      %v1539 = vsel %vm1514, %v1506, %v833
      %v1540 = vsel %vm1514, %v1507, %v835
      %v1541 = vsel %vm1514, %v1508, %v837
      %v1542 = vsel %vm1514, %v1509, %v839
      %v1543 = vsel %vm1514, %v1510, %v841
      %v1544 = vsel %vm1514, %v1511, %v843
      %v1545 = vsel %vm1514, %v1512, %v845
      %v1546 = vsel %vm1514, %v1513, %v847
      %vm1547 = vcmask 97280
      %v1548 = vsel %vm1547, %v1515, %v883
      %v1549 = vsel %vm1547, %v1516, %v885
      %v1550 = vsel %vm1547, %v1517, %v887
      %v1551 = vsel %vm1547, %v1518, %v889
      %v1552 = vsel %vm1547, %v1519, %v891
      %v1553 = vsel %vm1547, %v1520, %v893
      %v1554 = vsel %vm1547, %v1521, %v895
      %v1555 = vsel %vm1547, %v1522, %v897
      %v1556 = vsel %vm1547, %v1523, %v899
      %v1557 = vsel %vm1547, %v1524, %v901
      %v1558 = vsel %vm1547, %v1525, %v903
      %v1559 = vsel %vm1547, %v1526, %v905
      %v1560 = vsel %vm1547, %v1527, %v907
      %v1561 = vsel %vm1547, %v1528, %v909
      %v1562 = vsel %vm1547, %v1529, %v911
      %v1563 = vsel %vm1547, %v1530, %v913
      %v1564 = vsel %vm1547, %v1531, %v915
      %v1565 = vsel %vm1547, %v1532, %v917
      %v1566 = vsel %vm1547, %v1533, %v919
      %v1567 = vsel %vm1547, %v1534, %v921
      %v1568 = vsel %vm1547, %v1535, %v923
      %v1569 = vsel %vm1547, %v1536, %v925
      %v1570 = vsel %vm1547, %v1537, %v927
      %v1571 = vsel %vm1547, %v1538, %v929
      %v1572 = vsel %vm1547, %v1539, %v931
      %v1573 = vsel %vm1547, %v1540, %v933
      %v1574 = vsel %vm1547, %v1541, %v935
      %v1575 = vsel %vm1547, %v1542, %v937
      %v1576 = vsel %vm1547, %v1543, %v939
      %v1577 = vsel %vm1547, %v1544, %v941
      %v1578 = vsel %vm1547, %v1545, %v943
      %v1579 = vsel %vm1547, %v1546, %v945
      %vm1580 = vcmask 130048
      %v1581 = vsel %vm1580, %v1548, %v985
      %v1582 = vsel %vm1580, %v1549, %v987
      %v1583 = vsel %vm1580, %v1550, %v989
      %v1584 = vsel %vm1580, %v1551, %v991
      %v1585 = vsel %vm1580, %v1552, %v993
      %v1586 = vsel %vm1580, %v1553, %v995
      %v1587 = vsel %vm1580, %v1554, %v997
      %v1588 = vsel %vm1580, %v1555, %v999
      %v1589 = vsel %vm1580, %v1556, %v1001
      %v1590 = vsel %vm1580, %v1557, %v1003
      %v1591 = vsel %vm1580, %v1558, %v1005
      %v1592 = vsel %vm1580, %v1559, %v1007
      %v1593 = vsel %vm1580, %v1560, %v1009
      %v1594 = vsel %vm1580, %v1561, %v1011
      %v1595 = vsel %vm1580, %v1562, %v1013
      %v1596 = vsel %vm1580, %v1563, %v1015
      %v1597 = vsel %vm1580, %v1564, %v1017
      %v1598 = vsel %vm1580, %v1565, %v1019
      %v1599 = vsel %vm1580, %v1566, %v1021
      %v1600 = vsel %vm1580, %v1567, %v1023
      %v1601 = vsel %vm1580, %v1568, %v1025
      %v1602 = vsel %vm1580, %v1569, %v1027
      %v1603 = vsel %vm1580, %v1570, %v1029
      %v1604 = vsel %vm1580, %v1571, %v1031
      %v1605 = vsel %vm1580, %v1572, %v1033
      %v1606 = vsel %vm1580, %v1573, %v1035
      %v1607 = vsel %vm1580, %v1574, %v1037
      %v1608 = vsel %vm1580, %v1575, %v1039
      %v1609 = vsel %vm1580, %v1576, %v1041
      %v1610 = vsel %vm1580, %v1577, %v1043
      %v1611 = vsel %vm1580, %v1578, %v1045
      %v1612 = vsel %vm1580, %v1579, %v1047
      %vm1613 = vcmask 162816
      %v1614 = vsel %vm1613, %v1581, %v1086
      %v1615 = vsel %vm1613, %v1582, %v1088
      %v1616 = vsel %vm1613, %v1583, %v1090
      %v1617 = vsel %vm1613, %v1584, %v1092
      %v1618 = vsel %vm1613, %v1585, %v1094
      %v1619 = vsel %vm1613, %v1586, %v1096
      %v1620 = vsel %vm1613, %v1587, %v1098
      %v1621 = vsel %vm1613, %v1588, %v1100
      %v1622 = vsel %vm1613, %v1589, %v1102
      %v1623 = vsel %vm1613, %v1590, %v1104
      %v1624 = vsel %vm1613, %v1591, %v1106
      %v1625 = vsel %vm1613, %v1592, %v1108
      %v1626 = vsel %vm1613, %v1593, %v1110
      %v1627 = vsel %vm1613, %v1594, %v1112
      %v1628 = vsel %vm1613, %v1595, %v1114
      %v1629 = vsel %vm1613, %v1596, %v1116
      %v1630 = vsel %vm1613, %v1597, %v1118
      %v1631 = vsel %vm1613, %v1598, %v1120
      %v1632 = vsel %vm1613, %v1599, %v1122
      %v1633 = vsel %vm1613, %v1600, %v1124
      %v1634 = vsel %vm1613, %v1601, %v1126
      %v1635 = vsel %vm1613, %v1602, %v1128
      %v1636 = vsel %vm1613, %v1603, %v1130
      %v1637 = vsel %vm1613, %v1604, %v1132
      %v1638 = vsel %vm1613, %v1605, %v1134
      %v1639 = vsel %vm1613, %v1606, %v1136
      %v1640 = vsel %vm1613, %v1607, %v1138
      %v1641 = vsel %vm1613, %v1608, %v1140
      %v1642 = vsel %vm1613, %v1609, %v1142
      %v1643 = vsel %vm1613, %v1610, %v1144
      %v1644 = vsel %vm1613, %v1611, %v1146
      %v1645 = vsel %vm1613, %v1612, %v1148
      %vm1646 = vcmask 195584
      %v1647 = vsel %vm1646, %v1614, %v1184
      %v1648 = vsel %vm1646, %v1615, %v1186
      %v1649 = vsel %vm1646, %v1616, %v1188
      %v1650 = vsel %vm1646, %v1617, %v1190
      %v1651 = vsel %vm1646, %v1618, %v1192
      %v1652 = vsel %vm1646, %v1619, %v1194
      %v1653 = vsel %vm1646, %v1620, %v1196
      %v1654 = vsel %vm1646, %v1621, %v1198
      %v1655 = vsel %vm1646, %v1622, %v1200
      %v1656 = vsel %vm1646, %v1623, %v1202
      %v1657 = vsel %vm1646, %v1624, %v1204
      %v1658 = vsel %vm1646, %v1625, %v1206
      %v1659 = vsel %vm1646, %v1626, %v1208
      %v1660 = vsel %vm1646, %v1627, %v1210
      %v1661 = vsel %vm1646, %v1628, %v1212
      %v1662 = vsel %vm1646, %v1629, %v1214
      %v1663 = vsel %vm1646, %v1630, %v1216
      %v1664 = vsel %vm1646, %v1631, %v1218
      %v1665 = vsel %vm1646, %v1632, %v1220
      %v1666 = vsel %vm1646, %v1633, %v1222
      %v1667 = vsel %vm1646, %v1634, %v1224
      %v1668 = vsel %vm1646, %v1635, %v1226
      %v1669 = vsel %vm1646, %v1636, %v1228
      %v1670 = vsel %vm1646, %v1637, %v1230
      %v1671 = vsel %vm1646, %v1638, %v1232
      %v1672 = vsel %vm1646, %v1639, %v1234
      %v1673 = vsel %vm1646, %v1640, %v1236
      %v1674 = vsel %vm1646, %v1641, %v1238
      %v1675 = vsel %vm1646, %v1642, %v1240
      %v1676 = vsel %vm1646, %v1643, %v1242
      %v1677 = vsel %vm1646, %v1644, %v1244
      %v1678 = vsel %vm1646, %v1645, %v1246
      %vm1679 = vcmask 228352
      %v1680 = vsel %vm1679, %v1647, %v1286
      %v1681 = vsel %vm1679, %v1648, %v1288
      %v1682 = vsel %vm1679, %v1649, %v1290
      %v1683 = vsel %vm1679, %v1650, %v1292
      %v1684 = vsel %vm1679, %v1651, %v1294
      %v1685 = vsel %vm1679, %v1652, %v1296
      %v1686 = vsel %vm1679, %v1653, %v1298
      %v1687 = vsel %vm1679, %v1654, %v1300
      %v1688 = vsel %vm1679, %v1655, %v1302
      %v1689 = vsel %vm1679, %v1656, %v1304
      %v1690 = vsel %vm1679, %v1657, %v1306
      %v1691 = vsel %vm1679, %v1658, %v1308
      %v1692 = vsel %vm1679, %v1659, %v1310
      %v1693 = vsel %vm1679, %v1660, %v1312
      %v1694 = vsel %vm1679, %v1661, %v1314
      %v1695 = vsel %vm1679, %v1662, %v1316
      %v1696 = vsel %vm1679, %v1663, %v1318
      %v1697 = vsel %vm1679, %v1664, %v1320
      %v1698 = vsel %vm1679, %v1665, %v1322
      %v1699 = vsel %vm1679, %v1666, %v1324
      %v1700 = vsel %vm1679, %v1667, %v1326
      %v1701 = vsel %vm1679, %v1668, %v1328
      %v1702 = vsel %vm1679, %v1669, %v1330
      %v1703 = vsel %vm1679, %v1670, %v1332
      %v1704 = vsel %vm1679, %v1671, %v1334
      %v1705 = vsel %vm1679, %v1672, %v1336
      %v1706 = vsel %vm1679, %v1673, %v1338
      %v1707 = vsel %vm1679, %v1674, %v1340
      %v1708 = vsel %vm1679, %v1675, %v1342
      %v1709 = vsel %vm1679, %v1676, %v1344
      %v1710 = vsel %vm1679, %v1677, %v1346
      %v1711 = vsel %vm1679, %v1678, %v1348
      %vm1712 = vcmask 261120
      %v1713 = vsel %vm1712, %v1680, %v1387
      %v1714 = vsel %vm1712, %v1681, %v1389
      %v1715 = vsel %vm1712, %v1682, %v1391
      %v1716 = vsel %vm1712, %v1683, %v1393
      %v1717 = vsel %vm1712, %v1684, %v1395
      %v1718 = vsel %vm1712, %v1685, %v1397
      %v1719 = vsel %vm1712, %v1686, %v1399
      %v1720 = vsel %vm1712, %v1687, %v1401
      %v1721 = vsel %vm1712, %v1688, %v1403
      %v1722 = vsel %vm1712, %v1689, %v1405
      %v1723 = vsel %vm1712, %v1690, %v1407
      %v1724 = vsel %vm1712, %v1691, %v1409
      %v1725 = vsel %vm1712, %v1692, %v1411
      %v1726 = vsel %vm1712, %v1693, %v1413
      %v1727 = vsel %vm1712, %v1694, %v1415
      %v1728 = vsel %vm1712, %v1695, %v1417
      %v1729 = vsel %vm1712, %v1696, %v1419
      %v1730 = vsel %vm1712, %v1697, %v1421
      %v1731 = vsel %vm1712, %v1698, %v1423
      %v1732 = vsel %vm1712, %v1699, %v1425
      %v1733 = vsel %vm1712, %v1700, %v1427
      %v1734 = vsel %vm1712, %v1701, %v1429
      %v1735 = vsel %vm1712, %v1702, %v1431
      %v1736 = vsel %vm1712, %v1703, %v1433
      %v1737 = vsel %vm1712, %v1704, %v1435
      %v1738 = vsel %vm1712, %v1705, %v1437
      %v1739 = vsel %vm1712, %v1706, %v1439
      %v1740 = vsel %vm1712, %v1707, %v1441
      %v1741 = vsel %vm1712, %v1708, %v1443
      %v1742 = vsel %vm1712, %v1709, %v1445
      %v1743 = vsel %vm1712, %v1710, %v1447
      %v1744 = vsel %vm1712, %v1711, %v1449
      %v1745 = vpack.c.bf16 %v1714, %v1713
      %v1746 = vpack.c.bf16 %v1716, %v1715
      %v1747 = vpack.c.bf16 %v1718, %v1717
      %v1748 = vpack.c.bf16 %v1720, %v1719
      %v1749 = vpack.c.bf16 %v1722, %v1721
      %v1750 = vpack.c.bf16 %v1724, %v1723
      %v1751 = vpack.c.bf16 %v1726, %v1725
      %v1752 = vpack.c.bf16 %v1728, %v1727
      %v1753 = vpack.c.bf16 %v1730, %v1729
      %v1754 = vpack.c.bf16 %v1732, %v1731
      %v1755 = vpack.c.bf16 %v1734, %v1733
      %v1756 = vpack.c.bf16 %v1736, %v1735
      %v1757 = vpack.c.bf16 %v1738, %v1737
      %v1758 = vpack.c.bf16 %v1740, %v1739
      %v1759 = vpack.c.bf16 %v1742, %v1741
      %v1760 = vpack.c.bf16 %v1744, %v1743
      %v1761 = vld [vmem:[%s1] sm:$0xf]
      %v1762 = vld [vmem:[%s1 + $0x4] sm:$0xf]
      %v1763 = vld [vmem:[%s1 + $0x8] sm:$0xf]
      %v1764 = vld [vmem:[%s1 + $0xc] sm:$0xf]
      %v1765 = vld [vmem:[%s1 + $0x10] sm:$0x3]
      %v1766 = vld [vmem:[%s2] sm:$0x1]
      %v1768 = vlaneseq
      %v1769 = vshrl.u32 %v1768, 7
      %v1770 = vsub.s32 0, %v1769
      %v1771 = vrot.slane %v1766, %v1770
      %v1778 = vunpack.c.l.b16 %v1761
      %v1779 = vunpack.c.l.b16 %v1762
      %v1780 = vunpack.c.l.b16 %v1763
      %v1781 = vunpack.c.l.b16 %v1764
      %v1782 = vunpack.c.l.b16 %v1765
      %v1783 = vpack.c.b16 %v1779, %v1778
      %v1784 = vpack.c.b16 %v1781, %v1780
      %v1785 = vpack.c.b16 %v1782, %v1782
      %vm1788 = vcmask 293888
      %v1790 = vsel %vm1788, %v1745, 0
      %v1793 = vsel %vm1788, %v1746, 0
      %v1796 = vsel %vm1788, %v1747, 0
      %v1799 = vsel %vm1788, %v1748, 0
      %v1802 = vsel %vm1788, %v1749, 0
      %v1805 = vsel %vm1788, %v1750, 0
      %v1808 = vsel %vm1788, %v1751, 0
      %v1811 = vsel %vm1788, %v1752, 0
      %v1814 = vsel %vm1788, %v1753, 0
      %v1817 = vsel %vm1788, %v1754, 0
      %v1820 = vsel %vm1788, %v1755, 0
      %v1823 = vsel %vm1788, %v1756, 0
      %v1826 = vsel %vm1788, %v1757, 0
      %v1829 = vsel %vm1788, %v1758, 0
      %v1832 = vsel %vm1788, %v1759, 0
      %v1835 = vsel %vm1788, %v1760, 0
      %vm1837 = vcmask 1041408
      %v1839 = vsel %vm1837, %v1785, 0
      %1841 = vmatprep.subr.bf16.mxu0 0
      %1842 = vmatpush1.bf16.msra.mxu0 %v1783
      %1843 = vmatprep.subr.bf16.mxu0 0
      %1844 = vmatpush1.bf16.msra.mxu0 %v1784
      %1845 = vmatprep.subr.bf16.mxu0 0
      %1846 = vmatpush1.bf16.msra.mxu0 %v1839
      %1847 = vmatprep.subr.bf16.mxu0 0
      %1848 = vmatpush1.bf16.msra.mxu0 0
      %1849 = vmatprep.subr.bf16.mxu0 0
      %1850 = vmatpush1.bf16.msra.mxu0 0
      %1851 = vmatprep.subr.bf16.mxu0 0
      %1852 = vmatpush1.bf16.msra.mxu0 0
      %1853 = vmatprep.subr.bf16.mxu0 0
      %1854 = vmatpush1.bf16.msra.mxu0 0
      %1855 = vmatprep.subr.bf16.mxu0 0
      %1856 = vmatpush1.bf16.msra.mxu0 0
      %1857 = vmatprep.subr.bf16.mxu0 0
      %1858 = vmatpush1.bf16.msra.mxu0 0
      %1859 = vmatprep.subr.bf16.mxu0 0
      %1860 = vmatpush1.bf16.msra.mxu0 0
      %1861 = vmatprep.subr.bf16.mxu0 0
      %1862 = vmatpush1.bf16.msra.mxu0 0
      %1863 = vmatprep.subr.bf16.mxu0 0
      %1864 = vmatpush1.bf16.msra.mxu0 0
      %1865 = vmatprep.subr.bf16.mxu0 0
      %1866 = vmatpush1.bf16.msra.mxu0 0
      %1867 = vmatprep.subr.bf16.mxu0 0
      %1868 = vmatpush1.bf16.msra.mxu0 0
      %1869 = vmatprep.subr.bf16.mxu0 0
      %1870 = vmatpush1.bf16.msra.mxu0 0
      %1871 = vmatprep.subr.bf16.mxu0 0
      %1872 = vmatpush1.bf16.msra.mxu0 0
      %1873 = vmatprep.mubr.bf16.mxu0 0
      %1874 = vmatmul.mubr.bf16.gmra.mrb[0].mxu0 %v1790
      %v1875 = vpop.f32.mrb[0].mxu0
      %v1876 = vadd.f32 %v1771, %v1875
      %v1877 = vpop.f32.mrb[0].mxu0
      %v1878 = vpop.f32.mrb[0].mxu0
      %v1879 = vadd.f32 %v1771, %v1878
      %v1880 = vpop.f32.mrb[0].mxu0
      %1881 = vmatprep.mubr.bf16.mxu0 0
      %1882 = vmatmul.mubr.bf16.gmra.mrb[0].mxu0 %v1793
      %v1883 = vpop.f32.mrb[0].mxu0
      %v1884 = vadd.f32 %v1771, %v1883
      %v1885 = vpop.f32.mrb[0].mxu0
      %v1886 = vpop.f32.mrb[0].mxu0
      %v1887 = vadd.f32 %v1771, %v1886
      %v1888 = vpop.f32.mrb[0].mxu0
      %1889 = vmatprep.mubr.bf16.mxu0 0
      %1890 = vmatmul.mubr.bf16.gmra.mrb[0].mxu0 %v1796
      %v1891 = vpop.f32.mrb[0].mxu0
      %v1892 = vadd.f32 %v1771, %v1891
      %v1893 = vpop.f32.mrb[0].mxu0
      %v1894 = vpop.f32.mrb[0].mxu0
      %v1895 = vadd.f32 %v1771, %v1894
      %v1896 = vpop.f32.mrb[0].mxu0
      %1897 = vmatprep.mubr.bf16.mxu0 0
      %1898 = vmatmul.mubr.bf16.gmra.mrb[0].mxu0 %v1799
      %v1899 = vpop.f32.mrb[0].mxu0
      %v1900 = vadd.f32 %v1771, %v1899
      %v1901 = vpop.f32.mrb[0].mxu0
      %v1902 = vpop.f32.mrb[0].mxu0
      %v1903 = vadd.f32 %v1771, %v1902
      %v1904 = vpop.f32.mrb[0].mxu0
      %1905 = vmatprep.mubr.bf16.mxu0 0
      %1906 = vmatmul.mubr.bf16.gmra.mrb[0].mxu0 %v1802
      %v1907 = vpop.f32.mrb[0].mxu0
      %v1908 = vadd.f32 %v1771, %v1907
      %v1909 = vpop.f32.mrb[0].mxu0
      %v1910 = vpop.f32.mrb[0].mxu0
      %v1911 = vadd.f32 %v1771, %v1910
      %v1912 = vpop.f32.mrb[0].mxu0
      %1913 = vmatprep.mubr.bf16.mxu0 0
      %1914 = vmatmul.mubr.bf16.gmra.mrb[0].mxu0 %v1805
      %v1915 = vpop.f32.mrb[0].mxu0
      %v1916 = vadd.f32 %v1771, %v1915
      %v1917 = vpop.f32.mrb[0].mxu0
      %v1918 = vpop.f32.mrb[0].mxu0
      %v1919 = vadd.f32 %v1771, %v1918
      %v1920 = vpop.f32.mrb[0].mxu0
      %1921 = vmatprep.mubr.bf16.mxu0 0
      %1922 = vmatmul.mubr.bf16.gmra.mrb[0].mxu0 %v1808
      %v1923 = vpop.f32.mrb[0].mxu0
      %v1924 = vadd.f32 %v1771, %v1923
      %v1925 = vpop.f32.mrb[0].mxu0
      %v1926 = vpop.f32.mrb[0].mxu0
      %v1927 = vadd.f32 %v1771, %v1926
      %v1928 = vpop.f32.mrb[0].mxu0
      %1929 = vmatprep.mubr.bf16.mxu0 0
      %1930 = vmatmul.mubr.bf16.gmra.mrb[0].mxu0 %v1811
      %v1931 = vpop.f32.mrb[0].mxu0
      %v1932 = vadd.f32 %v1771, %v1931
      %v1933 = vpop.f32.mrb[0].mxu0
      %v1934 = vpop.f32.mrb[0].mxu0
      %v1935 = vadd.f32 %v1771, %v1934
      %v1936 = vpop.f32.mrb[0].mxu0
      %1937 = vmatprep.mubr.bf16.mxu0 0
      %1938 = vmatmul.mubr.bf16.gmra.mrb[0].mxu0 %v1814
      %v1939 = vpop.f32.mrb[0].mxu0
      %v1940 = vadd.f32 %v1771, %v1939
      %v1941 = vpop.f32.mrb[0].mxu0
      %v1942 = vpop.f32.mrb[0].mxu0
      %v1943 = vadd.f32 %v1771, %v1942
      %v1944 = vpop.f32.mrb[0].mxu0
      %1945 = vmatprep.mubr.bf16.mxu0 0
      %1946 = vmatmul.mubr.bf16.gmra.mrb[0].mxu0 %v1817
      %v1947 = vpop.f32.mrb[0].mxu0
      %v1948 = vadd.f32 %v1771, %v1947
      %v1949 = vpop.f32.mrb[0].mxu0
      %v1950 = vpop.f32.mrb[0].mxu0
      %v1951 = vadd.f32 %v1771, %v1950
      %v1952 = vpop.f32.mrb[0].mxu0
      %1953 = vmatprep.mubr.bf16.mxu0 0
      %1954 = vmatmul.mubr.bf16.gmra.mrb[0].mxu0 %v1820
      %v1955 = vpop.f32.mrb[0].mxu0
      %v1956 = vadd.f32 %v1771, %v1955
      %v1957 = vpop.f32.mrb[0].mxu0
      %v1958 = vpop.f32.mrb[0].mxu0
      %v1959 = vadd.f32 %v1771, %v1958
      %v1960 = vpop.f32.mrb[0].mxu0
      %1961 = vmatprep.mubr.bf16.mxu0 0
      %1962 = vmatmul.mubr.bf16.gmra.mrb[0].mxu0 %v1823
      %v1963 = vpop.f32.mrb[0].mxu0
      %v1964 = vadd.f32 %v1771, %v1963
      %v1965 = vpop.f32.mrb[0].mxu0
      %v1966 = vpop.f32.mrb[0].mxu0
      %v1967 = vadd.f32 %v1771, %v1966
      %v1968 = vpop.f32.mrb[0].mxu0
      %1969 = vmatprep.mubr.bf16.mxu0 0
      %1970 = vmatmul.mubr.bf16.gmra.mrb[0].mxu0 %v1826
      %v1971 = vpop.f32.mrb[0].mxu0
      %v1972 = vadd.f32 %v1771, %v1971
      %v1973 = vpop.f32.mrb[0].mxu0
      %v1974 = vpop.f32.mrb[0].mxu0
      %v1975 = vadd.f32 %v1771, %v1974
      %v1976 = vpop.f32.mrb[0].mxu0
      %1977 = vmatprep.mubr.bf16.mxu0 0
      %1978 = vmatmul.mubr.bf16.gmra.mrb[0].mxu0 %v1829
      %v1979 = vpop.f32.mrb[0].mxu0
      %v1980 = vadd.f32 %v1771, %v1979
      %v1981 = vpop.f32.mrb[0].mxu0
      %v1982 = vpop.f32.mrb[0].mxu0
      %v1983 = vadd.f32 %v1771, %v1982
      %v1984 = vpop.f32.mrb[0].mxu0
      %1985 = vmatprep.mubr.bf16.mxu0 0
      %1986 = vmatmul.mubr.bf16.gmra.mrb[0].mxu0 %v1832
      %v1987 = vpop.f32.mrb[0].mxu0
      %v1988 = vadd.f32 %v1771, %v1987
      %v1989 = vpop.f32.mrb[0].mxu0
      %v1990 = vpop.f32.mrb[0].mxu0
      %v1991 = vadd.f32 %v1771, %v1990
      %v1992 = vpop.f32.mrb[0].mxu0
      %1993 = vmatprep.mubr.bf16.mxu0 0
      %1994 = vmatmul.mubr.bf16.gmra.mrb[0].mxu0 %v1835
      %v1995 = vpop.f32.mrb[0].mxu0
      %v1996 = vadd.f32 %v1771, %v1995
      %v1997 = vpop.f32.mrb[0].mxu0
      %v1998 = vpop.f32.mrb[0].mxu0
      %v1999 = vadd.f32 %v1771, %v1998
      %v2000 = vpop.f32.mrb[0].mxu0
      %2001 = vdwg.mxu0
      %v2002 = vmax.f32 %v1876, 0.0
      %v2003 = vmax.f32 %v1879, 0.0
      %v2004 = vmax.f32 %v1884, 0.0
      %v2005 = vmax.f32 %v1887, 0.0
      %v2006 = vmax.f32 %v1892, 0.0
      %v2007 = vmax.f32 %v1895, 0.0
      %v2008 = vmax.f32 %v1900, 0.0
      %v2009 = vmax.f32 %v1903, 0.0
      %v2010 = vmax.f32 %v1908, 0.0
      %v2011 = vmax.f32 %v1911, 0.0
      %v2012 = vmax.f32 %v1916, 0.0
      %v2013 = vmax.f32 %v1919, 0.0
      %v2014 = vmax.f32 %v1924, 0.0
      %v2015 = vmax.f32 %v1927, 0.0
      %v2016 = vmax.f32 %v1932, 0.0
      %v2017 = vmax.f32 %v1935, 0.0
      %v2018 = vmax.f32 %v1940, 0.0
      %v2019 = vmax.f32 %v1943, 0.0
      %v2020 = vmax.f32 %v1948, 0.0
      %v2021 = vmax.f32 %v1951, 0.0
      %v2022 = vmax.f32 %v1956, 0.0
      %v2023 = vmax.f32 %v1959, 0.0
      %v2024 = vmax.f32 %v1964, 0.0
      %v2025 = vmax.f32 %v1967, 0.0
      %v2026 = vmax.f32 %v1972, 0.0
      %v2027 = vmax.f32 %v1975, 0.0
      %v2028 = vmax.f32 %v1980, 0.0
      %v2029 = vmax.f32 %v1983, 0.0
      %v2030 = vmax.f32 %v1988, 0.0
      %v2031 = vmax.f32 %v1991, 0.0
      %v2032 = vmax.f32 %v1996, 0.0
      %v2033 = vmax.f32 %v1999, 0.0
      %s2034 = scalar_lea.vmem [#allocation3], 24
      %2035 = vst.msk [vmem:[%s2034 + $0x1] sm:$0xff] %vm313, %v2002
      %2036 = vst.msk [vmem:[%s2034 + $0x9] sm:$0xff] %vm313, %v2003
      %2037 = vst.msk [vmem:[%s2034 + $0x19] sm:$0xff] %vm313, %v2004
      %2038 = vst.msk [vmem:[%s2034 + $0x21] sm:$0xff] %vm313, %v2005
      %2039 = vst.msk [vmem:[%s2034 + $0x31] sm:$0xff] %vm313, %v2006
      %2040 = vst.msk [vmem:[%s2034 + $0x39] sm:$0xff] %vm313, %v2007
      %2041 = vst.msk [vmem:[%s2034 + $0x49] sm:$0xff] %vm313, %v2008
      %2042 = vst.msk [vmem:[%s2034 + $0x51] sm:$0xff] %vm313, %v2009
      %2043 = vst.msk [vmem:[%s2034 + $0x61] sm:$0xff] %vm313, %v2010
      %2044 = vst.msk [vmem:[%s2034 + $0x69] sm:$0xff] %vm313, %v2011
      %2045 = vst.msk [vmem:[%s2034 + $0x79] sm:$0xff] %vm313, %v2012
      %2046 = vst.msk [vmem:[%s2034 + $0x81] sm:$0xff] %vm313, %v2013
      %2047 = vst.msk [vmem:[%s2034 + $0x91] sm:$0xff] %vm313, %v2014
      %2048 = vst.msk [vmem:[%s2034 + $0x99] sm:$0xff] %vm313, %v2015
      %2049 = vst.msk [vmem:[%s2034 + $0xa9] sm:$0xff] %vm313, %v2016
      %2050 = vst.msk [vmem:[%s2034 + $0xb1] sm:$0xff] %vm313, %v2017
      %2051 = vst.msk [vmem:[%s2034 + $0xc1] sm:$0xff] %vm313, %v2018
      %2052 = vst.msk [vmem:[%s2034 + $0xc9] sm:$0xff] %vm313, %v2019
      %2053 = vst.msk [vmem:[%s2034 + $0xd9] sm:$0xff] %vm313, %v2020
      %2054 = vst.msk [vmem:[%s2034 + $0xe1] sm:$0xff] %vm313, %v2021
      %2055 = vst.msk [vmem:[%s2034 + $0xf1] sm:$0xff] %vm313, %v2022
      %2056 = vst.msk [vmem:[%s2034 + $0xf9] sm:$0xff] %vm313, %v2023
      %2057 = vst.msk [vmem:[%s2034 + $0x109] sm:$0xff] %vm313, %v2024
      %2058 = vst.msk [vmem:[%s2034 + $0x111] sm:$0xff] %vm313, %v2025
      %2059 = vst.msk [vmem:[%s2034 + $0x121] sm:$0xff] %vm313, %v2026
      %2060 = vst.msk [vmem:[%s2034 + $0x129] sm:$0xff] %vm313, %v2027
      %2061 = vst.msk [vmem:[%s2034 + $0x139] sm:$0xff] %vm313, %v2028
      %2062 = vst.msk [vmem:[%s2034 + $0x141] sm:$0xff] %vm313, %v2029
      %2063 = vst.msk [vmem:[%s2034 + $0x151] sm:$0xff] %vm313, %v2030
      %2064 = vst.msk [vmem:[%s2034 + $0x159] sm:$0xff] %vm313, %v2031
      %2065 = vst.msk [vmem:[%s2034 + $0x169] sm:$0xff] %vm313, %v2032
      %2066 = vst.msk [vmem:[%s2034 + $0x171] sm:$0xff] %vm313, %v2033
      %2067 = vst.msk [vmem:[#allocation3 + $0x1] sm:$0xff] %vm313, %v2004
      %2068 = vst.msk [vmem:[#allocation3 + $0x9] sm:$0xff] %vm313, %v2005
      %s2069 = scalar_lea.vmem [#allocation3], 408
      %2070 = vst.msk [vmem:[%s2069 + $0x1] sm:$0xff] %vm313, %v2030
      %2071 = vst.msk [vmem:[%s2069 + $0x9] sm:$0xff] %vm313, %v2031
      %v2072 = vld [vmem:[#allocation3 + $0x2] sm:$0x1]
      %v2073 = vld [vmem:[#allocation3 + $0x1a] sm:$0x1]
      %v2074 = vld [vmem:[#allocation3 + $0x32] sm:$0x1]
      %v2075 = vld [vmem:[#allocation3 + $0x4a] sm:$0x1]
      %v2076 = vld [vmem:[#allocation3 + $0x62] sm:$0x1]
      %v2077 = vld [vmem:[#allocation3 + $0x7a] sm:$0x1]
      %v2078 = vld [vmem:[#allocation3 + $0x92] sm:$0x1]
      %v2079 = vld [vmem:[#allocation3 + $0xaa] sm:$0x1]
      %v2080 = vld [vmem:[#allocation3 + $0xc2] sm:$0x1]
      %v2081 = vld [vmem:[#allocation3 + $0xda] sm:$0x1]
      %v2082 = vld [vmem:[#allocation3 + $0xf2] sm:$0x1]
      %v2083 = vld [vmem:[#allocation3 + $0x10a] sm:$0x1]
      %v2084 = vld [vmem:[#allocation3 + $0x122] sm:$0x1]
      %v2085 = vld [vmem:[#allocation3 + $0x13a] sm:$0x1]
      %v2086 = vld [vmem:[#allocation3 + $0x152] sm:$0x1]
      %v2087 = vld [vmem:[#allocation3 + $0x16a] sm:$0x1]
      %v2088 = vld [vmem:[#allocation3 + $0x182] sm:$0x1]
      %v2089 = vld [vmem:[#allocation3 + $0x19a] sm:$0x1]
      %2090 = vst.msk [vmem:[#allocation3] sm:$0x1] %vm369, %v2072
      %2091 = vst.msk [vmem:[#allocation3 + $0x18] sm:$0x1] %vm369, %v2073
      %2092 = vst.msk [vmem:[#allocation3 + $0x30] sm:$0x1] %vm369, %v2074
      %2093 = vst.msk [vmem:[#allocation3 + $0x48] sm:$0x1] %vm369, %v2075
      %2094 = vst.msk [vmem:[#allocation3 + $0x60] sm:$0x1] %vm369, %v2076
      %2095 = vst.msk [vmem:[#allocation3 + $0x78] sm:$0x1] %vm369, %v2077
      %2096 = vst.msk [vmem:[#allocation3 + $0x90] sm:$0x1] %vm369, %v2078
      %2097 = vst.msk [vmem:[#allocation3 + $0xa8] sm:$0x1] %vm369, %v2079
      %2098 = vst.msk [vmem:[#allocation3 + $0xc0] sm:$0x1] %vm369, %v2080
      %2099 = vst.msk [vmem:[#allocation3 + $0xd8] sm:$0x1] %vm369, %v2081
      %2100 = vst.msk [vmem:[#allocation3 + $0xf0] sm:$0x1] %vm369, %v2082
      %2101 = vst.msk [vmem:[#allocation3 + $0x108] sm:$0x1] %vm369, %v2083
      %2102 = vst.msk [vmem:[#allocation3 + $0x120] sm:$0x1] %vm369, %v2084
      %2103 = vst.msk [vmem:[#allocation3 + $0x138] sm:$0x1] %vm369, %v2085
      %2104 = vst.msk [vmem:[#allocation3 + $0x150] sm:$0x1] %vm369, %v2086
      %2105 = vst.msk [vmem:[#allocation3 + $0x168] sm:$0x1] %vm369, %v2087
      %2106 = vst.msk [vmem:[#allocation3 + $0x180] sm:$0x1] %vm369, %v2088
      %2107 = vst.msk [vmem:[#allocation3 + $0x198] sm:$0x1] %vm369, %v2089
      %v2108 = vld [vmem:[#allocation3 + $0xf] sm:$0x1]
      %v2109 = vld [vmem:[#allocation3 + $0x27] sm:$0x1]
      %v2110 = vld [vmem:[#allocation3 + $0x3f] sm:$0x1]
      %v2111 = vld [vmem:[#allocation3 + $0x57] sm:$0x1]
      %v2112 = vld [vmem:[#allocation3 + $0x6f] sm:$0x1]
      %v2113 = vld [vmem:[#allocation3 + $0x87] sm:$0x1]
      %v2114 = vld [vmem:[#allocation3 + $0x9f] sm:$0x1]
      %v2115 = vld [vmem:[#allocation3 + $0xb7] sm:$0x1]
      %v2116 = vld [vmem:[#allocation3 + $0xcf] sm:$0x1]
      %v2117 = vld [vmem:[#allocation3 + $0xe7] sm:$0x1]
      %v2118 = vld [vmem:[#allocation3 + $0xff] sm:$0x1]
      %v2119 = vld [vmem:[#allocation3 + $0x117] sm:$0x1]
      %v2120 = vld [vmem:[#allocation3 + $0x12f] sm:$0x1]
      %v2121 = vld [vmem:[#allocation3 + $0x147] sm:$0x1]
      %v2122 = vld [vmem:[#allocation3 + $0x15f] sm:$0x1]
      %v2123 = vld [vmem:[#allocation3 + $0x177] sm:$0x1]
      %v2124 = vld [vmem:[#allocation3 + $0x18f] sm:$0x1]
      %v2125 = vld [vmem:[#allocation3 + $0x1a7] sm:$0x1]
      %2126 = vst.msk [vmem:[#allocation3 + $0x11] sm:$0x1] %vm369, %v2108
      %2127 = vst.msk [vmem:[#allocation3 + $0x29] sm:$0x1] %vm369, %v2109
      %2128 = vst.msk [vmem:[#allocation3 + $0x41] sm:$0x1] %vm369, %v2110
      %2129 = vst.msk [vmem:[#allocation3 + $0x59] sm:$0x1] %vm369, %v2111
      %2130 = vst.msk [vmem:[#allocation3 + $0x71] sm:$0x1] %vm369, %v2112
      %2131 = vst.msk [vmem:[#allocation3 + $0x89] sm:$0x1] %vm369, %v2113
      %2132 = vst.msk [vmem:[#allocation3 + $0xa1] sm:$0x1] %vm369, %v2114
      %2133 = vst.msk [vmem:[#allocation3 + $0xb9] sm:$0x1] %vm369, %v2115
      %2134 = vst.msk [vmem:[#allocation3 + $0xd1] sm:$0x1] %vm369, %v2116
      %2135 = vst.msk [vmem:[#allocation3 + $0xe9] sm:$0x1] %vm369, %v2117
      %2136 = vst.msk [vmem:[#allocation3 + $0x101] sm:$0x1] %vm369, %v2118
      %2137 = vst.msk [vmem:[#allocation3 + $0x119] sm:$0x1] %vm369, %v2119
      %2138 = vst.msk [vmem:[#allocation3 + $0x131] sm:$0x1] %vm369, %v2120
      %2139 = vst.msk [vmem:[#allocation3 + $0x149] sm:$0x1] %vm369, %v2121
      %2140 = vst.msk [vmem:[#allocation3 + $0x161] sm:$0x1] %vm369, %v2122
      %2141 = vst.msk [vmem:[#allocation3 + $0x179] sm:$0x1] %vm369, %v2123
      %2142 = vst.msk [vmem:[#allocation3 + $0x191] sm:$0x1] %vm369, %v2124
      %2143 = vst.msk [vmem:[#allocation3 + $0x1a9] sm:$0x1] %vm369, %v2125
      %v2144 = vld [vmem:[#allocation3] sm:$0xff]
      %v2145 = vld [vmem:[#allocation3 + $0x8] sm:$0xff]
      %v2146 = vld [vmem:[#allocation3 + $0x10] sm:$0x3]
      %v2147 = vld [vmem:[#allocation3 + $0x18] sm:$0xff]
      %v2148 = vld [vmem:[#allocation3 + $0x20] sm:$0xff]
      %v2149 = vld [vmem:[#allocation3 + $0x28] sm:$0x3]
      %v2150 = vld [vmem:[#allocation3 + $0x30] sm:$0xff]
      %v2151 = vld [vmem:[#allocation3 + $0x38] sm:$0xff]
      %v2152 = vld [vmem:[#allocation3 + $0x40] sm:$0x3]
      %v2153 = vld [vmem:[#allocation3 + $0x48] sm:$0xff]
      %v2154 = vld [vmem:[#allocation3 + $0x50] sm:$0xff]
      %v2155 = vld [vmem:[#allocation3 + $0x58] sm:$0x3]
      %v2156 = vld [vmem:[#allocation3 + $0x60] sm:$0xff]
      %v2157 = vld [vmem:[#allocation3 + $0x68] sm:$0xff]
      %v2158 = vld [vmem:[#allocation3 + $0x70] sm:$0x3]
      %v2159 = vld [vmem:[#allocation3 + $0x78] sm:$0xff]
      %v2160 = vld [vmem:[#allocation3 + $0x80] sm:$0xff]
      %v2161 = vld [vmem:[#allocation3 + $0x88] sm:$0x3]
      %v2162 = vld [vmem:[#allocation3 + $0x90] sm:$0xff]
      %v2163 = vld [vmem:[#allocation3 + $0x98] sm:$0xff]
      %v2164 = vld [vmem:[#allocation3 + $0xa0] sm:$0x3]
      %v2165 = vld [vmem:[#allocation3 + $0xa8] sm:$0xff]
      %v2166 = vld [vmem:[#allocation3 + $0xb0] sm:$0xff]
      %v2167 = vld [vmem:[#allocation3 + $0xb8] sm:$0x3]
      %v2168 = vld [vmem:[#allocation3 + $0xc0] sm:$0xff]
      %v2169 = vld [vmem:[#allocation3 + $0xc8] sm:$0xff]
      %v2170 = vld [vmem:[#allocation3 + $0xd0] sm:$0x3]
      %v2171 = vld [vmem:[#allocation3 + $0xd8] sm:$0xff]
      %v2172 = vld [vmem:[#allocation3 + $0xe0] sm:$0xff]
      %v2173 = vld [vmem:[#allocation3 + $0xe8] sm:$0x3]
      %v2174 = vld [vmem:[#allocation3 + $0xf0] sm:$0xff]
      %v2175 = vld [vmem:[#allocation3 + $0xf8] sm:$0xff]
      %v2176 = vld [vmem:[#allocation3 + $0x100] sm:$0x3]
      %v2177 = vld [vmem:[#allocation3 + $0x108] sm:$0xff]
      %v2178 = vld [vmem:[#allocation3 + $0x110] sm:$0xff]
      %v2179 = vld [vmem:[#allocation3 + $0x118] sm:$0x3]
      %v2180 = vld [vmem:[#allocation3 + $0x120] sm:$0xff]
      %v2181 = vld [vmem:[#allocation3 + $0x128] sm:$0xff]
      %v2182 = vld [vmem:[#allocation3 + $0x130] sm:$0x3]
      %v2183 = vld [vmem:[#allocation3 + $0x138] sm:$0xff]
      %v2184 = vld [vmem:[#allocation3 + $0x140] sm:$0xff]
      %v2185 = vld [vmem:[#allocation3 + $0x148] sm:$0x3]
      %v2186 = vld [vmem:[#allocation3 + $0x150] sm:$0xff]
      %v2187 = vld [vmem:[#allocation3 + $0x158] sm:$0xff]
      %v2188 = vld [vmem:[#allocation3 + $0x160] sm:$0x3]
      %v2189 = vld [vmem:[#allocation3 + $0x168] sm:$0xff]
      %v2190 = vld [vmem:[#allocation3 + $0x170] sm:$0xff]
      %v2191 = vld [vmem:[#allocation3 + $0x178] sm:$0x3]
      %v2192 = vld [vmem:[#allocation3 + $0x180] sm:$0xff]
      %v2193 = vld [vmem:[#allocation3 + $0x188] sm:$0xff]
      %v2194 = vld [vmem:[#allocation3 + $0x190] sm:$0x3]
      %v2195 = vld [vmem:[#allocation3 + $0x198] sm:$0xff]
      %v2196 = vld [vmem:[#allocation3 + $0x1a0] sm:$0xff]
      %v2197 = vld [vmem:[#allocation3 + $0x1a8] sm:$0x3]
      %v2246 = vrot.slane %v2144, 1
      %v2247 = vrot.slane %v2145, 1
      %v2248 = vsel %vm526, %v2246, %v2247
      %v2249 = vrot.slane %v2146, 1
      %v2250 = vsel %vm526, %v2247, %v2249
      %v2251 = vrot.slane %v2147, 1
      %v2252 = vrot.slane %v2148, 1
      %v2253 = vsel %vm526, %v2251, %v2252
      %v2254 = vrot.slane %v2149, 1
      %v2255 = vsel %vm526, %v2252, %v2254
      %v2256 = vrot.slane %v2150, 1
      %v2257 = vrot.slane %v2151, 1
      %v2258 = vsel %vm526, %v2256, %v2257
      %v2259 = vrot.slane %v2152, 1
      %v2260 = vsel %vm526, %v2257, %v2259
      %v2261 = vrot.slane %v2153, 1
      %v2262 = vrot.slane %v2154, 1
      %v2263 = vsel %vm526, %v2261, %v2262
      %v2264 = vrot.slane %v2155, 1
      %v2265 = vsel %vm526, %v2262, %v2264
      %v2266 = vrot.slane %v2156, 1
      %v2267 = vrot.slane %v2157, 1
      %v2268 = vsel %vm526, %v2266, %v2267
      %v2269 = vrot.slane %v2158, 1
      %v2270 = vsel %vm526, %v2267, %v2269
      %v2271 = vrot.slane %v2159, 1
      %v2272 = vrot.slane %v2160, 1
      %v2273 = vsel %vm526, %v2271, %v2272
      %v2274 = vrot.slane %v2161, 1
      %v2275 = vsel %vm526, %v2272, %v2274
      %v2276 = vrot.slane %v2162, 1
      %v2277 = vrot.slane %v2163, 1
      %v2278 = vsel %vm526, %v2276, %v2277
      %v2279 = vrot.slane %v2164, 1
      %v2280 = vsel %vm526, %v2277, %v2279
      %v2281 = vrot.slane %v2165, 1
      %v2282 = vrot.slane %v2166, 1
      %v2283 = vsel %vm526, %v2281, %v2282
      %v2284 = vrot.slane %v2167, 1
      %v2285 = vsel %vm526, %v2282, %v2284
      %v2286 = vrot.slane %v2168, 1
      %v2287 = vrot.slane %v2169, 1
      %v2288 = vsel %vm526, %v2286, %v2287
      %v2289 = vrot.slane %v2170, 1
      %v2290 = vsel %vm526, %v2287, %v2289
      %v2291 = vrot.slane %v2171, 1
      %v2292 = vrot.slane %v2172, 1
      %v2293 = vsel %vm526, %v2291, %v2292
      %v2294 = vrot.slane %v2173, 1
      %v2295 = vsel %vm526, %v2292, %v2294
      %v2296 = vrot.slane %v2174, 1
      %v2297 = vrot.slane %v2175, 1
      %v2298 = vsel %vm526, %v2296, %v2297
      %v2299 = vrot.slane %v2176, 1
      %v2300 = vsel %vm526, %v2297, %v2299
      %v2301 = vrot.slane %v2177, 1
      %v2302 = vrot.slane %v2178, 1
      %v2303 = vsel %vm526, %v2301, %v2302
      %v2304 = vrot.slane %v2179, 1
      %v2305 = vsel %vm526, %v2302, %v2304
      %v2306 = vrot.slane %v2180, 1
      %v2307 = vrot.slane %v2181, 1
      %v2308 = vsel %vm526, %v2306, %v2307
      %v2309 = vrot.slane %v2182, 1
      %v2310 = vsel %vm526, %v2307, %v2309
      %v2311 = vrot.slane %v2183, 1
      %v2312 = vrot.slane %v2184, 1
      %v2313 = vsel %vm526, %v2311, %v2312
      %v2314 = vrot.slane %v2185, 1
      %v2315 = vsel %vm526, %v2312, %v2314
      %v2316 = vrot.slane %v2186, 1
      %v2317 = vrot.slane %v2187, 1
      %v2318 = vsel %vm526, %v2316, %v2317
      %v2319 = vrot.slane %v2188, 1
      %v2320 = vsel %vm526, %v2317, %v2319
      %v2321 = vrot.slane %v2189, 1
      %v2322 = vrot.slane %v2190, 1
      %v2323 = vsel %vm526, %v2321, %v2322
      %v2324 = vrot.slane %v2191, 1
      %v2325 = vsel %vm526, %v2322, %v2324
      %2326 = vrot.lane.b32.xlu0 %v2248, 4
      %v2327 = vpop.permute.xlu0 %2326
      %2328 = vrot.lane.b32.xlu0 %v2250, 4
      %v2329 = vpop.permute.xlu0 %2328
      %2330 = vrot.lane.b32.xlu0 %v2253, 4
      %v2331 = vpop.permute.xlu0 %2330
      %2332 = vrot.lane.b32.xlu0 %v2255, 4
      %v2333 = vpop.permute.xlu0 %2332
      %2334 = vrot.lane.b32.xlu0 %v2258, 4
      %v2335 = vpop.permute.xlu0 %2334
      %2336 = vrot.lane.b32.xlu0 %v2260, 4
      %v2337 = vpop.permute.xlu0 %2336
      %2338 = vrot.lane.b32.xlu0 %v2263, 4
      %v2339 = vpop.permute.xlu0 %2338
      %2340 = vrot.lane.b32.xlu0 %v2265, 4
      %v2341 = vpop.permute.xlu0 %2340
      %2342 = vrot.lane.b32.xlu0 %v2268, 4
      %v2343 = vpop.permute.xlu0 %2342
      %2344 = vrot.lane.b32.xlu0 %v2270, 4
      %v2345 = vpop.permute.xlu0 %2344
      %2346 = vrot.lane.b32.xlu0 %v2273, 4
      %v2347 = vpop.permute.xlu0 %2346
      %2348 = vrot.lane.b32.xlu0 %v2275, 4
      %v2349 = vpop.permute.xlu0 %2348
      %2350 = vrot.lane.b32.xlu0 %v2278, 4
      %v2351 = vpop.permute.xlu0 %2350
      %2352 = vrot.lane.b32.xlu0 %v2280, 4
      %v2353 = vpop.permute.xlu0 %2352
      %2354 = vrot.lane.b32.xlu0 %v2283, 4
      %v2355 = vpop.permute.xlu0 %2354
      %2356 = vrot.lane.b32.xlu0 %v2285, 4
      %v2357 = vpop.permute.xlu0 %2356
      %2358 = vrot.lane.b32.xlu0 %v2288, 4
      %v2359 = vpop.permute.xlu0 %2358
      %2360 = vrot.lane.b32.xlu0 %v2290, 4
      %v2361 = vpop.permute.xlu0 %2360
      %2362 = vrot.lane.b32.xlu0 %v2293, 4
      %v2363 = vpop.permute.xlu0 %2362
      %2364 = vrot.lane.b32.xlu0 %v2295, 4
      %v2365 = vpop.permute.xlu0 %2364
      %2366 = vrot.lane.b32.xlu0 %v2298, 4
      %v2367 = vpop.permute.xlu0 %2366
      %2368 = vrot.lane.b32.xlu0 %v2300, 4
      %v2369 = vpop.permute.xlu0 %2368
      %2370 = vrot.lane.b32.xlu0 %v2303, 4
      %v2371 = vpop.permute.xlu0 %2370
      %2372 = vrot.lane.b32.xlu0 %v2305, 4
      %v2373 = vpop.permute.xlu0 %2372
      %2374 = vrot.lane.b32.xlu0 %v2308, 4
      %v2375 = vpop.permute.xlu0 %2374
      %2376 = vrot.lane.b32.xlu0 %v2310, 4
      %v2377 = vpop.permute.xlu0 %2376
      %2378 = vrot.lane.b32.xlu0 %v2313, 4
      %v2379 = vpop.permute.xlu0 %2378
      %2380 = vrot.lane.b32.xlu0 %v2315, 4
      %v2381 = vpop.permute.xlu0 %2380
      %2382 = vrot.lane.b32.xlu0 %v2318, 4
      %v2383 = vpop.permute.xlu0 %2382
      %2384 = vrot.lane.b32.xlu0 %v2320, 4
      %v2385 = vpop.permute.xlu0 %2384
      %2386 = vrot.lane.b32.xlu0 %v2323, 4
      %v2387 = vpop.permute.xlu0 %2386
      %2388 = vrot.lane.b32.xlu0 %v2325, 4
      %v2389 = vpop.permute.xlu0 %2388
      %v2422 = vrot.slane %v2144, 2
      %v2423 = vrot.slane %v2145, 2
      %v2424 = vsel %vm703, %v2422, %v2423
      %v2425 = vrot.slane %v2146, 2
      %v2426 = vsel %vm703, %v2423, %v2425
      %v2427 = vrot.slane %v2147, 2
      %v2428 = vrot.slane %v2148, 2
      %v2429 = vsel %vm703, %v2427, %v2428
      %v2430 = vrot.slane %v2149, 2
      %v2431 = vsel %vm703, %v2428, %v2430
      %v2432 = vrot.slane %v2150, 2
      %v2433 = vrot.slane %v2151, 2
      %v2434 = vsel %vm703, %v2432, %v2433
      %v2435 = vrot.slane %v2152, 2
      %v2436 = vsel %vm703, %v2433, %v2435
      %v2437 = vrot.slane %v2153, 2
      %v2438 = vrot.slane %v2154, 2
      %v2439 = vsel %vm703, %v2437, %v2438
      %v2440 = vrot.slane %v2155, 2
      %v2441 = vsel %vm703, %v2438, %v2440
      %v2442 = vrot.slane %v2156, 2
      %v2443 = vrot.slane %v2157, 2
      %v2444 = vsel %vm703, %v2442, %v2443
      %v2445 = vrot.slane %v2158, 2
      %v2446 = vsel %vm703, %v2443, %v2445
      %v2447 = vrot.slane %v2159, 2
      %v2448 = vrot.slane %v2160, 2
      %v2449 = vsel %vm703, %v2447, %v2448
      %v2450 = vrot.slane %v2161, 2
      %v2451 = vsel %vm703, %v2448, %v2450
      %v2452 = vrot.slane %v2162, 2
      %v2453 = vrot.slane %v2163, 2
      %v2454 = vsel %vm703, %v2452, %v2453
      %v2455 = vrot.slane %v2164, 2
      %v2456 = vsel %vm703, %v2453, %v2455
      %v2457 = vrot.slane %v2165, 2
      %v2458 = vrot.slane %v2166, 2
      %v2459 = vsel %vm703, %v2457, %v2458
      %v2460 = vrot.slane %v2167, 2
      %v2461 = vsel %vm703, %v2458, %v2460
      %v2462 = vrot.slane %v2168, 2
      %v2463 = vrot.slane %v2169, 2
      %v2464 = vsel %vm703, %v2462, %v2463
      %v2465 = vrot.slane %v2170, 2
      %v2466 = vsel %vm703, %v2463, %v2465
      %v2467 = vrot.slane %v2171, 2
      %v2468 = vrot.slane %v2172, 2
      %v2469 = vsel %vm703, %v2467, %v2468
      %v2470 = vrot.slane %v2173, 2
      %v2471 = vsel %vm703, %v2468, %v2470
      %v2472 = vrot.slane %v2174, 2
      %v2473 = vrot.slane %v2175, 2
      %v2474 = vsel %vm703, %v2472, %v2473
      %v2475 = vrot.slane %v2176, 2
      %v2476 = vsel %vm703, %v2473, %v2475
      %v2477 = vrot.slane %v2177, 2
      %v2478 = vrot.slane %v2178, 2
      %v2479 = vsel %vm703, %v2477, %v2478
      %v2480 = vrot.slane %v2179, 2
      %v2481 = vsel %vm703, %v2478, %v2480
      %v2482 = vrot.slane %v2180, 2
      %v2483 = vrot.slane %v2181, 2
      %v2484 = vsel %vm703, %v2482, %v2483
      %v2485 = vrot.slane %v2182, 2
      %v2486 = vsel %vm703, %v2483, %v2485
      %v2487 = vrot.slane %v2183, 2
      %v2488 = vrot.slane %v2184, 2
      %v2489 = vsel %vm703, %v2487, %v2488
      %v2490 = vrot.slane %v2185, 2
      %v2491 = vsel %vm703, %v2488, %v2490
      %v2492 = vrot.slane %v2186, 2
      %v2493 = vrot.slane %v2187, 2
      %v2494 = vsel %vm703, %v2492, %v2493
      %v2495 = vrot.slane %v2188, 2
      %v2496 = vsel %vm703, %v2493, %v2495
      %v2497 = vrot.slane %v2189, 2
      %v2498 = vrot.slane %v2190, 2
      %v2499 = vsel %vm703, %v2497, %v2498
      %v2500 = vrot.slane %v2191, 2
      %v2501 = vsel %vm703, %v2498, %v2500
      %2502 = vrot.lane.b32.xlu0 %v2424, 8
      %v2503 = vpop.permute.xlu0 %2502
      %2504 = vrot.lane.b32.xlu0 %v2426, 8
      %v2505 = vpop.permute.xlu0 %2504
      %2506 = vrot.lane.b32.xlu0 %v2429, 8
      %v2507 = vpop.permute.xlu0 %2506
      %2508 = vrot.lane.b32.xlu0 %v2431, 8
      %v2509 = vpop.permute.xlu0 %2508
      %2510 = vrot.lane.b32.xlu0 %v2434, 8
      %v2511 = vpop.permute.xlu0 %2510
      %2512 = vrot.lane.b32.xlu0 %v2436, 8
      %v2513 = vpop.permute.xlu0 %2512
      %2514 = vrot.lane.b32.xlu0 %v2439, 8
      %v2515 = vpop.permute.xlu0 %2514
      %2516 = vrot.lane.b32.xlu0 %v2441, 8
      %v2517 = vpop.permute.xlu0 %2516
      %2518 = vrot.lane.b32.xlu0 %v2444, 8
      %v2519 = vpop.permute.xlu0 %2518
      %2520 = vrot.lane.b32.xlu0 %v2446, 8
      %v2521 = vpop.permute.xlu0 %2520
      %2522 = vrot.lane.b32.xlu0 %v2449, 8
      %v2523 = vpop.permute.xlu0 %2522
      %2524 = vrot.lane.b32.xlu0 %v2451, 8
      %v2525 = vpop.permute.xlu0 %2524
      %2526 = vrot.lane.b32.xlu0 %v2454, 8
      %v2527 = vpop.permute.xlu0 %2526
      %2528 = vrot.lane.b32.xlu0 %v2456, 8
      %v2529 = vpop.permute.xlu0 %2528
      %2530 = vrot.lane.b32.xlu0 %v2459, 8
      %v2531 = vpop.permute.xlu0 %2530
      %2532 = vrot.lane.b32.xlu0 %v2461, 8
      %v2533 = vpop.permute.xlu0 %2532
      %2534 = vrot.lane.b32.xlu0 %v2464, 8
      %v2535 = vpop.permute.xlu0 %2534
      %2536 = vrot.lane.b32.xlu0 %v2466, 8
      %v2537 = vpop.permute.xlu0 %2536
      %2538 = vrot.lane.b32.xlu0 %v2469, 8
      %v2539 = vpop.permute.xlu0 %2538
      %2540 = vrot.lane.b32.xlu0 %v2471, 8
      %v2541 = vpop.permute.xlu0 %2540
      %2542 = vrot.lane.b32.xlu0 %v2474, 8
      %v2543 = vpop.permute.xlu0 %2542
      %2544 = vrot.lane.b32.xlu0 %v2476, 8
      %v2545 = vpop.permute.xlu0 %2544
      %2546 = vrot.lane.b32.xlu0 %v2479, 8
      %v2547 = vpop.permute.xlu0 %2546
      %2548 = vrot.lane.b32.xlu0 %v2481, 8
      %v2549 = vpop.permute.xlu0 %2548
      %2550 = vrot.lane.b32.xlu0 %v2484, 8
      %v2551 = vpop.permute.xlu0 %2550
      %2552 = vrot.lane.b32.xlu0 %v2486, 8
      %v2553 = vpop.permute.xlu0 %2552
      %2554 = vrot.lane.b32.xlu0 %v2489, 8
      %v2555 = vpop.permute.xlu0 %2554
      %2556 = vrot.lane.b32.xlu0 %v2491, 8
      %v2557 = vpop.permute.xlu0 %2556
      %2558 = vrot.lane.b32.xlu0 %v2494, 8
      %v2559 = vpop.permute.xlu0 %2558
      %2560 = vrot.lane.b32.xlu0 %v2496, 8
      %v2561 = vpop.permute.xlu0 %2560
      %2562 = vrot.lane.b32.xlu0 %v2499, 8
      %v2563 = vpop.permute.xlu0 %2562
      %2564 = vrot.lane.b32.xlu0 %v2501, 8
      %v2565 = vpop.permute.xlu0 %2564
      %2600 = vrot.lane.b32.xlu0 %v2147, 12
      %v2601 = vpop.permute.xlu0 %2600
      %2602 = vrot.lane.b32.xlu0 %v2148, 12
      %v2603 = vpop.permute.xlu0 %2602
      %2604 = vrot.lane.b32.xlu0 %v2150, 12
      %v2605 = vpop.permute.xlu0 %2604
      %2606 = vrot.lane.b32.xlu0 %v2151, 12
      %v2607 = vpop.permute.xlu0 %2606
      %2608 = vrot.lane.b32.xlu0 %v2153, 12
      %v2609 = vpop.permute.xlu0 %2608
      %2610 = vrot.lane.b32.xlu0 %v2154, 12
      %v2611 = vpop.permute.xlu0 %2610
      %2612 = vrot.lane.b32.xlu0 %v2156, 12
      %v2613 = vpop.permute.xlu0 %2612
      %2614 = vrot.lane.b32.xlu0 %v2157, 12
      %v2615 = vpop.permute.xlu0 %2614
      %2616 = vrot.lane.b32.xlu0 %v2159, 12
      %v2617 = vpop.permute.xlu0 %2616
      %2618 = vrot.lane.b32.xlu0 %v2160, 12
      %v2619 = vpop.permute.xlu0 %2618
      %2620 = vrot.lane.b32.xlu0 %v2162, 12
      %v2621 = vpop.permute.xlu0 %2620
      %2622 = vrot.lane.b32.xlu0 %v2163, 12
      %v2623 = vpop.permute.xlu0 %2622
      %2624 = vrot.lane.b32.xlu0 %v2165, 12
      %v2625 = vpop.permute.xlu0 %2624
      %2626 = vrot.lane.b32.xlu0 %v2166, 12
      %v2627 = vpop.permute.xlu0 %2626
      %2628 = vrot.lane.b32.xlu0 %v2168, 12
      %v2629 = vpop.permute.xlu0 %2628
      %2630 = vrot.lane.b32.xlu0 %v2169, 12
      %v2631 = vpop.permute.xlu0 %2630
      %2632 = vrot.lane.b32.xlu0 %v2171, 12
      %v2633 = vpop.permute.xlu0 %2632
      %2634 = vrot.lane.b32.xlu0 %v2172, 12
      %v2635 = vpop.permute.xlu0 %2634
      %2636 = vrot.lane.b32.xlu0 %v2174, 12
      %v2637 = vpop.permute.xlu0 %2636
      %2638 = vrot.lane.b32.xlu0 %v2175, 12
      %v2639 = vpop.permute.xlu0 %2638
      %2640 = vrot.lane.b32.xlu0 %v2177, 12
      %v2641 = vpop.permute.xlu0 %2640
      %2642 = vrot.lane.b32.xlu0 %v2178, 12
      %v2643 = vpop.permute.xlu0 %2642
      %2644 = vrot.lane.b32.xlu0 %v2180, 12
      %v2645 = vpop.permute.xlu0 %2644
      %2646 = vrot.lane.b32.xlu0 %v2181, 12
      %v2647 = vpop.permute.xlu0 %2646
      %2648 = vrot.lane.b32.xlu0 %v2183, 12
      %v2649 = vpop.permute.xlu0 %2648
      %2650 = vrot.lane.b32.xlu0 %v2184, 12
      %v2651 = vpop.permute.xlu0 %2650
      %2652 = vrot.lane.b32.xlu0 %v2186, 12
      %v2653 = vpop.permute.xlu0 %2652
      %2654 = vrot.lane.b32.xlu0 %v2187, 12
      %v2655 = vpop.permute.xlu0 %2654
      %2656 = vrot.lane.b32.xlu0 %v2189, 12
      %v2657 = vpop.permute.xlu0 %2656
      %2658 = vrot.lane.b32.xlu0 %v2190, 12
      %v2659 = vpop.permute.xlu0 %2658
      %2660 = vrot.lane.b32.xlu0 %v2192, 12
      %v2661 = vpop.permute.xlu0 %2660
      %2662 = vrot.lane.b32.xlu0 %v2193, 12
      %v2663 = vpop.permute.xlu0 %2662
      %v2697 = vrot.slane %v2192, 1
      %v2698 = vrot.slane %v2193, 1
      %v2699 = vsel %vm526, %v2697, %v2698
      %v2700 = vrot.slane %v2194, 1
      %v2701 = vsel %vm526, %v2698, %v2700
      %2702 = vrot.lane.b32.xlu0 %v2253, 16
      %v2703 = vpop.permute.xlu0 %2702
      %2704 = vrot.lane.b32.xlu0 %v2255, 16
      %v2705 = vpop.permute.xlu0 %2704
      %2706 = vrot.lane.b32.xlu0 %v2258, 16
      %v2707 = vpop.permute.xlu0 %2706
      %2708 = vrot.lane.b32.xlu0 %v2260, 16
      %v2709 = vpop.permute.xlu0 %2708
      %2710 = vrot.lane.b32.xlu0 %v2263, 16
      %v2711 = vpop.permute.xlu0 %2710
      %2712 = vrot.lane.b32.xlu0 %v2265, 16
      %v2713 = vpop.permute.xlu0 %2712
      %2714 = vrot.lane.b32.xlu0 %v2268, 16
      %v2715 = vpop.permute.xlu0 %2714
      %2716 = vrot.lane.b32.xlu0 %v2270, 16
      %v2717 = vpop.permute.xlu0 %2716
      %2718 = vrot.lane.b32.xlu0 %v2273, 16
      %v2719 = vpop.permute.xlu0 %2718
      %2720 = vrot.lane.b32.xlu0 %v2275, 16
      %v2721 = vpop.permute.xlu0 %2720
      %2722 = vrot.lane.b32.xlu0 %v2278, 16
      %v2723 = vpop.permute.xlu0 %2722
      %2724 = vrot.lane.b32.xlu0 %v2280, 16
      %v2725 = vpop.permute.xlu0 %2724
      %2726 = vrot.lane.b32.xlu0 %v2283, 16
      %v2727 = vpop.permute.xlu0 %2726
      %2728 = vrot.lane.b32.xlu0 %v2285, 16
      %v2729 = vpop.permute.xlu0 %2728
      %2730 = vrot.lane.b32.xlu0 %v2288, 16
      %v2731 = vpop.permute.xlu0 %2730
      %2732 = vrot.lane.b32.xlu0 %v2290, 16
      %v2733 = vpop.permute.xlu0 %2732
      %2734 = vrot.lane.b32.xlu0 %v2293, 16
      %v2735 = vpop.permute.xlu0 %2734
      %2736 = vrot.lane.b32.xlu0 %v2295, 16
      %v2737 = vpop.permute.xlu0 %2736
      %2738 = vrot.lane.b32.xlu0 %v2298, 16
      %v2739 = vpop.permute.xlu0 %2738
      %2740 = vrot.lane.b32.xlu0 %v2300, 16
      %v2741 = vpop.permute.xlu0 %2740
      %2742 = vrot.lane.b32.xlu0 %v2303, 16
      %v2743 = vpop.permute.xlu0 %2742
      %2744 = vrot.lane.b32.xlu0 %v2305, 16
      %v2745 = vpop.permute.xlu0 %2744
      %2746 = vrot.lane.b32.xlu0 %v2308, 16
      %v2747 = vpop.permute.xlu0 %2746
      %2748 = vrot.lane.b32.xlu0 %v2310, 16
      %v2749 = vpop.permute.xlu0 %2748
      %2750 = vrot.lane.b32.xlu0 %v2313, 16
      %v2751 = vpop.permute.xlu0 %2750
      %2752 = vrot.lane.b32.xlu0 %v2315, 16
      %v2753 = vpop.permute.xlu0 %2752
      %2754 = vrot.lane.b32.xlu0 %v2318, 16
      %v2755 = vpop.permute.xlu0 %2754
      %2756 = vrot.lane.b32.xlu0 %v2320, 16
      %v2757 = vpop.permute.xlu0 %2756
      %2758 = vrot.lane.b32.xlu0 %v2323, 16
      %v2759 = vpop.permute.xlu0 %2758
      %2760 = vrot.lane.b32.xlu0 %v2325, 16
      %v2761 = vpop.permute.xlu0 %2760
      %2762 = vrot.lane.b32.xlu0 %v2699, 16
      %v2763 = vpop.permute.xlu0 %2762
      %2764 = vrot.lane.b32.xlu0 %v2701, 16
      %v2765 = vpop.permute.xlu0 %2764
      %v2798 = vrot.slane %v2192, 2
      %v2799 = vrot.slane %v2193, 2
      %v2800 = vsel %vm703, %v2798, %v2799
      %v2801 = vrot.slane %v2194, 2
      %v2802 = vsel %vm703, %v2799, %v2801
      %2803 = vrot.lane.b32.xlu0 %v2429, 20
      %v2804 = vpop.permute.xlu0 %2803
      %2805 = vrot.lane.b32.xlu0 %v2431, 20
      %v2806 = vpop.permute.xlu0 %2805
      %2807 = vrot.lane.b32.xlu0 %v2434, 20
      %v2808 = vpop.permute.xlu0 %2807
      %2809 = vrot.lane.b32.xlu0 %v2436, 20
      %v2810 = vpop.permute.xlu0 %2809
      %2811 = vrot.lane.b32.xlu0 %v2439, 20
      %v2812 = vpop.permute.xlu0 %2811
      %2813 = vrot.lane.b32.xlu0 %v2441, 20
      %v2814 = vpop.permute.xlu0 %2813
      %2815 = vrot.lane.b32.xlu0 %v2444, 20
      %v2816 = vpop.permute.xlu0 %2815
      %2817 = vrot.lane.b32.xlu0 %v2446, 20
      %v2818 = vpop.permute.xlu0 %2817
      %2819 = vrot.lane.b32.xlu0 %v2449, 20
      %v2820 = vpop.permute.xlu0 %2819
      %2821 = vrot.lane.b32.xlu0 %v2451, 20
      %v2822 = vpop.permute.xlu0 %2821
      %2823 = vrot.lane.b32.xlu0 %v2454, 20
      %v2824 = vpop.permute.xlu0 %2823
      %2825 = vrot.lane.b32.xlu0 %v2456, 20
      %v2826 = vpop.permute.xlu0 %2825
      %2827 = vrot.lane.b32.xlu0 %v2459, 20
      %v2828 = vpop.permute.xlu0 %2827
      %2829 = vrot.lane.b32.xlu0 %v2461, 20
      %v2830 = vpop.permute.xlu0 %2829
      %2831 = vrot.lane.b32.xlu0 %v2464, 20
      %v2832 = vpop.permute.xlu0 %2831
      %2833 = vrot.lane.b32.xlu0 %v2466, 20
      %v2834 = vpop.permute.xlu0 %2833
      %2835 = vrot.lane.b32.xlu0 %v2469, 20
      %v2836 = vpop.permute.xlu0 %2835
      %2837 = vrot.lane.b32.xlu0 %v2471, 20
      %v2838 = vpop.permute.xlu0 %2837
      %2839 = vrot.lane.b32.xlu0 %v2474, 20
      %v2840 = vpop.permute.xlu0 %2839
      %2841 = vrot.lane.b32.xlu0 %v2476, 20
      %v2842 = vpop.permute.xlu0 %2841
      %2843 = vrot.lane.b32.xlu0 %v2479, 20
      %v2844 = vpop.permute.xlu0 %2843
      %2845 = vrot.lane.b32.xlu0 %v2481, 20
      %v2846 = vpop.permute.xlu0 %2845
      %2847 = vrot.lane.b32.xlu0 %v2484, 20
      %v2848 = vpop.permute.xlu0 %2847
      %2849 = vrot.lane.b32.xlu0 %v2486, 20
      %v2850 = vpop.permute.xlu0 %2849
      %2851 = vrot.lane.b32.xlu0 %v2489, 20
      %v2852 = vpop.permute.xlu0 %2851
      %2853 = vrot.lane.b32.xlu0 %v2491, 20
      %v2854 = vpop.permute.xlu0 %2853
      %2855 = vrot.lane.b32.xlu0 %v2494, 20
      %v2856 = vpop.permute.xlu0 %2855
      %2857 = vrot.lane.b32.xlu0 %v2496, 20
      %v2858 = vpop.permute.xlu0 %2857
      %2859 = vrot.lane.b32.xlu0 %v2499, 20
      %v2860 = vpop.permute.xlu0 %2859
      %2861 = vrot.lane.b32.xlu0 %v2501, 20
      %v2862 = vpop.permute.xlu0 %2861
      %2863 = vrot.lane.b32.xlu0 %v2800, 20
      %v2864 = vpop.permute.xlu0 %2863
      %2865 = vrot.lane.b32.xlu0 %v2802, 20
      %v2866 = vpop.permute.xlu0 %2865
      %2901 = vrot.lane.b32.xlu0 %v2150, 24
      %v2902 = vpop.permute.xlu0 %2901
      %2903 = vrot.lane.b32.xlu0 %v2151, 24
      %v2904 = vpop.permute.xlu0 %2903
      %2905 = vrot.lane.b32.xlu0 %v2153, 24
      %v2906 = vpop.permute.xlu0 %2905
      %2907 = vrot.lane.b32.xlu0 %v2154, 24
      %v2908 = vpop.permute.xlu0 %2907
      %2909 = vrot.lane.b32.xlu0 %v2156, 24
      %v2910 = vpop.permute.xlu0 %2909
      %2911 = vrot.lane.b32.xlu0 %v2157, 24
      %v2912 = vpop.permute.xlu0 %2911
      %2913 = vrot.lane.b32.xlu0 %v2159, 24
      %v2914 = vpop.permute.xlu0 %2913
      %2915 = vrot.lane.b32.xlu0 %v2160, 24
      %v2916 = vpop.permute.xlu0 %2915
      %2917 = vrot.lane.b32.xlu0 %v2162, 24
      %v2918 = vpop.permute.xlu0 %2917
      %2919 = vrot.lane.b32.xlu0 %v2163, 24
      %v2920 = vpop.permute.xlu0 %2919
      %2921 = vrot.lane.b32.xlu0 %v2165, 24
      %v2922 = vpop.permute.xlu0 %2921
      %2923 = vrot.lane.b32.xlu0 %v2166, 24
      %v2924 = vpop.permute.xlu0 %2923
      %2925 = vrot.lane.b32.xlu0 %v2168, 24
      %v2926 = vpop.permute.xlu0 %2925
      %2927 = vrot.lane.b32.xlu0 %v2169, 24
      %v2928 = vpop.permute.xlu0 %2927
      %2929 = vrot.lane.b32.xlu0 %v2171, 24
      %v2930 = vpop.permute.xlu0 %2929
      %2931 = vrot.lane.b32.xlu0 %v2172, 24
      %v2932 = vpop.permute.xlu0 %2931
      %2933 = vrot.lane.b32.xlu0 %v2174, 24
      %v2934 = vpop.permute.xlu0 %2933
      %2935 = vrot.lane.b32.xlu0 %v2175, 24
      %v2936 = vpop.permute.xlu0 %2935
      %2937 = vrot.lane.b32.xlu0 %v2177, 24
      %v2938 = vpop.permute.xlu0 %2937
      %2939 = vrot.lane.b32.xlu0 %v2178, 24
      %v2940 = vpop.permute.xlu0 %2939
      %2941 = vrot.lane.b32.xlu0 %v2180, 24
      %v2942 = vpop.permute.xlu0 %2941
      %2943 = vrot.lane.b32.xlu0 %v2181, 24
      %v2944 = vpop.permute.xlu0 %2943
      %2945 = vrot.lane.b32.xlu0 %v2183, 24
      %v2946 = vpop.permute.xlu0 %2945
      %2947 = vrot.lane.b32.xlu0 %v2184, 24
      %v2948 = vpop.permute.xlu0 %2947
      %2949 = vrot.lane.b32.xlu0 %v2186, 24
      %v2950 = vpop.permute.xlu0 %2949
      %2951 = vrot.lane.b32.xlu0 %v2187, 24
      %v2952 = vpop.permute.xlu0 %2951
      %2953 = vrot.lane.b32.xlu0 %v2189, 24
      %v2954 = vpop.permute.xlu0 %2953
      %2955 = vrot.lane.b32.xlu0 %v2190, 24
      %v2956 = vpop.permute.xlu0 %2955
      %2957 = vrot.lane.b32.xlu0 %v2192, 24
      %v2958 = vpop.permute.xlu0 %2957
      %2959 = vrot.lane.b32.xlu0 %v2193, 24
      %v2960 = vpop.permute.xlu0 %2959
      %2961 = vrot.lane.b32.xlu0 %v2195, 24
      %v2962 = vpop.permute.xlu0 %2961
      %2963 = vrot.lane.b32.xlu0 %v2196, 24
      %v2964 = vpop.permute.xlu0 %2963
      %v2998 = vrot.slane %v2195, 1
      %v2999 = vrot.slane %v2196, 1
      %v3000 = vsel %vm526, %v2998, %v2999
      %v3001 = vrot.slane %v2197, 1
      %v3002 = vsel %vm526, %v2999, %v3001
      %3003 = vrot.lane.b32.xlu0 %v2258, 28
      %v3004 = vpop.permute.xlu0 %3003
      %3005 = vrot.lane.b32.xlu0 %v2260, 28
      %v3006 = vpop.permute.xlu0 %3005
      %3007 = vrot.lane.b32.xlu0 %v2263, 28
      %v3008 = vpop.permute.xlu0 %3007
      %3009 = vrot.lane.b32.xlu0 %v2265, 28
      %v3010 = vpop.permute.xlu0 %3009
      %3011 = vrot.lane.b32.xlu0 %v2268, 28
      %v3012 = vpop.permute.xlu0 %3011
      %3013 = vrot.lane.b32.xlu0 %v2270, 28
      %v3014 = vpop.permute.xlu0 %3013
      %3015 = vrot.lane.b32.xlu0 %v2273, 28
      %v3016 = vpop.permute.xlu0 %3015
      %3017 = vrot.lane.b32.xlu0 %v2275, 28
      %v3018 = vpop.permute.xlu0 %3017
      %3019 = vrot.lane.b32.xlu0 %v2278, 28
      %v3020 = vpop.permute.xlu0 %3019
      %3021 = vrot.lane.b32.xlu0 %v2280, 28
      %v3022 = vpop.permute.xlu0 %3021
      %3023 = vrot.lane.b32.xlu0 %v2283, 28
      %v3024 = vpop.permute.xlu0 %3023
      %3025 = vrot.lane.b32.xlu0 %v2285, 28
      %v3026 = vpop.permute.xlu0 %3025
      %3027 = vrot.lane.b32.xlu0 %v2288, 28
      %v3028 = vpop.permute.xlu0 %3027
      %3029 = vrot.lane.b32.xlu0 %v2290, 28
      %v3030 = vpop.permute.xlu0 %3029
      %3031 = vrot.lane.b32.xlu0 %v2293, 28
      %v3032 = vpop.permute.xlu0 %3031
      %3033 = vrot.lane.b32.xlu0 %v2295, 28
      %v3034 = vpop.permute.xlu0 %3033
      %3035 = vrot.lane.b32.xlu0 %v2298, 28
      %v3036 = vpop.permute.xlu0 %3035
      %3037 = vrot.lane.b32.xlu0 %v2300, 28
      %v3038 = vpop.permute.xlu0 %3037
      %3039 = vrot.lane.b32.xlu0 %v2303, 28
      %v3040 = vpop.permute.xlu0 %3039
      %3041 = vrot.lane.b32.xlu0 %v2305, 28
      %v3042 = vpop.permute.xlu0 %3041
      %3043 = vrot.lane.b32.xlu0 %v2308, 28
      %v3044 = vpop.permute.xlu0 %3043
      %3045 = vrot.lane.b32.xlu0 %v2310, 28
      %v3046 = vpop.permute.xlu0 %3045
      %3047 = vrot.lane.b32.xlu0 %v2313, 28
      %v3048 = vpop.permute.xlu0 %3047
      %3049 = vrot.lane.b32.xlu0 %v2315, 28
      %v3050 = vpop.permute.xlu0 %3049
      %3051 = vrot.lane.b32.xlu0 %v2318, 28
      %v3052 = vpop.permute.xlu0 %3051
      %3053 = vrot.lane.b32.xlu0 %v2320, 28
      %v3054 = vpop.permute.xlu0 %3053
      %3055 = vrot.lane.b32.xlu0 %v2323, 28
      %v3056 = vpop.permute.xlu0 %3055
      %3057 = vrot.lane.b32.xlu0 %v2325, 28
      %v3058 = vpop.permute.xlu0 %3057
      %3059 = vrot.lane.b32.xlu0 %v2699, 28
      %v3060 = vpop.permute.xlu0 %3059
      %3061 = vrot.lane.b32.xlu0 %v2701, 28
      %v3062 = vpop.permute.xlu0 %3061
      %3063 = vrot.lane.b32.xlu0 %v3000, 28
      %v3064 = vpop.permute.xlu0 %3063
      %3065 = vrot.lane.b32.xlu0 %v3002, 28
      %v3066 = vpop.permute.xlu0 %3065
      %v3099 = vrot.slane %v2195, 2
      %v3100 = vrot.slane %v2196, 2
      %v3101 = vsel %vm703, %v3099, %v3100
      %v3102 = vrot.slane %v2197, 2
      %v3103 = vsel %vm703, %v3100, %v3102
      %3104 = vrot.lane.b32.xlu0 %v2434, 32
      %v3105 = vpop.permute.xlu0 %3104
      %3106 = vrot.lane.b32.xlu0 %v2436, 32
      %v3107 = vpop.permute.xlu0 %3106
      %3108 = vrot.lane.b32.xlu0 %v2439, 32
      %v3109 = vpop.permute.xlu0 %3108
      %3110 = vrot.lane.b32.xlu0 %v2441, 32
      %v3111 = vpop.permute.xlu0 %3110
      %3112 = vrot.lane.b32.xlu0 %v2444, 32
      %v3113 = vpop.permute.xlu0 %3112
      %3114 = vrot.lane.b32.xlu0 %v2446, 32
      %v3115 = vpop.permute.xlu0 %3114
      %3116 = vrot.lane.b32.xlu0 %v2449, 32
      %v3117 = vpop.permute.xlu0 %3116
      %3118 = vrot.lane.b32.xlu0 %v2451, 32
      %v3119 = vpop.permute.xlu0 %3118
      %3120 = vrot.lane.b32.xlu0 %v2454, 32
      %v3121 = vpop.permute.xlu0 %3120
      %3122 = vrot.lane.b32.xlu0 %v2456, 32
      %v3123 = vpop.permute.xlu0 %3122
      %3124 = vrot.lane.b32.xlu0 %v2459, 32
      %v3125 = vpop.permute.xlu0 %3124
      %3126 = vrot.lane.b32.xlu0 %v2461, 32
      %v3127 = vpop.permute.xlu0 %3126
      %3128 = vrot.lane.b32.xlu0 %v2464, 32
      %v3129 = vpop.permute.xlu0 %3128
      %3130 = vrot.lane.b32.xlu0 %v2466, 32
      %v3131 = vpop.permute.xlu0 %3130
      %3132 = vrot.lane.b32.xlu0 %v2469, 32
      %v3133 = vpop.permute.xlu0 %3132
      %3134 = vrot.lane.b32.xlu0 %v2471, 32
      %v3135 = vpop.permute.xlu0 %3134
      %3136 = vrot.lane.b32.xlu0 %v2474, 32
      %v3137 = vpop.permute.xlu0 %3136
      %3138 = vrot.lane.b32.xlu0 %v2476, 32
      %v3139 = vpop.permute.xlu0 %3138
      %3140 = vrot.lane.b32.xlu0 %v2479, 32
      %v3141 = vpop.permute.xlu0 %3140
      %3142 = vrot.lane.b32.xlu0 %v2481, 32
      %v3143 = vpop.permute.xlu0 %3142
      %3144 = vrot.lane.b32.xlu0 %v2484, 32
      %v3145 = vpop.permute.xlu0 %3144
      %3146 = vrot.lane.b32.xlu0 %v2486, 32
      %v3147 = vpop.permute.xlu0 %3146
      %3148 = vrot.lane.b32.xlu0 %v2489, 32
      %v3149 = vpop.permute.xlu0 %3148
      %3150 = vrot.lane.b32.xlu0 %v2491, 32
      %v3151 = vpop.permute.xlu0 %3150
      %3152 = vrot.lane.b32.xlu0 %v2494, 32
      %v3153 = vpop.permute.xlu0 %3152
      %3154 = vrot.lane.b32.xlu0 %v2496, 32
      %v3155 = vpop.permute.xlu0 %3154
      %3156 = vrot.lane.b32.xlu0 %v2499, 32
      %v3157 = vpop.permute.xlu0 %3156
      %3158 = vrot.lane.b32.xlu0 %v2501, 32
      %v3159 = vpop.permute.xlu0 %3158
      %3160 = vrot.lane.b32.xlu0 %v2800, 32
      %v3161 = vpop.permute.xlu0 %3160
      %3162 = vrot.lane.b32.xlu0 %v2802, 32
      %v3163 = vpop.permute.xlu0 %3162
      %3164 = vrot.lane.b32.xlu0 %v3101, 32
      %v3165 = vpop.permute.xlu0 %3164
      %3166 = vrot.lane.b32.xlu0 %v3103, 32
      %v3167 = vpop.permute.xlu0 %3166
      %v3200 = vsel %vm313, %v2144, %v2327
      %v3201 = vsel %vm313, %v2145, %v2329
      %v3202 = vsel %vm313, %v2147, %v2331
      %v3203 = vsel %vm313, %v2148, %v2333
      %v3204 = vsel %vm313, %v2150, %v2335
      %v3205 = vsel %vm313, %v2151, %v2337
      %v3206 = vsel %vm313, %v2153, %v2339
      %v3207 = vsel %vm313, %v2154, %v2341
      %v3208 = vsel %vm313, %v2156, %v2343
      %v3209 = vsel %vm313, %v2157, %v2345
      %v3210 = vsel %vm313, %v2159, %v2347
      %v3211 = vsel %vm313, %v2160, %v2349
      %v3212 = vsel %vm313, %v2162, %v2351
      %v3213 = vsel %vm313, %v2163, %v2353
      %v3214 = vsel %vm313, %v2165, %v2355
      %v3215 = vsel %vm313, %v2166, %v2357
      %v3216 = vsel %vm313, %v2168, %v2359
      %v3217 = vsel %vm313, %v2169, %v2361
      %v3218 = vsel %vm313, %v2171, %v2363
      %v3219 = vsel %vm313, %v2172, %v2365
      %v3220 = vsel %vm313, %v2174, %v2367
      %v3221 = vsel %vm313, %v2175, %v2369
      %v3222 = vsel %vm313, %v2177, %v2371
      %v3223 = vsel %vm313, %v2178, %v2373
      %v3224 = vsel %vm313, %v2180, %v2375
      %v3225 = vsel %vm313, %v2181, %v2377
      %v3226 = vsel %vm313, %v2183, %v2379
      %v3227 = vsel %vm313, %v2184, %v2381
      %v3228 = vsel %vm313, %v2186, %v2383
      %v3229 = vsel %vm313, %v2187, %v2385
      %v3230 = vsel %vm313, %v2189, %v2387
      %v3231 = vsel %vm313, %v2190, %v2389
      %v3232 = vsel %vm1514, %v3200, %v2503
      %v3233 = vsel %vm1514, %v3201, %v2505
      %v3234 = vsel %vm1514, %v3202, %v2507
      %v3235 = vsel %vm1514, %v3203, %v2509
      %v3236 = vsel %vm1514, %v3204, %v2511
      %v3237 = vsel %vm1514, %v3205, %v2513
      %v3238 = vsel %vm1514, %v3206, %v2515
      %v3239 = vsel %vm1514, %v3207, %v2517
      %v3240 = vsel %vm1514, %v3208, %v2519
      %v3241 = vsel %vm1514, %v3209, %v2521
      %v3242 = vsel %vm1514, %v3210, %v2523
      %v3243 = vsel %vm1514, %v3211, %v2525
      %v3244 = vsel %vm1514, %v3212, %v2527
      %v3245 = vsel %vm1514, %v3213, %v2529
      %v3246 = vsel %vm1514, %v3214, %v2531
      %v3247 = vsel %vm1514, %v3215, %v2533
      %v3248 = vsel %vm1514, %v3216, %v2535
      %v3249 = vsel %vm1514, %v3217, %v2537
      %v3250 = vsel %vm1514, %v3218, %v2539
      %v3251 = vsel %vm1514, %v3219, %v2541
      %v3252 = vsel %vm1514, %v3220, %v2543
      %v3253 = vsel %vm1514, %v3221, %v2545
      %v3254 = vsel %vm1514, %v3222, %v2547
      %v3255 = vsel %vm1514, %v3223, %v2549
      %v3256 = vsel %vm1514, %v3224, %v2551
      %v3257 = vsel %vm1514, %v3225, %v2553
      %v3258 = vsel %vm1514, %v3226, %v2555
      %v3259 = vsel %vm1514, %v3227, %v2557
      %v3260 = vsel %vm1514, %v3228, %v2559
      %v3261 = vsel %vm1514, %v3229, %v2561
      %v3262 = vsel %vm1514, %v3230, %v2563
      %v3263 = vsel %vm1514, %v3231, %v2565
      %v3264 = vsel %vm1547, %v3232, %v2601
      %v3265 = vsel %vm1547, %v3233, %v2603
      %v3266 = vsel %vm1547, %v3234, %v2605
      %v3267 = vsel %vm1547, %v3235, %v2607
      %v3268 = vsel %vm1547, %v3236, %v2609
      %v3269 = vsel %vm1547, %v3237, %v2611
      %v3270 = vsel %vm1547, %v3238, %v2613
      %v3271 = vsel %vm1547, %v3239, %v2615
      %v3272 = vsel %vm1547, %v3240, %v2617
      %v3273 = vsel %vm1547, %v3241, %v2619
      %v3274 = vsel %vm1547, %v3242, %v2621
      %v3275 = vsel %vm1547, %v3243, %v2623
      %v3276 = vsel %vm1547, %v3244, %v2625
      %v3277 = vsel %vm1547, %v3245, %v2627
      %v3278 = vsel %vm1547, %v3246, %v2629
      %v3279 = vsel %vm1547, %v3247, %v2631
      %v3280 = vsel %vm1547, %v3248, %v2633
      %v3281 = vsel %vm1547, %v3249, %v2635
      %v3282 = vsel %vm1547, %v3250, %v2637
      %v3283 = vsel %vm1547, %v3251, %v2639
      %v3284 = vsel %vm1547, %v3252, %v2641
      %v3285 = vsel %vm1547, %v3253, %v2643
      %v3286 = vsel %vm1547, %v3254, %v2645
      %v3287 = vsel %vm1547, %v3255, %v2647
      %v3288 = vsel %vm1547, %v3256, %v2649
      %v3289 = vsel %vm1547, %v3257, %v2651
      %v3290 = vsel %vm1547, %v3258, %v2653
      %v3291 = vsel %vm1547, %v3259, %v2655
      %v3292 = vsel %vm1547, %v3260, %v2657
      %v3293 = vsel %vm1547, %v3261, %v2659
      %v3294 = vsel %vm1547, %v3262, %v2661
      %v3295 = vsel %vm1547, %v3263, %v2663
      %v3296 = vsel %vm1580, %v3264, %v2703
      %v3297 = vsel %vm1580, %v3265, %v2705
      %v3298 = vsel %vm1580, %v3266, %v2707
      %v3299 = vsel %vm1580, %v3267, %v2709
      %v3300 = vsel %vm1580, %v3268, %v2711
      %v3301 = vsel %vm1580, %v3269, %v2713
      %v3302 = vsel %vm1580, %v3270, %v2715
      %v3303 = vsel %vm1580, %v3271, %v2717
      %v3304 = vsel %vm1580, %v3272, %v2719
      %v3305 = vsel %vm1580, %v3273, %v2721
      %v3306 = vsel %vm1580, %v3274, %v2723
      %v3307 = vsel %vm1580, %v3275, %v2725
      %v3308 = vsel %vm1580, %v3276, %v2727
      %v3309 = vsel %vm1580, %v3277, %v2729
      %v3310 = vsel %vm1580, %v3278, %v2731
      %v3311 = vsel %vm1580, %v3279, %v2733
      %v3312 = vsel %vm1580, %v3280, %v2735
      %v3313 = vsel %vm1580, %v3281, %v2737
      %v3314 = vsel %vm1580, %v3282, %v2739
      %v3315 = vsel %vm1580, %v3283, %v2741
      %v3316 = vsel %vm1580, %v3284, %v2743
      %v3317 = vsel %vm1580, %v3285, %v2745
      %v3318 = vsel %vm1580, %v3286, %v2747
      %v3319 = vsel %vm1580, %v3287, %v2749
      %v3320 = vsel %vm1580, %v3288, %v2751
      %v3321 = vsel %vm1580, %v3289, %v2753
      %v3322 = vsel %vm1580, %v3290, %v2755
      %v3323 = vsel %vm1580, %v3291, %v2757
      %v3324 = vsel %vm1580, %v3292, %v2759
      %v3325 = vsel %vm1580, %v3293, %v2761
      %v3326 = vsel %vm1580, %v3294, %v2763
      %v3327 = vsel %vm1580, %v3295, %v2765
      %v3328 = vsel %vm1613, %v3296, %v2804
      %v3329 = vsel %vm1613, %v3297, %v2806
      %v3330 = vsel %vm1613, %v3298, %v2808
      %v3331 = vsel %vm1613, %v3299, %v2810
      %v3332 = vsel %vm1613, %v3300, %v2812
      %v3333 = vsel %vm1613, %v3301, %v2814
      %v3334 = vsel %vm1613, %v3302, %v2816
      %v3335 = vsel %vm1613, %v3303, %v2818
      %v3336 = vsel %vm1613, %v3304, %v2820
      %v3337 = vsel %vm1613, %v3305, %v2822
      %v3338 = vsel %vm1613, %v3306, %v2824
      %v3339 = vsel %vm1613, %v3307, %v2826
      %v3340 = vsel %vm1613, %v3308, %v2828
      %v3341 = vsel %vm1613, %v3309, %v2830
      %v3342 = vsel %vm1613, %v3310, %v2832
      %v3343 = vsel %vm1613, %v3311, %v2834
      %v3344 = vsel %vm1613, %v3312, %v2836
      %v3345 = vsel %vm1613, %v3313, %v2838
      %v3346 = vsel %vm1613, %v3314, %v2840
      %v3347 = vsel %vm1613, %v3315, %v2842
      %v3348 = vsel %vm1613, %v3316, %v2844
      %v3349 = vsel %vm1613, %v3317, %v2846
      %v3350 = vsel %vm1613, %v3318, %v2848
      %v3351 = vsel %vm1613, %v3319, %v2850
      %v3352 = vsel %vm1613, %v3320, %v2852
      %v3353 = vsel %vm1613, %v3321, %v2854
      %v3354 = vsel %vm1613, %v3322, %v2856
      %v3355 = vsel %vm1613, %v3323, %v2858
      %v3356 = vsel %vm1613, %v3324, %v2860
      %v3357 = vsel %vm1613, %v3325, %v2862
      %v3358 = vsel %vm1613, %v3326, %v2864
      %v3359 = vsel %vm1613, %v3327, %v2866
      %v3360 = vsel %vm1646, %v3328, %v2902
      %v3361 = vsel %vm1646, %v3329, %v2904
      %v3362 = vsel %vm1646, %v3330, %v2906
      %v3363 = vsel %vm1646, %v3331, %v2908
      %v3364 = vsel %vm1646, %v3332, %v2910
      %v3365 = vsel %vm1646, %v3333, %v2912
      %v3366 = vsel %vm1646, %v3334, %v2914
      %v3367 = vsel %vm1646, %v3335, %v2916
      %v3368 = vsel %vm1646, %v3336, %v2918
      %v3369 = vsel %vm1646, %v3337, %v2920
      %v3370 = vsel %vm1646, %v3338, %v2922
      %v3371 = vsel %vm1646, %v3339, %v2924
      %v3372 = vsel %vm1646, %v3340, %v2926
      %v3373 = vsel %vm1646, %v3341, %v2928
      %v3374 = vsel %vm1646, %v3342, %v2930
      %v3375 = vsel %vm1646, %v3343, %v2932
      %v3376 = vsel %vm1646, %v3344, %v2934
      %v3377 = vsel %vm1646, %v3345, %v2936
      %v3378 = vsel %vm1646, %v3346, %v2938
      %v3379 = vsel %vm1646, %v3347, %v2940
      %v3380 = vsel %vm1646, %v3348, %v2942
      %v3381 = vsel %vm1646, %v3349, %v2944
      %v3382 = vsel %vm1646, %v3350, %v2946
      %v3383 = vsel %vm1646, %v3351, %v2948
      %v3384 = vsel %vm1646, %v3352, %v2950
      %v3385 = vsel %vm1646, %v3353, %v2952
      %v3386 = vsel %vm1646, %v3354, %v2954
      %v3387 = vsel %vm1646, %v3355, %v2956
      %v3388 = vsel %vm1646, %v3356, %v2958
      %v3389 = vsel %vm1646, %v3357, %v2960
      %v3390 = vsel %vm1646, %v3358, %v2962
      %v3391 = vsel %vm1646, %v3359, %v2964
      %v3392 = vsel %vm1679, %v3360, %v3004
      %v3393 = vsel %vm1679, %v3361, %v3006
      %v3394 = vsel %vm1679, %v3362, %v3008
      %v3395 = vsel %vm1679, %v3363, %v3010
      %v3396 = vsel %vm1679, %v3364, %v3012
      %v3397 = vsel %vm1679, %v3365, %v3014
      %v3398 = vsel %vm1679, %v3366, %v3016
      %v3399 = vsel %vm1679, %v3367, %v3018
      %v3400 = vsel %vm1679, %v3368, %v3020
      %v3401 = vsel %vm1679, %v3369, %v3022
      %v3402 = vsel %vm1679, %v3370, %v3024
      %v3403 = vsel %vm1679, %v3371, %v3026
      %v3404 = vsel %vm1679, %v3372, %v3028
      %v3405 = vsel %vm1679, %v3373, %v3030
      %v3406 = vsel %vm1679, %v3374, %v3032
      %v3407 = vsel %vm1679, %v3375, %v3034
      %v3408 = vsel %vm1679, %v3376, %v3036
      %v3409 = vsel %vm1679, %v3377, %v3038
      %v3410 = vsel %vm1679, %v3378, %v3040
      %v3411 = vsel %vm1679, %v3379, %v3042
      %v3412 = vsel %vm1679, %v3380, %v3044
      %v3413 = vsel %vm1679, %v3381, %v3046
      %v3414 = vsel %vm1679, %v3382, %v3048
      %v3415 = vsel %vm1679, %v3383, %v3050
      %v3416 = vsel %vm1679, %v3384, %v3052
      %v3417 = vsel %vm1679, %v3385, %v3054
      %v3418 = vsel %vm1679, %v3386, %v3056
      %v3419 = vsel %vm1679, %v3387, %v3058
      %v3420 = vsel %vm1679, %v3388, %v3060
      %v3421 = vsel %vm1679, %v3389, %v3062
      %v3422 = vsel %vm1679, %v3390, %v3064
      %v3423 = vsel %vm1679, %v3391, %v3066
      %v3424 = vsel %vm1712, %v3392, %v3105
      %v3425 = vsel %vm1712, %v3393, %v3107
      %v3426 = vsel %vm1712, %v3394, %v3109
      %v3427 = vsel %vm1712, %v3395, %v3111
      %v3428 = vsel %vm1712, %v3396, %v3113
      %v3429 = vsel %vm1712, %v3397, %v3115
      %v3430 = vsel %vm1712, %v3398, %v3117
      %v3431 = vsel %vm1712, %v3399, %v3119
      %v3432 = vsel %vm1712, %v3400, %v3121
      %v3433 = vsel %vm1712, %v3401, %v3123
      %v3434 = vsel %vm1712, %v3402, %v3125
      %v3435 = vsel %vm1712, %v3403, %v3127
      %v3436 = vsel %vm1712, %v3404, %v3129
      %v3437 = vsel %vm1712, %v3405, %v3131
      %v3438 = vsel %vm1712, %v3406, %v3133
      %v3439 = vsel %vm1712, %v3407, %v3135
      %v3440 = vsel %vm1712, %v3408, %v3137
      %v3441 = vsel %vm1712, %v3409, %v3139
      %v3442 = vsel %vm1712, %v3410, %v3141
      %v3443 = vsel %vm1712, %v3411, %v3143
      %v3444 = vsel %vm1712, %v3412, %v3145
      %v3445 = vsel %vm1712, %v3413, %v3147
      %v3446 = vsel %vm1712, %v3414, %v3149
      %v3447 = vsel %vm1712, %v3415, %v3151
      %v3448 = vsel %vm1712, %v3416, %v3153
      %v3449 = vsel %vm1712, %v3417, %v3155
      %v3450 = vsel %vm1712, %v3418, %v3157
      %v3451 = vsel %vm1712, %v3419, %v3159
      %v3452 = vsel %vm1712, %v3420, %v3161
      %v3453 = vsel %vm1712, %v3421, %v3163
      %v3454 = vsel %vm1712, %v3422, %v3165
      %v3455 = vsel %vm1712, %v3423, %v3167
      %v3456 = vpack.c.bf16 %v3425, %v3424
      %v3457 = vpack.c.bf16 %v3427, %v3426
      %v3458 = vpack.c.bf16 %v3429, %v3428
      %v3459 = vpack.c.bf16 %v3431, %v3430
      %v3460 = vpack.c.bf16 %v3433, %v3432
      %v3461 = vpack.c.bf16 %v3435, %v3434
      %v3462 = vpack.c.bf16 %v3437, %v3436
      %v3463 = vpack.c.bf16 %v3439, %v3438
      %v3464 = vpack.c.bf16 %v3441, %v3440
      %v3465 = vpack.c.bf16 %v3443, %v3442
      %v3466 = vpack.c.bf16 %v3445, %v3444
      %v3467 = vpack.c.bf16 %v3447, %v3446
      %v3468 = vpack.c.bf16 %v3449, %v3448
      %v3469 = vpack.c.bf16 %v3451, %v3450
      %v3470 = vpack.c.bf16 %v3453, %v3452
      %v3471 = vpack.c.bf16 %v3455, %v3454
      %v3472 = vld [vmem:[%s3] sm:$0xf]
      %v3473 = vld [vmem:[%s3 + $0x4] sm:$0xf]
      %v3474 = vld [vmem:[%s3 + $0x8] sm:$0xf]
      %v3475 = vld [vmem:[%s3 + $0xc] sm:$0xf]
      %v3476 = vld [vmem:[%s3 + $0x10] sm:$0x3]
      %v3477 = vld [vmem:[%s4] sm:$0x1]
      %v3479 = vlaneseq
      %v3480 = vshrl.u32 %v3479, 7
      %v3481 = vsub.s32 0, %v3480
      %v3482 = vrot.slane %v3477, %v3481
      %v3489 = vunpack.c.l.b16 %v3472
      %v3490 = vunpack.c.l.b16 %v3473
      %v3491 = vunpack.c.l.b16 %v3474
      %v3492 = vunpack.c.l.b16 %v3475
      %v3493 = vunpack.c.l.b16 %v3476
      %v3494 = vpack.c.b16 %v3490, %v3489
      %v3495 = vpack.c.b16 %v3492, %v3491
      %v3496 = vpack.c.b16 %v3493, %v3493
      %v3500 = vsel %vm1788, %v3456, 0
      %v3503 = vsel %vm1788, %v3457, 0
      %v3506 = vsel %vm1788, %v3458, 0
      %v3509 = vsel %vm1788, %v3459, 0
      %v3512 = vsel %vm1788, %v3460, 0
      %v3515 = vsel %vm1788, %v3461, 0
      %v3518 = vsel %vm1788, %v3462, 0
      %v3521 = vsel %vm1788, %v3463, 0
      %v3524 = vsel %vm1788, %v3464, 0
      %v3527 = vsel %vm1788, %v3465, 0
      %v3530 = vsel %vm1788, %v3466, 0
      %v3533 = vsel %vm1788, %v3467, 0
      %v3536 = vsel %vm1788, %v3468, 0
      %v3539 = vsel %vm1788, %v3469, 0
      %v3542 = vsel %vm1788, %v3470, 0
      %v3545 = vsel %vm1788, %v3471, 0
      %v3548 = vsel %vm1837, %v3496, 0
      %3550 = vmatprep.subr.bf16.mxu0 0
      %3551 = vmatpush1.bf16.msra.mxu0 %v3494
      %3552 = vmatprep.subr.bf16.mxu0 0
      %3553 = vmatpush1.bf16.msra.mxu0 %v3495
      %3554 = vmatprep.subr.bf16.mxu0 0
      %3555 = vmatpush1.bf16.msra.mxu0 %v3548
      %3556 = vmatprep.subr.bf16.mxu0 0
      %3557 = vmatpush1.bf16.msra.mxu0 0
      %3558 = vmatprep.subr.bf16.mxu0 0
      %3559 = vmatpush1.bf16.msra.mxu0 0
      %3560 = vmatprep.subr.bf16.mxu0 0
      %3561 = vmatpush1.bf16.msra.mxu0 0
      %3562 = vmatprep.subr.bf16.mxu0 0
      %3563 = vmatpush1.bf16.msra.mxu0 0
      %3564 = vmatprep.subr.bf16.mxu0 0
      %3565 = vmatpush1.bf16.msra.mxu0 0
      %3566 = vmatprep.subr.bf16.mxu0 0
      %3567 = vmatpush1.bf16.msra.mxu0 0
      %3568 = vmatprep.subr.bf16.mxu0 0
      %3569 = vmatpush1.bf16.msra.mxu0 0
      %3570 = vmatprep.subr.bf16.mxu0 0
      %3571 = vmatpush1.bf16.msra.mxu0 0
      %3572 = vmatprep.subr.bf16.mxu0 0
      %3573 = vmatpush1.bf16.msra.mxu0 0
      %3574 = vmatprep.subr.bf16.mxu0 0
      %3575 = vmatpush1.bf16.msra.mxu0 0
      %3576 = vmatprep.subr.bf16.mxu0 0
      %3577 = vmatpush1.bf16.msra.mxu0 0
      %3578 = vmatprep.subr.bf16.mxu0 0
      %3579 = vmatpush1.bf16.msra.mxu0 0
      %3580 = vmatprep.subr.bf16.mxu0 0
      %3581 = vmatpush1.bf16.msra.mxu0 0
      %3582 = vmatprep.mubr.bf16.mxu0 0
      %3583 = vmatmul.mubr.bf16.gmra.mrb[0].mxu0 %v3500
      %v3584 = vpop.f32.mrb[0].mxu0
      %v3585 = vadd.f32 %v3482, %v3584
      %v3586 = vpop.f32.mrb[0].mxu0
      %v3587 = vpop.f32.mrb[0].mxu0
      %v3588 = vadd.f32 %v3482, %v3587
      %v3589 = vpop.f32.mrb[0].mxu0
      %3590 = vmatprep.mubr.bf16.mxu0 0
      %3591 = vmatmul.mubr.bf16.gmra.mrb[0].mxu0 %v3503
      %v3592 = vpop.f32.mrb[0].mxu0
      %v3593 = vadd.f32 %v3482, %v3592
      %v3594 = vpop.f32.mrb[0].mxu0
      %v3595 = vpop.f32.mrb[0].mxu0
      %v3596 = vadd.f32 %v3482, %v3595
      %v3597 = vpop.f32.mrb[0].mxu0
      %3598 = vmatprep.mubr.bf16.mxu0 0
      %3599 = vmatmul.mubr.bf16.gmra.mrb[0].mxu0 %v3506
      %v3600 = vpop.f32.mrb[0].mxu0
      %v3601 = vadd.f32 %v3482, %v3600
      %v3602 = vpop.f32.mrb[0].mxu0
      %v3603 = vpop.f32.mrb[0].mxu0
      %v3604 = vadd.f32 %v3482, %v3603
      %v3605 = vpop.f32.mrb[0].mxu0
      %3606 = vmatprep.mubr.bf16.mxu0 0
      %3607 = vmatmul.mubr.bf16.gmra.mrb[0].mxu0 %v3509
      %v3608 = vpop.f32.mrb[0].mxu0
      %v3609 = vadd.f32 %v3482, %v3608
      %v3610 = vpop.f32.mrb[0].mxu0
      %v3611 = vpop.f32.mrb[0].mxu0
      %v3612 = vadd.f32 %v3482, %v3611
      %v3613 = vpop.f32.mrb[0].mxu0
      %3614 = vmatprep.mubr.bf16.mxu0 0
      %3615 = vmatmul.mubr.bf16.gmra.mrb[0].mxu0 %v3512
      %v3616 = vpop.f32.mrb[0].mxu0
      %v3617 = vadd.f32 %v3482, %v3616
      %v3618 = vpop.f32.mrb[0].mxu0
      %v3619 = vpop.f32.mrb[0].mxu0
      %v3620 = vadd.f32 %v3482, %v3619
      %v3621 = vpop.f32.mrb[0].mxu0
      %3622 = vmatprep.mubr.bf16.mxu0 0
      %3623 = vmatmul.mubr.bf16.gmra.mrb[0].mxu0 %v3515
      %v3624 = vpop.f32.mrb[0].mxu0
      %v3625 = vadd.f32 %v3482, %v3624
      %v3626 = vpop.f32.mrb[0].mxu0
      %v3627 = vpop.f32.mrb[0].mxu0
      %v3628 = vadd.f32 %v3482, %v3627
      %v3629 = vpop.f32.mrb[0].mxu0
      %3630 = vmatprep.mubr.bf16.mxu0 0
      %3631 = vmatmul.mubr.bf16.gmra.mrb[0].mxu0 %v3518
      %v3632 = vpop.f32.mrb[0].mxu0
      %v3633 = vadd.f32 %v3482, %v3632
      %v3634 = vpop.f32.mrb[0].mxu0
      %v3635 = vpop.f32.mrb[0].mxu0
      %v3636 = vadd.f32 %v3482, %v3635
      %v3637 = vpop.f32.mrb[0].mxu0
      %3638 = vmatprep.mubr.bf16.mxu0 0
      %3639 = vmatmul.mubr.bf16.gmra.mrb[0].mxu0 %v3521
      %v3640 = vpop.f32.mrb[0].mxu0
      %v3641 = vadd.f32 %v3482, %v3640
      %v3642 = vpop.f32.mrb[0].mxu0
      %v3643 = vpop.f32.mrb[0].mxu0
      %v3644 = vadd.f32 %v3482, %v3643
      %v3645 = vpop.f32.mrb[0].mxu0
      %3646 = vmatprep.mubr.bf16.mxu0 0
      %3647 = vmatmul.mubr.bf16.gmra.mrb[0].mxu0 %v3524
      %v3648 = vpop.f32.mrb[0].mxu0
      %v3649 = vadd.f32 %v3482, %v3648
      %v3650 = vpop.f32.mrb[0].mxu0
      %v3651 = vpop.f32.mrb[0].mxu0
      %v3652 = vadd.f32 %v3482, %v3651
      %v3653 = vpop.f32.mrb[0].mxu0
      %3654 = vmatprep.mubr.bf16.mxu0 0
      %3655 = vmatmul.mubr.bf16.gmra.mrb[0].mxu0 %v3527
      %v3656 = vpop.f32.mrb[0].mxu0
      %v3657 = vadd.f32 %v3482, %v3656
      %v3658 = vpop.f32.mrb[0].mxu0
      %v3659 = vpop.f32.mrb[0].mxu0
      %v3660 = vadd.f32 %v3482, %v3659
      %v3661 = vpop.f32.mrb[0].mxu0
      %3662 = vmatprep.mubr.bf16.mxu0 0
      %3663 = vmatmul.mubr.bf16.gmra.mrb[0].mxu0 %v3530
      %v3664 = vpop.f32.mrb[0].mxu0
      %v3665 = vadd.f32 %v3482, %v3664
      %v3666 = vpop.f32.mrb[0].mxu0
      %v3667 = vpop.f32.mrb[0].mxu0
      %v3668 = vadd.f32 %v3482, %v3667
      %v3669 = vpop.f32.mrb[0].mxu0
      %3670 = vmatprep.mubr.bf16.mxu0 0
      %3671 = vmatmul.mubr.bf16.gmra.mrb[0].mxu0 %v3533
      %v3672 = vpop.f32.mrb[0].mxu0
      %v3673 = vadd.f32 %v3482, %v3672
      %v3674 = vpop.f32.mrb[0].mxu0
      %v3675 = vpop.f32.mrb[0].mxu0
      %v3676 = vadd.f32 %v3482, %v3675
      %v3677 = vpop.f32.mrb[0].mxu0
      %3678 = vmatprep.mubr.bf16.mxu0 0
      %3679 = vmatmul.mubr.bf16.gmra.mrb[0].mxu0 %v3536
      %v3680 = vpop.f32.mrb[0].mxu0
      %v3681 = vadd.f32 %v3482, %v3680
      %v3682 = vpop.f32.mrb[0].mxu0
      %v3683 = vpop.f32.mrb[0].mxu0
      %v3684 = vadd.f32 %v3482, %v3683
      %v3685 = vpop.f32.mrb[0].mxu0
      %3686 = vmatprep.mubr.bf16.mxu0 0
      %3687 = vmatmul.mubr.bf16.gmra.mrb[0].mxu0 %v3539
      %v3688 = vpop.f32.mrb[0].mxu0
      %v3689 = vadd.f32 %v3482, %v3688
      %v3690 = vpop.f32.mrb[0].mxu0
      %v3691 = vpop.f32.mrb[0].mxu0
      %v3692 = vadd.f32 %v3482, %v3691
      %v3693 = vpop.f32.mrb[0].mxu0
      %3694 = vmatprep.mubr.bf16.mxu0 0
      %3695 = vmatmul.mubr.bf16.gmra.mrb[0].mxu0 %v3542
      %v3696 = vpop.f32.mrb[0].mxu0
      %v3697 = vadd.f32 %v3482, %v3696
      %v3698 = vpop.f32.mrb[0].mxu0
      %v3699 = vpop.f32.mrb[0].mxu0
      %v3700 = vadd.f32 %v3482, %v3699
      %v3701 = vpop.f32.mrb[0].mxu0
      %3702 = vmatprep.mubr.bf16.mxu0 0
      %3703 = vmatmul.mubr.bf16.gmra.mrb[0].mxu0 %v3545
      %v3704 = vpop.f32.mrb[0].mxu0
      %v3705 = vadd.f32 %v3482, %v3704
      %v3706 = vpop.f32.mrb[0].mxu0
      %v3707 = vpop.f32.mrb[0].mxu0
      %v3708 = vadd.f32 %v3482, %v3707
      %v3709 = vpop.f32.mrb[0].mxu0
      %3710 = vdwg.mxu0
      %v3711 = vmax.f32 %v3585, 0.0
      %v3712 = vmax.f32 %v3588, 0.0
      %v3713 = vmax.f32 %v3593, 0.0
      %v3714 = vmax.f32 %v3596, 0.0
      %v3715 = vmax.f32 %v3601, 0.0
      %v3716 = vmax.f32 %v3604, 0.0
      %v3717 = vmax.f32 %v3609, 0.0
      %v3718 = vmax.f32 %v3612, 0.0
      %v3719 = vmax.f32 %v3617, 0.0
      %v3720 = vmax.f32 %v3620, 0.0
      %v3721 = vmax.f32 %v3625, 0.0
      %v3722 = vmax.f32 %v3628, 0.0
      %v3723 = vmax.f32 %v3633, 0.0
      %v3724 = vmax.f32 %v3636, 0.0
      %v3725 = vmax.f32 %v3641, 0.0
      %v3726 = vmax.f32 %v3644, 0.0
      %v3727 = vmax.f32 %v3649, 0.0
      %v3728 = vmax.f32 %v3652, 0.0
      %v3729 = vmax.f32 %v3657, 0.0
      %v3730 = vmax.f32 %v3660, 0.0
      %v3731 = vmax.f32 %v3665, 0.0
      %v3732 = vmax.f32 %v3668, 0.0
      %v3733 = vmax.f32 %v3673, 0.0
      %v3734 = vmax.f32 %v3676, 0.0
      %v3735 = vmax.f32 %v3681, 0.0
      %v3736 = vmax.f32 %v3684, 0.0
      %v3737 = vmax.f32 %v3689, 0.0
      %v3738 = vmax.f32 %v3692, 0.0
      %v3739 = vmax.f32 %v3697, 0.0
      %v3740 = vmax.f32 %v3700, 0.0
      %v3741 = vmax.f32 %v3705, 0.0
      %v3742 = vmax.f32 %v3708, 0.0
      %3743 = vst.msk [vmem:[#allocation3] sm:$0xff] %vm313, 0.0
      %3744 = vst.msk [vmem:[#allocation3 + $0x8] sm:$0xff] %vm313, 0.0
      %vm3745 = vcmask 25600
      %3746 = vst.msk [vmem:[#allocation3 + $0x10] sm:$0x3] %vm3745, 0.0
      %3747 = vst.msk [vmem:[%s2069] sm:$0xff] %vm313, 0.0
      %3748 = vst.msk [vmem:[%s2069 + $0x8] sm:$0xff] %vm313, 0.0
      %3749 = vst.msk [vmem:[%s2069 + $0x10] sm:$0x3] %vm3745, 0.0
      %3750 = vst.msk [vmem:[#allocation3] sm:$0x1] %vm369, 0.0
      %3751 = vst.msk [vmem:[#allocation3 + $0x18] sm:$0x1] %vm369, 0.0
      %3752 = vst.msk [vmem:[#allocation3 + $0x30] sm:$0x1] %vm369, 0.0
      %3753 = vst.msk [vmem:[#allocation3 + $0x48] sm:$0x1] %vm369, 0.0
      %3754 = vst.msk [vmem:[#allocation3 + $0x60] sm:$0x1] %vm369, 0.0
      %3755 = vst.msk [vmem:[#allocation3 + $0x78] sm:$0x1] %vm369, 0.0
      %3756 = vst.msk [vmem:[#allocation3 + $0x90] sm:$0x1] %vm369, 0.0
      %3757 = vst.msk [vmem:[#allocation3 + $0xa8] sm:$0x1] %vm369, 0.0
      %3758 = vst.msk [vmem:[#allocation3 + $0xc0] sm:$0x1] %vm369, 0.0
      %3759 = vst.msk [vmem:[#allocation3 + $0xd8] sm:$0x1] %vm369, 0.0
      %3760 = vst.msk [vmem:[#allocation3 + $0xf0] sm:$0x1] %vm369, 0.0
      %3761 = vst.msk [vmem:[#allocation3 + $0x108] sm:$0x1] %vm369, 0.0
      %3762 = vst.msk [vmem:[#allocation3 + $0x120] sm:$0x1] %vm369, 0.0
      %3763 = vst.msk [vmem:[#allocation3 + $0x138] sm:$0x1] %vm369, 0.0
      %3764 = vst.msk [vmem:[#allocation3 + $0x150] sm:$0x1] %vm369, 0.0
      %3765 = vst.msk [vmem:[#allocation3 + $0x168] sm:$0x1] %vm369, 0.0
      %3766 = vst.msk [vmem:[#allocation3 + $0x180] sm:$0x1] %vm369, 0.0
      %3767 = vst.msk [vmem:[#allocation3 + $0x198] sm:$0x1] %vm369, 0.0
      %3768 = vst.msk [vmem:[#allocation3 + $0x11] sm:$0x1] %vm369, 0.0
      %3769 = vst.msk [vmem:[#allocation3 + $0x29] sm:$0x1] %vm369, 0.0
      %3770 = vst.msk [vmem:[#allocation3 + $0x41] sm:$0x1] %vm369, 0.0
      %3771 = vst.msk [vmem:[#allocation3 + $0x59] sm:$0x1] %vm369, 0.0
      %3772 = vst.msk [vmem:[#allocation3 + $0x71] sm:$0x1] %vm369, 0.0
      %3773 = vst.msk [vmem:[#allocation3 + $0x89] sm:$0x1] %vm369, 0.0
      %3774 = vst.msk [vmem:[#allocation3 + $0xa1] sm:$0x1] %vm369, 0.0
      %3775 = vst.msk [vmem:[#allocation3 + $0xb9] sm:$0x1] %vm369, 0.0
      %3776 = vst.msk [vmem:[#allocation3 + $0xd1] sm:$0x1] %vm369, 0.0
      %3777 = vst.msk [vmem:[#allocation3 + $0xe9] sm:$0x1] %vm369, 0.0
      %3778 = vst.msk [vmem:[#allocation3 + $0x101] sm:$0x1] %vm369, 0.0
      %3779 = vst.msk [vmem:[#allocation3 + $0x119] sm:$0x1] %vm369, 0.0
      %3780 = vst.msk [vmem:[#allocation3 + $0x131] sm:$0x1] %vm369, 0.0
      %3781 = vst.msk [vmem:[#allocation3 + $0x149] sm:$0x1] %vm369, 0.0
      %3782 = vst.msk [vmem:[#allocation3 + $0x161] sm:$0x1] %vm369, 0.0
      %3783 = vst.msk [vmem:[#allocation3 + $0x179] sm:$0x1] %vm369, 0.0
      %3784 = vst.msk [vmem:[#allocation3 + $0x191] sm:$0x1] %vm369, 0.0
      %3785 = vst.msk [vmem:[#allocation3 + $0x1a9] sm:$0x1] %vm369, 0.0
      %3786 = vst.msk [vmem:[%s2034 + $0x1] sm:$0xff] %vm313, %v3711
      %3787 = vst.msk [vmem:[%s2034 + $0x9] sm:$0xff] %vm313, %v3712
      %3788 = vst.msk [vmem:[%s2034 + $0x19] sm:$0xff] %vm313, %v3713
      %3789 = vst.msk [vmem:[%s2034 + $0x21] sm:$0xff] %vm313, %v3714
      %3790 = vst.msk [vmem:[%s2034 + $0x31] sm:$0xff] %vm313, %v3715
      %3791 = vst.msk [vmem:[%s2034 + $0x39] sm:$0xff] %vm313, %v3716
      %3792 = vst.msk [vmem:[%s2034 + $0x49] sm:$0xff] %vm313, %v3717
      %3793 = vst.msk [vmem:[%s2034 + $0x51] sm:$0xff] %vm313, %v3718
      %3794 = vst.msk [vmem:[%s2034 + $0x61] sm:$0xff] %vm313, %v3719
      %3795 = vst.msk [vmem:[%s2034 + $0x69] sm:$0xff] %vm313, %v3720
      %3796 = vst.msk [vmem:[%s2034 + $0x79] sm:$0xff] %vm313, %v3721
      %3797 = vst.msk [vmem:[%s2034 + $0x81] sm:$0xff] %vm313, %v3722
      %3798 = vst.msk [vmem:[%s2034 + $0x91] sm:$0xff] %vm313, %v3723
      %3799 = vst.msk [vmem:[%s2034 + $0x99] sm:$0xff] %vm313, %v3724
      %3800 = vst.msk [vmem:[%s2034 + $0xa9] sm:$0xff] %vm313, %v3725
      %3801 = vst.msk [vmem:[%s2034 + $0xb1] sm:$0xff] %vm313, %v3726
      %3802 = vst.msk [vmem:[%s2034 + $0xc1] sm:$0xff] %vm313, %v3727
      %3803 = vst.msk [vmem:[%s2034 + $0xc9] sm:$0xff] %vm313, %v3728
      %3804 = vst.msk [vmem:[%s2034 + $0xd9] sm:$0xff] %vm313, %v3729
      %3805 = vst.msk [vmem:[%s2034 + $0xe1] sm:$0xff] %vm313, %v3730
      %3806 = vst.msk [vmem:[%s2034 + $0xf1] sm:$0xff] %vm313, %v3731
      %3807 = vst.msk [vmem:[%s2034 + $0xf9] sm:$0xff] %vm313, %v3732
      %3808 = vst.msk [vmem:[%s2034 + $0x109] sm:$0xff] %vm313, %v3733
      %3809 = vst.msk [vmem:[%s2034 + $0x111] sm:$0xff] %vm313, %v3734
      %3810 = vst.msk [vmem:[%s2034 + $0x121] sm:$0xff] %vm313, %v3735
      %3811 = vst.msk [vmem:[%s2034 + $0x129] sm:$0xff] %vm313, %v3736
      %3812 = vst.msk [vmem:[%s2034 + $0x139] sm:$0xff] %vm313, %v3737
      %3813 = vst.msk [vmem:[%s2034 + $0x141] sm:$0xff] %vm313, %v3738
      %3814 = vst.msk [vmem:[%s2034 + $0x151] sm:$0xff] %vm313, %v3739
      %3815 = vst.msk [vmem:[%s2034 + $0x159] sm:$0xff] %vm313, %v3740
      %3816 = vst.msk [vmem:[%s2034 + $0x169] sm:$0xff] %vm313, %v3741
      %3817 = vst.msk [vmem:[%s2034 + $0x171] sm:$0xff] %vm313, %v3742
      %v3818 = vld [vmem:[#allocation3] ss:$2 sm:$0xff]
      %s3819 = scalar_lea.vmem [#allocation3], 24
      %v3820 = vld [vmem:[%s3819] ss:$2 sm:$0xff]
      %s3821 = scalar_lea.vmem [#allocation3], 48
      %v3822 = vld [vmem:[%s3821] ss:$2 sm:$0xff]
      %s3823 = scalar_lea.vmem [#allocation3], 72
      %v3824 = vld [vmem:[%s3823] ss:$2 sm:$0xff]
      %s3825 = scalar_lea.vmem [#allocation3], 96
      %v3826 = vld [vmem:[%s3825] ss:$2 sm:$0xff]
      %s3827 = scalar_lea.vmem [#allocation3], 120
      %v3828 = vld [vmem:[%s3827] ss:$2 sm:$0xff]
      %s3829 = scalar_lea.vmem [#allocation3], 144
      %v3830 = vld [vmem:[%s3829] ss:$2 sm:$0xff]
      %s3831 = scalar_lea.vmem [#allocation3], 168
      %v3832 = vld [vmem:[%s3831] ss:$2 sm:$0xff]
      %s3833 = scalar_lea.vmem [#allocation3], 192
      %v3834 = vld [vmem:[%s3833] ss:$2 sm:$0xff]
      %s3835 = scalar_lea.vmem [#allocation3], 216
      %v3836 = vld [vmem:[%s3835] ss:$2 sm:$0xff]
      %s3837 = scalar_lea.vmem [#allocation3], 240
      %v3838 = vld [vmem:[%s3837] ss:$2 sm:$0xff]
      %s3839 = scalar_lea.vmem [#allocation3], 264
      %v3840 = vld [vmem:[%s3839] ss:$2 sm:$0xff]
      %s3841 = scalar_lea.vmem [#allocation3], 288
      %v3842 = vld [vmem:[%s3841] ss:$2 sm:$0xff]
      %s3843 = scalar_lea.vmem [#allocation3], 312
      %v3844 = vld [vmem:[%s3843] ss:$2 sm:$0xff]
      %s3845 = scalar_lea.vmem [#allocation3], 336
      %v3846 = vld [vmem:[%s3845] ss:$2 sm:$0xff]
      %s3847 = scalar_lea.vmem [#allocation3], 360
      %v3848 = vld [vmem:[%s3847] ss:$2 sm:$0xff]
      %s3849 = scalar_lea.vmem [#allocation3], 384
      %v3850 = vld [vmem:[%s3849] ss:$2 sm:$0xff]
      %s3851 = scalar_lea.vmem [#allocation3], 1
      %v3852 = vld [vmem:[%s3851] ss:$2 sm:$0xff]
      %s3853 = scalar_lea.vmem [#allocation3], 25
      %v3854 = vld [vmem:[%s3853] ss:$2 sm:$0xff]
      %s3855 = scalar_lea.vmem [#allocation3], 49
      %v3856 = vld [vmem:[%s3855] ss:$2 sm:$0xff]
      %s3857 = scalar_lea.vmem [#allocation3], 73
      %v3858 = vld [vmem:[%s3857] ss:$2 sm:$0xff]
      %s3859 = scalar_lea.vmem [#allocation3], 97
      %v3860 = vld [vmem:[%s3859] ss:$2 sm:$0xff]
      %s3861 = scalar_lea.vmem [#allocation3], 121
      %v3862 = vld [vmem:[%s3861] ss:$2 sm:$0xff]
      %s3863 = scalar_lea.vmem [#allocation3], 145
      %v3864 = vld [vmem:[%s3863] ss:$2 sm:$0xff]
      %s3865 = scalar_lea.vmem [#allocation3], 169
      %v3866 = vld [vmem:[%s3865] ss:$2 sm:$0xff]
      %s3867 = scalar_lea.vmem [#allocation3], 193
      %v3868 = vld [vmem:[%s3867] ss:$2 sm:$0xff]
      %s3869 = scalar_lea.vmem [#allocation3], 217
      %v3870 = vld [vmem:[%s3869] ss:$2 sm:$0xff]
      %s3871 = scalar_lea.vmem [#allocation3], 241
      %v3872 = vld [vmem:[%s3871] ss:$2 sm:$0xff]
      %s3873 = scalar_lea.vmem [#allocation3], 265
      %v3874 = vld [vmem:[%s3873] ss:$2 sm:$0xff]
      %s3875 = scalar_lea.vmem [#allocation3], 289
      %v3876 = vld [vmem:[%s3875] ss:$2 sm:$0xff]
      %s3877 = scalar_lea.vmem [#allocation3], 313
      %v3878 = vld [vmem:[%s3877] ss:$2 sm:$0xff]
      %s3879 = scalar_lea.vmem [#allocation3], 337
      %v3880 = vld [vmem:[%s3879] ss:$2 sm:$0xff]
      %s3881 = scalar_lea.vmem [#allocation3], 361
      %v3882 = vld [vmem:[%s3881] ss:$2 sm:$0xff]
      %s3883 = scalar_lea.vmem [#allocation3], 385
      %v3884 = vld [vmem:[%s3883] ss:$2 sm:$0xff]
      %s3885 = scalar_lea.vmem [#allocation3], 2
      %v3886 = vld [vmem:[%s3885] ss:$2 sm:$0xff]
      %s3887 = scalar_lea.vmem [#allocation3], 26
      %v3888 = vld [vmem:[%s3887] ss:$2 sm:$0xff]
      %s3889 = scalar_lea.vmem [#allocation3], 50
      %v3890 = vld [vmem:[%s3889] ss:$2 sm:$0xff]
      %s3891 = scalar_lea.vmem [#allocation3], 74
      %v3892 = vld [vmem:[%s3891] ss:$2 sm:$0xff]
      %s3893 = scalar_lea.vmem [#allocation3], 98
      %v3894 = vld [vmem:[%s3893] ss:$2 sm:$0xff]
      %s3895 = scalar_lea.vmem [#allocation3], 122
      %v3896 = vld [vmem:[%s3895] ss:$2 sm:$0xff]
      %s3897 = scalar_lea.vmem [#allocation3], 146
      %v3898 = vld [vmem:[%s3897] ss:$2 sm:$0xff]
      %s3899 = scalar_lea.vmem [#allocation3], 170
      %v3900 = vld [vmem:[%s3899] ss:$2 sm:$0xff]
      %s3901 = scalar_lea.vmem [#allocation3], 194
      %v3902 = vld [vmem:[%s3901] ss:$2 sm:$0xff]
      %s3903 = scalar_lea.vmem [#allocation3], 218
      %v3904 = vld [vmem:[%s3903] ss:$2 sm:$0xff]
      %s3905 = scalar_lea.vmem [#allocation3], 242
      %v3906 = vld [vmem:[%s3905] ss:$2 sm:$0xff]
      %s3907 = scalar_lea.vmem [#allocation3], 266
      %v3908 = vld [vmem:[%s3907] ss:$2 sm:$0xff]
      %s3909 = scalar_lea.vmem [#allocation3], 290
      %v3910 = vld [vmem:[%s3909] ss:$2 sm:$0xff]
      %s3911 = scalar_lea.vmem [#allocation3], 314
      %v3912 = vld [vmem:[%s3911] ss:$2 sm:$0xff]
      %s3913 = scalar_lea.vmem [#allocation3], 338
      %v3914 = vld [vmem:[%s3913] ss:$2 sm:$0xff]
      %s3915 = scalar_lea.vmem [#allocation3], 362
      %v3916 = vld [vmem:[%s3915] ss:$2 sm:$0xff]
      %s3917 = scalar_lea.vmem [#allocation3], 386
      %v3918 = vld [vmem:[%s3917] ss:$2 sm:$0xff]
      %3927 = vrot.lane.b32.xlu0 %v3852, 4
      %v3928 = vpop.permute.xlu0 %3927
      %3929 = vrot.lane.b32.xlu0 %v3856, 4
      %v3930 = vpop.permute.xlu0 %3929
      %3931 = vrot.lane.b32.xlu0 %v3860, 4
      %v3932 = vpop.permute.xlu0 %3931
      %3933 = vrot.lane.b32.xlu0 %v3864, 4
      %v3934 = vpop.permute.xlu0 %3933
      %3935 = vrot.lane.b32.xlu0 %v3868, 4
      %v3936 = vpop.permute.xlu0 %3935
      %3937 = vrot.lane.b32.xlu0 %v3872, 4
      %v3938 = vpop.permute.xlu0 %3937
      %3939 = vrot.lane.b32.xlu0 %v3876, 4
      %v3940 = vpop.permute.xlu0 %3939
      %3941 = vrot.lane.b32.xlu0 %v3880, 4
      %v3942 = vpop.permute.xlu0 %3941
      %3959 = vrot.lane.b32.xlu0 %v3886, 8
      %v3960 = vpop.permute.xlu0 %3959
      %3961 = vrot.lane.b32.xlu0 %v3890, 8
      %v3962 = vpop.permute.xlu0 %3961
      %3963 = vrot.lane.b32.xlu0 %v3894, 8
      %v3964 = vpop.permute.xlu0 %3963
      %3965 = vrot.lane.b32.xlu0 %v3898, 8
      %v3966 = vpop.permute.xlu0 %3965
      %3967 = vrot.lane.b32.xlu0 %v3902, 8
      %v3968 = vpop.permute.xlu0 %3967
      %3969 = vrot.lane.b32.xlu0 %v3906, 8
      %v3970 = vpop.permute.xlu0 %3969
      %3971 = vrot.lane.b32.xlu0 %v3910, 8
      %v3972 = vpop.permute.xlu0 %3971
      %3973 = vrot.lane.b32.xlu0 %v3914, 8
      %v3974 = vpop.permute.xlu0 %3973
      %3991 = vrot.lane.b32.xlu0 %v3820, 12
      %v3992 = vpop.permute.xlu0 %3991
      %3993 = vrot.lane.b32.xlu0 %v3824, 12
      %v3994 = vpop.permute.xlu0 %3993
      %3995 = vrot.lane.b32.xlu0 %v3828, 12
      %v3996 = vpop.permute.xlu0 %3995
      %3997 = vrot.lane.b32.xlu0 %v3832, 12
      %v3998 = vpop.permute.xlu0 %3997
      %3999 = vrot.lane.b32.xlu0 %v3836, 12
      %v4000 = vpop.permute.xlu0 %3999
      %4001 = vrot.lane.b32.xlu0 %v3840, 12
      %v4002 = vpop.permute.xlu0 %4001
      %4003 = vrot.lane.b32.xlu0 %v3844, 12
      %v4004 = vpop.permute.xlu0 %4003
      %4005 = vrot.lane.b32.xlu0 %v3848, 12
      %v4006 = vpop.permute.xlu0 %4005
      %4023 = vrot.lane.b32.xlu0 %v3854, 16
      %v4024 = vpop.permute.xlu0 %4023
      %4025 = vrot.lane.b32.xlu0 %v3858, 16
      %v4026 = vpop.permute.xlu0 %4025
      %4027 = vrot.lane.b32.xlu0 %v3862, 16
      %v4028 = vpop.permute.xlu0 %4027
      %4029 = vrot.lane.b32.xlu0 %v3866, 16
      %v4030 = vpop.permute.xlu0 %4029
      %4031 = vrot.lane.b32.xlu0 %v3870, 16
      %v4032 = vpop.permute.xlu0 %4031
      %4033 = vrot.lane.b32.xlu0 %v3874, 16
      %v4034 = vpop.permute.xlu0 %4033
      %4035 = vrot.lane.b32.xlu0 %v3878, 16
      %v4036 = vpop.permute.xlu0 %4035
      %4037 = vrot.lane.b32.xlu0 %v3882, 16
      %v4038 = vpop.permute.xlu0 %4037
      %4055 = vrot.lane.b32.xlu0 %v3888, 20
      %v4056 = vpop.permute.xlu0 %4055
      %4057 = vrot.lane.b32.xlu0 %v3892, 20
      %v4058 = vpop.permute.xlu0 %4057
      %4059 = vrot.lane.b32.xlu0 %v3896, 20
      %v4060 = vpop.permute.xlu0 %4059
      %4061 = vrot.lane.b32.xlu0 %v3900, 20
      %v4062 = vpop.permute.xlu0 %4061
      %4063 = vrot.lane.b32.xlu0 %v3904, 20
      %v4064 = vpop.permute.xlu0 %4063
      %4065 = vrot.lane.b32.xlu0 %v3908, 20
      %v4066 = vpop.permute.xlu0 %4065
      %4067 = vrot.lane.b32.xlu0 %v3912, 20
      %v4068 = vpop.permute.xlu0 %4067
      %4069 = vrot.lane.b32.xlu0 %v3916, 20
      %v4070 = vpop.permute.xlu0 %4069
      %4087 = vrot.lane.b32.xlu0 %v3822, 24
      %v4088 = vpop.permute.xlu0 %4087
      %4089 = vrot.lane.b32.xlu0 %v3826, 24
      %v4090 = vpop.permute.xlu0 %4089
      %4091 = vrot.lane.b32.xlu0 %v3830, 24
      %v4092 = vpop.permute.xlu0 %4091
      %4093 = vrot.lane.b32.xlu0 %v3834, 24
      %v4094 = vpop.permute.xlu0 %4093
      %4095 = vrot.lane.b32.xlu0 %v3838, 24
      %v4096 = vpop.permute.xlu0 %4095
      %4097 = vrot.lane.b32.xlu0 %v3842, 24
      %v4098 = vpop.permute.xlu0 %4097
      %4099 = vrot.lane.b32.xlu0 %v3846, 24
      %v4100 = vpop.permute.xlu0 %4099
      %4101 = vrot.lane.b32.xlu0 %v3850, 24
      %v4102 = vpop.permute.xlu0 %4101
      %4112 = vrot.lane.b32.xlu0 %v3856, 28
      %v4113 = vpop.permute.xlu0 %4112
      %4114 = vrot.lane.b32.xlu0 %v3860, 28
      %v4115 = vpop.permute.xlu0 %4114
      %4116 = vrot.lane.b32.xlu0 %v3864, 28
      %v4117 = vpop.permute.xlu0 %4116
      %4118 = vrot.lane.b32.xlu0 %v3868, 28
      %v4119 = vpop.permute.xlu0 %4118
      %4120 = vrot.lane.b32.xlu0 %v3872, 28
      %v4121 = vpop.permute.xlu0 %4120
      %4122 = vrot.lane.b32.xlu0 %v3876, 28
      %v4123 = vpop.permute.xlu0 %4122
      %4124 = vrot.lane.b32.xlu0 %v3880, 28
      %v4125 = vpop.permute.xlu0 %4124
      %4126 = vrot.lane.b32.xlu0 %v3884, 28
      %v4127 = vpop.permute.xlu0 %4126
      %4137 = vrot.lane.b32.xlu0 %v3890, 32
      %v4138 = vpop.permute.xlu0 %4137
      %4139 = vrot.lane.b32.xlu0 %v3894, 32
      %v4140 = vpop.permute.xlu0 %4139
      %4141 = vrot.lane.b32.xlu0 %v3898, 32
      %v4142 = vpop.permute.xlu0 %4141
      %4143 = vrot.lane.b32.xlu0 %v3902, 32
      %v4144 = vpop.permute.xlu0 %4143
      %4145 = vrot.lane.b32.xlu0 %v3906, 32
      %v4146 = vpop.permute.xlu0 %4145
      %4147 = vrot.lane.b32.xlu0 %v3910, 32
      %v4148 = vpop.permute.xlu0 %4147
      %4149 = vrot.lane.b32.xlu0 %v3914, 32
      %v4150 = vpop.permute.xlu0 %4149
      %4151 = vrot.lane.b32.xlu0 %v3918, 32
      %v4152 = vpop.permute.xlu0 %4151
      %v4161 = vsel %vm313, %v3818, %v3928
      %v4162 = vsel %vm313, %v3822, %v3930
      %v4163 = vsel %vm313, %v3826, %v3932
      %v4164 = vsel %vm313, %v3830, %v3934
      %v4165 = vsel %vm313, %v3834, %v3936
      %v4166 = vsel %vm313, %v3838, %v3938
      %v4167 = vsel %vm313, %v3842, %v3940
      %v4168 = vsel %vm313, %v3846, %v3942
      %v4169 = vsel %vm1514, %v4161, %v3960
      %v4170 = vsel %vm1514, %v4162, %v3962
      %v4171 = vsel %vm1514, %v4163, %v3964
      %v4172 = vsel %vm1514, %v4164, %v3966
      %v4173 = vsel %vm1514, %v4165, %v3968
      %v4174 = vsel %vm1514, %v4166, %v3970
      %v4175 = vsel %vm1514, %v4167, %v3972
      %v4176 = vsel %vm1514, %v4168, %v3974
      %v4177 = vsel %vm1547, %v4169, %v3992
      %v4178 = vsel %vm1547, %v4170, %v3994
      %v4179 = vsel %vm1547, %v4171, %v3996
      %v4180 = vsel %vm1547, %v4172, %v3998
      %v4181 = vsel %vm1547, %v4173, %v4000
      %v4182 = vsel %vm1547, %v4174, %v4002
      %v4183 = vsel %vm1547, %v4175, %v4004
      %v4184 = vsel %vm1547, %v4176, %v4006
      %v4185 = vsel %vm1580, %v4177, %v4024
      %v4186 = vsel %vm1580, %v4178, %v4026
      %v4187 = vsel %vm1580, %v4179, %v4028
      %v4188 = vsel %vm1580, %v4180, %v4030
      %v4189 = vsel %vm1580, %v4181, %v4032
      %v4190 = vsel %vm1580, %v4182, %v4034
      %v4191 = vsel %vm1580, %v4183, %v4036
      %v4192 = vsel %vm1580, %v4184, %v4038
      %v4193 = vsel %vm1613, %v4185, %v4056
      %v4194 = vsel %vm1613, %v4186, %v4058
      %v4195 = vsel %vm1613, %v4187, %v4060
      %v4196 = vsel %vm1613, %v4188, %v4062
      %v4197 = vsel %vm1613, %v4189, %v4064
      %v4198 = vsel %vm1613, %v4190, %v4066
      %v4199 = vsel %vm1613, %v4191, %v4068
      %v4200 = vsel %vm1613, %v4192, %v4070
      %v4201 = vsel %vm1646, %v4193, %v4088
      %v4202 = vsel %vm1646, %v4194, %v4090
      %v4203 = vsel %vm1646, %v4195, %v4092
      %v4204 = vsel %vm1646, %v4196, %v4094
      %v4205 = vsel %vm1646, %v4197, %v4096
      %v4206 = vsel %vm1646, %v4198, %v4098
      %v4207 = vsel %vm1646, %v4199, %v4100
      %v4208 = vsel %vm1646, %v4200, %v4102
      %v4209 = vsel %vm1679, %v4201, %v4113
      %v4210 = vsel %vm1679, %v4202, %v4115
      %v4211 = vsel %vm1679, %v4203, %v4117
      %v4212 = vsel %vm1679, %v4204, %v4119
      %v4213 = vsel %vm1679, %v4205, %v4121
      %v4214 = vsel %vm1679, %v4206, %v4123
      %v4215 = vsel %vm1679, %v4207, %v4125
      %v4216 = vsel %vm1679, %v4208, %v4127
      %v4217 = vsel %vm1712, %v4209, %v4138
      %v4218 = vsel %vm1712, %v4210, %v4140
      %v4219 = vsel %vm1712, %v4211, %v4142
      %v4220 = vsel %vm1712, %v4212, %v4144
      %v4221 = vsel %vm1712, %v4213, %v4146
      %v4222 = vsel %vm1712, %v4214, %v4148
      %v4223 = vsel %vm1712, %v4215, %v4150
      %v4224 = vsel %vm1712, %v4216, %v4152
      %v4225 = vpack.c.bf16 %v4218, %v4217
      %v4226 = vpack.c.bf16 %v4220, %v4219
      %v4227 = vpack.c.bf16 %v4222, %v4221
      %v4228 = vpack.c.bf16 %v4224, %v4223
      %v4229 = vld [vmem:[%s5] sm:$0xf]
      %v4230 = vld [vmem:[%s5 + $0x4] sm:$0xf]
      %v4231 = vld [vmem:[%s5 + $0x8] sm:$0xf]
      %v4232 = vld [vmem:[%s5 + $0xc] sm:$0xf]
      %v4233 = vld [vmem:[%s5 + $0x10] sm:$0x3]
      %v4234 = vld [vmem:[%s6] sm:$0x1]
      %v4236 = vlaneseq
      %v4237 = vshrl.u32 %v4236, 7
      %v4238 = vsub.s32 0, %v4237
      %v4239 = vrot.slane %v4234, %v4238
      %v4246 = vunpack.c.l.b16 %v4229
      %v4247 = vunpack.c.l.b16 %v4230
      %v4248 = vunpack.c.l.b16 %v4231
      %v4249 = vunpack.c.l.b16 %v4232
      %v4250 = vunpack.c.l.b16 %v4233
      %v4251 = vpack.c.b16 %v4247, %v4246
      %v4252 = vpack.c.b16 %v4249, %v4248
      %v4253 = vpack.c.b16 %v4250, %v4250
      %v4257 = vsel %vm1788, %v4225, 0
      %v4260 = vsel %vm1788, %v4226, 0
      %v4263 = vsel %vm1788, %v4227, 0
      %v4266 = vsel %vm1788, %v4228, 0
      %v4269 = vsel %vm1837, %v4253, 0
      %4271 = vmatprep.subr.bf16.mxu0 0
      %4272 = vmatpush1.bf16.msra.mxu0 %v4251
      %4273 = vmatprep.subr.bf16.mxu0 0
      %4274 = vmatpush1.bf16.msra.mxu0 %v4252
      %4275 = vmatprep.subr.bf16.mxu0 0
      %4276 = vmatpush1.bf16.msra.mxu0 %v4269
      %4277 = vmatprep.subr.bf16.mxu0 0
      %4278 = vmatpush1.bf16.msra.mxu0 0
      %4279 = vmatprep.subr.bf16.mxu0 0
      %4280 = vmatpush1.bf16.msra.mxu0 0
      %4281 = vmatprep.subr.bf16.mxu0 0
      %4282 = vmatpush1.bf16.msra.mxu0 0
      %4283 = vmatprep.subr.bf16.mxu0 0
      %4284 = vmatpush1.bf16.msra.mxu0 0
      %4285 = vmatprep.subr.bf16.mxu0 0
      %4286 = vmatpush1.bf16.msra.mxu0 0
      %4287 = vmatprep.subr.bf16.mxu0 0
      %4288 = vmatpush1.bf16.msra.mxu0 0
      %4289 = vmatprep.subr.bf16.mxu0 0
      %4290 = vmatpush1.bf16.msra.mxu0 0
      %4291 = vmatprep.subr.bf16.mxu0 0
      %4292 = vmatpush1.bf16.msra.mxu0 0
      %4293 = vmatprep.subr.bf16.mxu0 0
      %4294 = vmatpush1.bf16.msra.mxu0 0
      %4295 = vmatprep.subr.bf16.mxu0 0
      %4296 = vmatpush1.bf16.msra.mxu0 0
      %4297 = vmatprep.subr.bf16.mxu0 0
      %4298 = vmatpush1.bf16.msra.mxu0 0
      %4299 = vmatprep.subr.bf16.mxu0 0
      %4300 = vmatpush1.bf16.msra.mxu0 0
      %4301 = vmatprep.subr.bf16.mxu0 0
      %4302 = vmatpush1.bf16.msra.mxu0 0
      %4303 = vmatprep.mubr.bf16.mxu0 0
      %4304 = vmatmul.mubr.bf16.gmra.mrb[0].mxu0 %v4257
      %v4305 = vpop.f32.mrb[0].mxu0
      %v4306 = vadd.f32 %v4239, %v4305
      %v4307 = vpop.f32.mrb[0].mxu0
      %v4308 = vpop.f32.mrb[0].mxu0
      %v4309 = vadd.f32 %v4239, %v4308
      %v4310 = vpop.f32.mrb[0].mxu0
      %4311 = vmatprep.mubr.bf16.mxu0 0
      %4312 = vmatmul.mubr.bf16.gmra.mrb[0].mxu0 %v4260
      %v4313 = vpop.f32.mrb[0].mxu0
      %v4314 = vadd.f32 %v4239, %v4313
      %v4315 = vpop.f32.mrb[0].mxu0
      %v4316 = vpop.f32.mrb[0].mxu0
      %v4317 = vadd.f32 %v4239, %v4316
      %v4318 = vpop.f32.mrb[0].mxu0
      %4319 = vmatprep.mubr.bf16.mxu0 0
      %4320 = vmatmul.mubr.bf16.gmra.mrb[0].mxu0 %v4263
      %v4321 = vpop.f32.mrb[0].mxu0
      %v4322 = vadd.f32 %v4239, %v4321
      %v4323 = vpop.f32.mrb[0].mxu0
      %v4324 = vpop.f32.mrb[0].mxu0
      %v4325 = vadd.f32 %v4239, %v4324
      %v4326 = vpop.f32.mrb[0].mxu0
      %4327 = vmatprep.mubr.bf16.mxu0 0
      %4328 = vmatmul.mubr.bf16.gmra.mrb[0].mxu0 %v4266
      %v4329 = vpop.f32.mrb[0].mxu0
      %v4330 = vadd.f32 %v4239, %v4329
      %v4331 = vpop.f32.mrb[0].mxu0
      %v4332 = vpop.f32.mrb[0].mxu0
      %v4333 = vadd.f32 %v4239, %v4332
      %v4334 = vpop.f32.mrb[0].mxu0
      %4335 = vdwg.mxu0
      %v4336 = vxor.u32 %v4306, 2147483648
      %v4337 = vxor.u32 %v4309, 2147483648
      %v4338 = vxor.u32 %v4314, 2147483648
      %v4339 = vxor.u32 %v4317, 2147483648
      %v4340 = vxor.u32 %v4322, 2147483648
      %v4341 = vxor.u32 %v4325, 2147483648
      %v4342 = vxor.u32 %v4330, 2147483648
      %v4343 = vxor.u32 %v4333, 2147483648
      %v4344 = vmul.f32 %v4336, 1.442695
      %v4345 = vpow.pop %v4344
      %v4346 = vmul.f32 %v4337, 1.442695
      %v4347 = vpow.pop %v4346
      %v4348 = vmul.f32 %v4338, 1.442695
      %v4349 = vpow.pop %v4348
      %v4350 = vmul.f32 %v4339, 1.442695
      %v4351 = vpow.pop %v4350
      %v4352 = vmul.f32 %v4340, 1.442695
      %v4353 = vpow.pop %v4352
      %v4354 = vmul.f32 %v4341, 1.442695
      %v4355 = vpow.pop %v4354
      %v4356 = vmul.f32 %v4342, 1.442695
      %v4357 = vpow.pop %v4356
      %v4358 = vmul.f32 %v4343, 1.442695
      %v4359 = vpow.pop %v4358
      %v4360 = vadd.f32 %v4345, 1.0
      %v4361 = vadd.f32 %v4347, 1.0
      %v4362 = vadd.f32 %v4349, 1.0
      %v4363 = vadd.f32 %v4351, 1.0
      %v4364 = vadd.f32 %v4353, 1.0
      %v4365 = vadd.f32 %v4355, 1.0
      %v4366 = vadd.f32 %v4357, 1.0
      %v4367 = vadd.f32 %v4359, 1.0
      %v4368 = vrcp.pop %v4360
      %v4369 = vmul.f32 1.0, %v4368
      %v4370 = vrcp.pop %v4361
      %v4371 = vmul.f32 1.0, %v4370
      %v4372 = vrcp.pop %v4362
      %v4373 = vmul.f32 1.0, %v4372
      %v4374 = vrcp.pop %v4363
      %v4375 = vmul.f32 1.0, %v4374
      %v4376 = vrcp.pop %v4364
      %v4377 = vmul.f32 1.0, %v4376
      %v4378 = vrcp.pop %v4365
      %v4379 = vmul.f32 1.0, %v4378
      %v4380 = vrcp.pop %v4366
      %v4381 = vmul.f32 1.0, %v4380
      %v4382 = vrcp.pop %v4367
      %v4383 = vmul.f32 1.0, %v4382
      %v4384 = vmul.f32 %v4306, %v4369
      %v4385 = vmul.f32 %v4309, %v4371
      %v4386 = vmul.f32 %v4314, %v4373
      %v4387 = vmul.f32 %v4317, %v4375
      %v4388 = vmul.f32 %v4322, %v4377
      %v4389 = vmul.f32 %v4325, %v4379
      %v4390 = vmul.f32 %v4330, %v4381
      %v4391 = vmul.f32 %v4333, %v4383
      %4392 = vst [vmem:[%s278] sm:$0xff] %v4384
      %4393 = vst [vmem:[%s278 + $0x8] sm:$0xff] %v4385
      %4394 = vst [vmem:[%s278 + $0x10] sm:$0xff] %v4386
      %4395 = vst [vmem:[%s278 + $0x18] sm:$0xff] %v4387
      %4396 = vst [vmem:[%s278 + $0x20] sm:$0xff] %v4388
      %4397 = vst [vmem:[%s278 + $0x28] sm:$0xff] %v4389
      %4398 = vst [vmem:[%s278 + $0x30] sm:$0xff] %v4390
      %4399 = vst [vmem:[%s278 + $0x38] sm:$0xff] %v4391
      %p4400 = scmp.lt.s32.totalorder %s18, 1
      %s4401 = scalar_select %p4400, %s18, 1
      %s4402 = smul.addr %s4401, 8
      %s4403 = smul.addr %s4402, 8
      %s4404 = scalar_lea.vmem %s7, %s4403
      // Predicated region
      $region49: #{down_forward.1} parent=47 // pred_check
        %p4405 = pneg %p188
      $region50: #{down_forward.1} parent=47 // pred_check_branch
        %4407 = sbr.rel (%p4405) target = $region52
      $region51: #{down_forward.1} parent=47 // pred_region
        _
      $region52: #{down_forward.1} parent=47 // pred_fallthru
        _
    $region48: #{down_forward.1} parent=5 // pred_fallthru
      _
    %p4408 = scmp.le.s32.totalorder 2, %s13
    // Predicated region
    $region53: #{down_forward.1} parent=5 // pred_check
      %p4409 = pneg %p4408
    $region54: #{down_forward.1} parent=5 // pred_check_branch
      %4411 = sbr.rel (%p4409) target = $region56
    $region55: #{down_forward.1} parent=5 // pred_region
      %s4412 = ssub.s32 %s13, 2
      // Predicated region
      $region57: #{down_forward.1} parent=55 // pred_check
        %p4413 = pneg %p194
      $region58: #{down_forward.1} parent=55 // pred_check_branch
        %4415 = sbr.rel (%p4413) target = $region60
      $region59: #{down_forward.1} parent=55 // pred_region
        %p4416 = scmp.lt.s32.totalorder %s19, 1
        %s4417 = scalar_select %p4416, %s19, 1
        %s4418 = smul.addr %s4417, 8
        %s4419 = smul.addr %s4418, 8
        %s4420 = scalar_lea.vmem %s7, %s4419
      $region60: #{down_forward.1} parent=55 // pred_fallthru
        _
    $region56: #{down_forward.1} parent=5 // pred_fallthru
      _
  $region6: #{down_forward.1} parent=0 // loop_footer
    %s17 = sadd.s32 1, %s13
  $region7: #{down_forward.1} parent=0 // loop_footer_branch
    %12 = sbr.rel target = $region3
  $region8: #{down_forward.1} parent=0 // loop_exit
    _

</llo_original>
